<compile_context>
chip_gen: v7x
topology: tpu7x:2x2x1
jax: 0.10.0
libtpu: 0.0.40
codegen_flags: <defaults>
</compile_context>

<pallas_src>
import functools

import jax
import jax.numpy as jnp
from jax.experimental import pallas as pl
from jax.experimental.pallas import tpu as pltpu


def _resmlp_kernel(
    x_ref,                              # [F_in, tile_n] bf16, feature-major
    w1_ref, b1_ref,                     # [H, F_in] bf16, [H, 1] f32
    w2_ref, b2_ref,                     # [H, H]   bf16, [H, 1] f32
    wr_ref, br_ref,                     # [H, H]   bf16, [H, 1] f32
    w3_ref, b3_ref,                     # [H, H]   bf16, [H, 1] f32
    w4_ref, b4_ref,                     # [OUT, H] bf16, [OUT, 1] f32
    o_ref,                              # [OUT, tile_n] f32 (lane-dense)
):
    f32, bf16 = jnp.float32, jnp.bfloat16

    # pre_res layer 1: the "concat" is free -- the wrapper already stacked
    # [context_v; query_coord; vox_size] along the feature (sublane) axis.
    y = jnp.dot(w1_ref[...], x_ref[...], preferred_element_type=f32)
    y = jnp.maximum(y + b1_ref[...], 0.0)

    # pre_res layer 2: Linear + ReLU
    y = jnp.dot(w2_ref[...], y.astype(bf16), preferred_element_type=f32)
    y = jnp.maximum(y + b2_ref[...], 0.0)

    # residual branch: y = y + ReLU(Linear(y))
    r = jnp.dot(wr_ref[...], y.astype(bf16), preferred_element_type=f32)
    y = y + jnp.maximum(r + br_ref[...], 0.0)

    # post_res layer 1: Linear + ReLU
    y = jnp.dot(w3_ref[...], y.astype(bf16), preferred_element_type=f32)
    y = jnp.maximum(y + b3_ref[...], 0.0)

    # output layer: Linear (no activation)
    y = jnp.dot(w4_ref[...], y.astype(bf16), preferred_element_type=f32)
    o_ref[...] = (y + b4_ref[...]).astype(o_ref.dtype)


def _round_up(v, m):
    return ((v + m - 1) // m) * m


def simple_resmlp_inr(query_coord, context_v, vox_size, params, *, tile_n=2048):
    """query_coord: [N, n_coord], context_v: [N, n_ctx], vox_size: [N, 3] (f32).

    Returns [N, out_features] float32, matching SimpleResMLPINR.forward.
    Weights are stored [out, in] (PyTorch nn.Linear layout) in bf16; biases
    are [out, 1] f32.
    """
    n = query_coord.shape[0]
    out_f = params["w_out"].shape[0]

    # Single feature-major bf16 input slab; feature order matches
    # torch.cat((context_v, query_coord, vox_size), dim=1).
    x_fm = jnp.concatenate(
        [context_v.T, query_coord.T, vox_size.T], axis=0
    ).astype(jnp.bfloat16)                                   # [F_in, N]
    f_in = x_fm.shape[0]

    # Tile selection: lane multiples of 128; no padding of N (cdiv grid -- rows
    # are independent, so the OOB tail of the last block produces garbage
    # columns that are never written back).
    tile = _round_up(min(_round_up(tile_n, 128), _round_up(n, 128)), 128)
    if tile >= n and n > 128:
        # Keep >= 2 grid steps so v7x's two TensorCores both get work.
        tile = min(tile, _round_up((n + 1) // 2, 128))
    grid_n = (n + tile - 1) // tile

    weight_args = (
        params["w_pre1"], params["b_pre1"],
        params["w_pre2"], params["b_pre2"],
        params["w_res"], params["b_res"],
        params["w_post1"], params["b_post1"],
        params["w_out"], params["b_out"],
    )

    in_specs = [pl.BlockSpec((f_in, tile), lambda i: (0, i))]
    # Constant index maps -> each param DMA'd once and VMEM-resident.
    in_specs += [pl.BlockSpec(a.shape, lambda i: (0, 0)) for a in weight_args]
    out_specs = pl.BlockSpec((out_f, tile), lambda i: (0, i))

    fn = pl.pallas_call(
        _resmlp_kernel,
        out_shape=jax.ShapeDtypeStruct((out_f, n), jnp.float32),
        grid_spec=pltpu.PrefetchScalarGridSpec(
            num_scalar_prefetch=0,
            grid=(grid_n,),
            in_specs=in_specs,
            out_specs=out_specs,
        ),
        compiler_params=pltpu.CompilerParams(
            dimension_semantics=("parallel",),
            # Footprint is tiny (<1 MiB at tile=2048); this just gives headroom
            # for tile sweeps and is within every generation's physical VMEM
            # (v5e/v6e 128 MiB, v7x 64 MiB).
            vmem_limit_bytes=32 * 1024 * 1024,
        ),
    )
    out_fm = fn(x_fm, *weight_args)                          # [out_f, N], lane-dense stores
    # Tiny wrapper transpose of the smallest operand back to PyTorch's [N, out_f].
    return out_fm.T


def make_params(key, f_in, hidden, out_f):
    """Synthetic weights in PyTorch nn.Linear layout: W [out, in] bf16, b [out, 1] f32."""
    ks = jax.random.split(key, 10)
    scale = 0.1

    def w(k, shape):
        return (scale * jax.random.normal(k, shape, dtype=jnp.float32)).astype(jnp.bfloat16)

    def b(k, rows):
        return scale * jax.random.normal(k, (rows, 1), dtype=jnp.float32)

    return {
        "w_pre1": w(ks[0], (hidden, f_in)),    "b_pre1": b(ks[1], hidden),
        "w_pre2": w(ks[2], (hidden, hidden)),  "b_pre2": b(ks[3], hidden),
        "w_res":  w(ks[4], (hidden, hidden)),  "b_res":  b(ks[5], hidden),
        "w_post1": w(ks[6], (hidden, hidden)), "b_post1": b(ks[7], hidden),
        "w_out":  w(ks[8], (out_f, hidden)),   "b_out":  b(ks[9], out_f),
    }


def _reference(query_coord, context_v, vox_size, p):
    """Pure-JAX reference mirroring the kernel's bf16-input / f32-accumulate math."""
    bf16, f32 = jnp.bfloat16, jnp.float32
    x = jnp.concatenate([context_v, query_coord, vox_size], axis=1)

    def lin(v, w, b):
        return (jnp.dot(v.astype(bf16).astype(f32), w.astype(f32).T)
                + b.astype(f32).reshape(1, -1))

    relu = lambda v: jnp.maximum(v, 0.0)
    y = relu(lin(x, p["w_pre1"], p["b_pre1"]))
    y = relu(lin(y, p["w_pre2"], p["b_pre2"]))
    y = y + relu(lin(y, p["w_res"], p["b_res"]))
    y = relu(lin(y, p["w_post1"], p["b_post1"]))
    y = lin(y, p["w_out"], p["b_out"])
    return y


if __name__ == "__main__":
    key = jax.random.PRNGKey(0)

    # SimpleResMLPINR config (synthetic, small):
    n_coord_features = 3
    n_context_features = 10
    n_vox_size_features = 3
    internal_features = 32
    out_features = 8
    # n_layers = 5 -> 2 pre layers, 1 residual layer, 2 post layers (ReLU)

    N = 8192          # query points: tile=2048 -> grid of 4 "parallel" steps
    TILE_N = 2048
    f_in = n_coord_features + n_context_features + n_vox_size_features

    k_qc, k_cv, k_vs, k_par = jax.random.split(key, 4)
    query_coord = jax.random.normal(k_qc, (N, n_coord_features), dtype=jnp.float32)
    context_v = jax.random.normal(k_cv, (N, n_context_features), dtype=jnp.float32)
    vox_size = jnp.abs(
        jax.random.normal(k_vs, (N, n_vox_size_features), dtype=jnp.float32)
    )

    params = make_params(k_par, f_in, internal_features, out_features)

    fwd = jax.jit(functools.partial(simple_resmlp_inr, tile_n=TILE_N))
    out = jax.block_until_ready(fwd(query_coord, context_v, vox_size, params))

    ref = _reference(query_coord, context_v, vox_size, params)
    assert out.shape == (N, out_features)
    assert out.dtype == jnp.float32
    assert jnp.allclose(out, ref, atol=1e-3, rtol=1e-3), "mismatch vs JAX reference"

    print("KERNEL_OK")
</pallas_src>

<mosaic_0001>
module attributes {stable_mosaic.version = 11 : i64} {
  func.func @_resmlp_kernel(%arg0: i32, %arg1: memref<16x2048xbf16, #tpu.memory_space<vmem>>, %arg2: memref<32x16xbf16, #tpu.memory_space<vmem>>, %arg3: memref<32x1xf32, #tpu.memory_space<vmem>>, %arg4: memref<32x32xbf16, #tpu.memory_space<vmem>>, %arg5: memref<32x1xf32, #tpu.memory_space<vmem>>, %arg6: memref<32x32xbf16, #tpu.memory_space<vmem>>, %arg7: memref<32x1xf32, #tpu.memory_space<vmem>>, %arg8: memref<32x32xbf16, #tpu.memory_space<vmem>>, %arg9: memref<32x1xf32, #tpu.memory_space<vmem>>, %arg10: memref<8x32xbf16, #tpu.memory_space<vmem>>, %arg11: memref<8x1xf32, #tpu.memory_space<vmem>>, %arg12: memref<8x2048xf32, #tpu.memory_space<vmem>>) attributes {dimension_semantics = [#tpu.dimension_semantics<parallel>], iteration_bounds = array<i64: 4>, scalar_prefetch = 0 : i64, scratch_operands = 0 : i64, tpu.core_type = #tpu.core_type<tc>, window_params = [{transform_indices = @transform_0, window_bounds = array<i64: 16, 2048>}, {pipeline_mode = #tpu.pipeline_mode<synchronous>, transform_indices = @transform_1, window_bounds = array<i64: 32, 16>}, {pipeline_mode = #tpu.pipeline_mode<synchronous>, transform_indices = @transform_2, window_bounds = array<i64: 32, 1>}, {pipeline_mode = #tpu.pipeline_mode<synchronous>, transform_indices = @transform_3, window_bounds = array<i64: 32, 32>}, {pipeline_mode = #tpu.pipeline_mode<synchronous>, transform_indices = @transform_4, window_bounds = array<i64: 32, 1>}, {pipeline_mode = #tpu.pipeline_mode<synchronous>, transform_indices = @transform_5, window_bounds = array<i64: 32, 32>}, {pipeline_mode = #tpu.pipeline_mode<synchronous>, transform_indices = @transform_6, window_bounds = array<i64: 32, 1>}, {pipeline_mode = #tpu.pipeline_mode<synchronous>, transform_indices = @transform_7, window_bounds = array<i64: 32, 32>}, {pipeline_mode = #tpu.pipeline_mode<synchronous>, transform_indices = @transform_8, window_bounds = array<i64: 32, 1>}, {pipeline_mode = #tpu.pipeline_mode<synchronous>, transform_indices = @transform_9, window_bounds = array<i64: 8, 32>}, {pipeline_mode = #tpu.pipeline_mode<synchronous>, transform_indices = @transform_10, window_bounds = array<i64: 8, 1>}, {transform_indices = @transform_11, window_bounds = array<i64: 8, 2048>}]} {
    %c0 = arith.constant 0 : index
    %c0_0 = arith.constant 0 : index
    %0 = vector.load %arg2[%c0, %c0_0] : memref<32x16xbf16, #tpu.memory_space<vmem>>, vector<32x16xbf16>
    %c0_1 = arith.constant 0 : index
    %c0_2 = arith.constant 0 : index
    %1 = vector.load %arg1[%c0_1, %c0_2] : memref<16x2048xbf16, #tpu.memory_space<vmem>>, vector<16x2048xbf16>
    %cst = arith.constant dense<0.000000e+00> : vector<32x2048xf32>
    %2 = tpu.matmul %0, %1, %cst {dimension_numbers = #tpu.dot_dimension_numbers<[1], [0], [0], [1], [0, 0, 1, 1], [], []>} : vector<32x16xbf16>, vector<16x2048xbf16>, vector<32x2048xf32> -> vector<32x2048xf32>
    %c0_3 = arith.constant 0 : index
    %c0_4 = arith.constant 0 : index
    %3 = vector.load %arg3[%c0_3, %c0_4] : memref<32x1xf32, #tpu.memory_space<vmem>>, vector<32x1xf32>
    %4 = vector.broadcast %3 : vector<32x1xf32> to vector<32x2048xf32>
    %5 = arith.addf %2, %4 : vector<32x2048xf32>
    %cst_5 = arith.constant 0.000000e+00 : f32
    %6 = vector.broadcast %cst_5 : f32 to vector<32x2048xf32>
    %7 = arith.maximumf %5, %6 : vector<32x2048xf32>
    %c0_6 = arith.constant 0 : index
    %c0_7 = arith.constant 0 : index
    %8 = vector.load %arg4[%c0_6, %c0_7] : memref<32x32xbf16, #tpu.memory_space<vmem>>, vector<32x32xbf16>
    %9 = arith.truncf %7 : vector<32x2048xf32> to vector<32x2048xbf16>
    %cst_8 = arith.constant dense<0.000000e+00> : vector<32x2048xf32>
    %10 = tpu.matmul %8, %9, %cst_8 {dimension_numbers = #tpu.dot_dimension_numbers<[1], [0], [0], [1], [0, 0, 1, 1], [], []>} : vector<32x32xbf16>, vector<32x2048xbf16>, vector<32x2048xf32> -> vector<32x2048xf32>
    %c0_9 = arith.constant 0 : index
    %c0_10 = arith.constant 0 : index
    %11 = vector.load %arg5[%c0_9, %c0_10] : memref<32x1xf32, #tpu.memory_space<vmem>>, vector<32x1xf32>
    %12 = vector.broadcast %11 : vector<32x1xf32> to vector<32x2048xf32>
    %13 = arith.addf %10, %12 : vector<32x2048xf32>
    %cst_11 = arith.constant 0.000000e+00 : f32
    %14 = vector.broadcast %cst_11 : f32 to vector<32x2048xf32>
    %15 = arith.maximumf %13, %14 : vector<32x2048xf32>
    %c0_12 = arith.constant 0 : index
    %c0_13 = arith.constant 0 : index
    %16 = vector.load %arg6[%c0_12, %c0_13] : memref<32x32xbf16, #tpu.memory_space<vmem>>, vector<32x32xbf16>
    %17 = arith.truncf %15 : vector<32x2048xf32> to vector<32x2048xbf16>
    %cst_14 = arith.constant dense<0.000000e+00> : vector<32x2048xf32>
    %18 = tpu.matmul %16, %17, %cst_14 {dimension_numbers = #tpu.dot_dimension_numbers<[1], [0], [0], [1], [0, 0, 1, 1], [], []>} : vector<32x32xbf16>, vector<32x2048xbf16>, vector<32x2048xf32> -> vector<32x2048xf32>
    %c0_15 = arith.constant 0 : index
    %c0_16 = arith.constant 0 : index
    %19 = vector.load %arg7[%c0_15, %c0_16] : memref<32x1xf32, #tpu.memory_space<vmem>>, vector<32x1xf32>
    %20 = vector.broadcast %19 : vector<32x1xf32> to vector<32x2048xf32>
    %21 = arith.addf %18, %20 : vector<32x2048xf32>
    %cst_17 = arith.constant 0.000000e+00 : f32
    %22 = vector.broadcast %cst_17 : f32 to vector<32x2048xf32>
    %23 = arith.maximumf %21, %22 : vector<32x2048xf32>
    %24 = arith.addf %15, %23 : vector<32x2048xf32>
    %c0_18 = arith.constant 0 : index
    %c0_19 = arith.constant 0 : index
    %25 = vector.load %arg8[%c0_18, %c0_19] : memref<32x32xbf16, #tpu.memory_space<vmem>>, vector<32x32xbf16>
    %26 = arith.truncf %24 : vector<32x2048xf32> to vector<32x2048xbf16>
    %cst_20 = arith.constant dense<0.000000e+00> : vector<32x2048xf32>
    %27 = tpu.matmul %25, %26, %cst_20 {dimension_numbers = #tpu.dot_dimension_numbers<[1], [0], [0], [1], [0, 0, 1, 1], [], []>} : vector<32x32xbf16>, vector<32x2048xbf16>, vector<32x2048xf32> -> vector<32x2048xf32>
    %c0_21 = arith.constant 0 : index
    %c0_22 = arith.constant 0 : index
    %28 = vector.load %arg9[%c0_21, %c0_22] : memref<32x1xf32, #tpu.memory_space<vmem>>, vector<32x1xf32>
    %29 = vector.broadcast %28 : vector<32x1xf32> to vector<32x2048xf32>
    %30 = arith.addf %27, %29 : vector<32x2048xf32>
    %cst_23 = arith.constant 0.000000e+00 : f32
    %31 = vector.broadcast %cst_23 : f32 to vector<32x2048xf32>
    %32 = arith.maximumf %30, %31 : vector<32x2048xf32>
    %c0_24 = arith.constant 0 : index
    %c0_25 = arith.constant 0 : index
    %33 = vector.load %arg10[%c0_24, %c0_25] : memref<8x32xbf16, #tpu.memory_space<vmem>>, vector<8x32xbf16>
    %34 = arith.truncf %32 : vector<32x2048xf32> to vector<32x2048xbf16>
    %cst_26 = arith.constant dense<0.000000e+00> : vector<8x2048xf32>
    %35 = tpu.matmul %33, %34, %cst_26 {dimension_numbers = #tpu.dot_dimension_numbers<[1], [0], [0], [1], [0, 0, 1, 1], [], []>} : vector<8x32xbf16>, vector<32x2048xbf16>, vector<8x2048xf32> -> vector<8x2048xf32>
    %c0_27 = arith.constant 0 : index
    %c0_28 = arith.constant 0 : index
    %36 = vector.load %arg11[%c0_27, %c0_28] : memref<8x1xf32, #tpu.memory_space<vmem>>, vector<8x1xf32>
    %37 = vector.broadcast %36 : vector<8x1xf32> to vector<8x2048xf32>
    %38 = arith.addf %35, %37 : vector<8x2048xf32>
    %c0_29 = arith.constant 0 : index
    %c0_30 = arith.constant 0 : index
    %39 = vector.load %arg12[%c0_29, %c0_30] : memref<8x2048xf32, #tpu.memory_space<vmem>>, vector<8x2048xf32>
    tpu.vector_store %arg12[%c0_29, %c0_30], %38 {strides = array<i32>} : memref<8x2048xf32, #tpu.memory_space<vmem>>, vector<8x2048xf32>,
    return
  }
  func.func @transform_0(%arg0: i32) -> (i32, i32) {
    %c0_i32 = arith.constant 0 : i32
    %c0_i32_0 = arith.constant 0 : i32
    return %c0_i32, %arg0 : i32, i32
  }
  func.func @transform_1(%arg0: i32) -> (i32, i32) {
    %c0_i32 = arith.constant 0 : i32
    %c0_i32_0 = arith.constant 0 : i32
    %c0_i32_1 = arith.constant 0 : i32
    return %c0_i32, %c0_i32_0 : i32, i32
  }
  func.func @transform_2(%arg0: i32) -> (i32, i32) {
    %c0_i32 = arith.constant 0 : i32
    %c0_i32_0 = arith.constant 0 : i32
    %c0_i32_1 = arith.constant 0 : i32
    return %c0_i32, %c0_i32_0 : i32, i32
  }
  func.func @transform_3(%arg0: i32) -> (i32, i32) {
    %c0_i32 = arith.constant 0 : i32
    %c0_i32_0 = arith.constant 0 : i32
    %c0_i32_1 = arith.constant 0 : i32
    return %c0_i32, %c0_i32_0 : i32, i32
  }
  func.func @transform_4(%arg0: i32) -> (i32, i32) {
    %c0_i32 = arith.constant 0 : i32
    %c0_i32_0 = arith.constant 0 : i32
    %c0_i32_1 = arith.constant 0 : i32
    return %c0_i32, %c0_i32_0 : i32, i32
  }
  func.func @transform_5(%arg0: i32) -> (i32, i32) {
    %c0_i32 = arith.constant 0 : i32
    %c0_i32_0 = arith.constant 0 : i32
    %c0_i32_1 = arith.constant 0 : i32
    return %c0_i32, %c0_i32_0 : i32, i32
  }
  func.func @transform_6(%arg0: i32) -> (i32, i32) {
    %c0_i32 = arith.constant 0 : i32
    %c0_i32_0 = arith.constant 0 : i32
    %c0_i32_1 = arith.constant 0 : i32
    return %c0_i32, %c0_i32_0 : i32, i32
  }
  func.func @transform_7(%arg0: i32) -> (i32, i32) {
    %c0_i32 = arith.constant 0 : i32
    %c0_i32_0 = arith.constant 0 : i32
    %c0_i32_1 = arith.constant 0 : i32
    return %c0_i32, %c0_i32_0 : i32, i32
  }
  func.func @transform_8(%arg0: i32) -> (i32, i32) {
    %c0_i32 = arith.constant 0 : i32
    %c0_i32_0 = arith.constant 0 : i32
    %c0_i32_1 = arith.constant 0 : i32
    return %c0_i32, %c0_i32_0 : i32, i32
  }
  func.func @transform_9(%arg0: i32) -> (i32, i32) {
    %c0_i32 = arith.constant 0 : i32
    %c0_i32_0 = arith.constant 0 : i32
    %c0_i32_1 = arith.constant 0 : i32
    return %c0_i32, %c0_i32_0 : i32, i32
  }
  func.func @transform_10(%arg0: i32) -> (i32, i32) {
    %c0_i32 = arith.constant 0 : i32
    %c0_i32_0 = arith.constant 0 : i32
    %c0_i32_1 = arith.constant 0 : i32
    return %c0_i32, %c0_i32_0 : i32, i32
  }
  func.func @transform_11(%arg0: i32) -> (i32, i32) {
    %c0_i32 = arith.constant 0 : i32
    %c0_i32_0 = arith.constant 0 : i32
    return %c0_i32, %arg0 : i32, i32
  }
}

</mosaic_0001>

<llo_original>
// kernel: simple_resmlp_inr.1
$region0: #{simple_resmlp_inr.1}
  #allocation0 [shape = 'u32[]', space=smem, size = 0x4, offset = 0x4, fixed_abs, tag = 'smem constant byte address 0x4 - core index']
  #allocation1 [shape = 'u32[144,128]{1,0:T(1,128)}', space=vmem, size = 0x12000, scoped, tag = 'internal scratch']
  %s0 = inlined_call_operand.vmem [shape: bf16[16,8192], index: 0, kind: input, shape index: {}]
  %s1 = inlined_call_operand.vmem [shape: bf16[32,16], index: 1, kind: input, shape index: {}]
  %s2 = inlined_call_operand.vmem [shape: f32[32,1], index: 2, kind: input, shape index: {}]
  %s3 = inlined_call_operand.vmem [shape: bf16[32,32], index: 3, kind: input, shape index: {}]
  %s4 = inlined_call_operand.vmem [shape: f32[32,1], index: 4, kind: input, shape index: {}]
  %s5 = inlined_call_operand.vmem [shape: bf16[32,32], index: 5, kind: input, shape index: {}]
  %s6 = inlined_call_operand.vmem [shape: f32[32,1], index: 6, kind: input, shape index: {}]
  %s7 = inlined_call_operand.vmem [shape: bf16[32,32], index: 7, kind: input, shape index: {}]
  %s8 = inlined_call_operand.vmem [shape: f32[32,1], index: 8, kind: input, shape index: {}]
  %s9 = inlined_call_operand.vmem [shape: bf16[8,32], index: 9, kind: input, shape index: {}]
  %s10 = inlined_call_operand.vmem [shape: f32[8,1], index: 10, kind: input, shape index: {}]
  %s11 = inlined_call_operand.hbm [shape: f32[8,8192], index: 11, kind: output, shape index: {}]
  %s12 = sld [smem:[#allocation0]]
  $region100: #{simple_resmlp_inr.1} parent=0
    _
  %s14 = ssub.s32 1, %s12
  %s15 = scalar_select 0, %s14, %s12
  $region1: #{simple_resmlp_inr.1} parent=0
    #allocation2 [shape = 'u8[131072]{0}', space=vmem, size = 0x20000, scoped, tag = 'input window, operand 0']
    #allocation3 [shape = 'u8[131072]{0}', space=vmem, size = 0x20000, scoped, tag = 'output window, operand 0']
    #allocation4 [shape = 's32[2]{0}', space=sflag, size = 0x8, scoped, tag = 'scoped memory for simple_resmlp_inr.1']
    %16 = vsyncpa [#allocation4], 0
    %s17 = scalar_lea.sflag [#allocation4], 1
    %18 = vsyncpa %s17, 0
    loop: start=0, step=1, limit=6
    $region2: #{simple_resmlp_inr.1} parent=1 // loop_pre_header
      _
    $region3: #{simple_resmlp_inr.1} parent=1 // loop_header
      %s20 = sphi 0, %s24
      %p21 = scmp.ge.s32.totalorder %s20, 6
      %s30 = sphi 0, %s32
      %s33 = sphi 0, %s30
      %s34 = sphi 0, %s33
      %s50 = sphi 0, %s34
      %s54 = sphi 0, %s54
      %s56 = sphi 0, %s54
      %s57 = sphi 0, %s56
      %s71 = sphi 0, %s57
      %s75 = sphi 0, %s75
      %s77 = sphi 0, %s75
      %s78 = sphi 0, %s77
      %s92 = sphi 0, %s78
      %s96 = sphi 0, %s96
      %s98 = sphi 0, %s96
      %s99 = sphi 0, %s98
      %s113 = sphi 0, %s99
      %s117 = sphi 0, %s117
      %s119 = sphi 0, %s117
      %s120 = sphi 0, %s119
      %s134 = sphi 0, %s120
      %s138 = sphi 0, %s138
      %s140 = sphi 0, %s138
      %s141 = sphi 0, %s140
      %s155 = sphi 0, %s141
      %s159 = sphi 0, %s159
      %s161 = sphi 0, %s159
      %s162 = sphi 0, %s161
      %s176 = sphi 0, %s162
      %s180 = sphi 0, %s180
      %s182 = sphi 0, %s180
      %s183 = sphi 0, %s182
      %s197 = sphi 0, %s183
      %s201 = sphi 0, %s201
      %s203 = sphi 0, %s201
      %s204 = sphi 0, %s203
      %s218 = sphi 0, %s204
      %s222 = sphi 0, %s222
      %s224 = sphi 0, %s222
      %s225 = sphi 0, %s224
      %s239 = sphi 0, %s225
      %s243 = sphi 0, %s243
      %s245 = sphi 0, %s243
      %s246 = sphi 0, %s245
      %s260 = sphi 0, %s246
      %s266 = sphi 0, %s268
      %s269 = sphi 0, %s266
      %s270 = sphi 0, %s269
      %s286 = sphi 0, %s270
    $region4: #{simple_resmlp_inr.1} parent=1 // loop_header_branch
      %23 = sbr.rel (%p21) target = $region8
    $region5: #{simple_resmlp_inr.1} parent=1 // loop_body
      %s25 = ssub.s32 %s20, 1
      %s26 = ssub.s32 %s20, 2
      %s27 = sadd.s32 %s20, 1
      %s28 = ssub.s32 %s20, %s27
      %p29 = scmp.eq.s32.totalorder %s28, 0
      %s31 = sadd.s32 %s30, 1
      %s32 = scalar_select %p29, %s30, %s31
      %p35 = pneg %p29
      %p36 = scmp.eq.s32.totalorder %s20, 3
      %p37 = por %p35, %p36
      %p38 = scmp.ne.s32.totalorder %s30, %s33
      %p39 = scmp.eq.s32.totalorder %s20, 0
      %p40 = por %p38, %p39
      %p41 = scmp.ne.s32.totalorder %s30, %s33
      %p42 = scmp.eq.s32.totalorder %s25, 3
      %p43 = por %p41, %p42
      %p44 = scmp.ne.s32.totalorder %s33, %s34
      %p45 = scmp.eq.s32.totalorder %s25, 0
      %p46 = por %p44, %p45
      %p47 = scmp.ne.s32.totalorder %s33, %s34
      %p48 = scmp.eq.s32.totalorder %s26, 3
      %p49 = por %p47, %p48
      %p51 = scmp.ne.s32.totalorder %s34, %s50
      %p52 = scmp.eq.s32.totalorder %s26, 0
      %p53 = por %p51, %p52
      %s55 = sadd.s32 %s54, 1
      %p58 = scmp.eq.s32.totalorder %s20, 3
      %p59 = scmp.ne.s32.totalorder %s54, %s56
      %p60 = scmp.eq.s32.totalorder %s20, 0
      %p61 = por %p59, %p60
      %p62 = scmp.ne.s32.totalorder %s54, %s56
      %p63 = scmp.eq.s32.totalorder %s25, 3
      %p64 = por %p62, %p63
      %p65 = scmp.ne.s32.totalorder %s56, %s57
      %p66 = scmp.eq.s32.totalorder %s25, 0
      %p67 = por %p65, %p66
      %p68 = scmp.ne.s32.totalorder %s56, %s57
      %p69 = scmp.eq.s32.totalorder %s26, 3
      %p70 = por %p68, %p69
      %p72 = scmp.ne.s32.totalorder %s57, %s71
      %p73 = scmp.eq.s32.totalorder %s26, 0
      %p74 = por %p72, %p73
      %s76 = sadd.s32 %s75, 1
      %p79 = scmp.eq.s32.totalorder %s20, 3
      %p80 = scmp.ne.s32.totalorder %s75, %s77
      %p81 = scmp.eq.s32.totalorder %s20, 0
      %p82 = por %p80, %p81
      %p83 = scmp.ne.s32.totalorder %s75, %s77
      %p84 = scmp.eq.s32.totalorder %s25, 3
      %p85 = por %p83, %p84
      %p86 = scmp.ne.s32.totalorder %s77, %s78
      %p87 = scmp.eq.s32.totalorder %s25, 0
      %p88 = por %p86, %p87
      %p89 = scmp.ne.s32.totalorder %s77, %s78
      %p90 = scmp.eq.s32.totalorder %s26, 3
      %p91 = por %p89, %p90
      %p93 = scmp.ne.s32.totalorder %s78, %s92
      %p94 = scmp.eq.s32.totalorder %s26, 0
      %p95 = por %p93, %p94
      %s97 = sadd.s32 %s96, 1
      %p100 = scmp.eq.s32.totalorder %s20, 3
      %p101 = scmp.ne.s32.totalorder %s96, %s98
      %p102 = scmp.eq.s32.totalorder %s20, 0
      %p103 = por %p101, %p102
      %p104 = scmp.ne.s32.totalorder %s96, %s98
      %p105 = scmp.eq.s32.totalorder %s25, 3
      %p106 = por %p104, %p105
      %p107 = scmp.ne.s32.totalorder %s98, %s99
      %p108 = scmp.eq.s32.totalorder %s25, 0
      %p109 = por %p107, %p108
      %p110 = scmp.ne.s32.totalorder %s98, %s99
      %p111 = scmp.eq.s32.totalorder %s26, 3
      %p112 = por %p110, %p111
      %p114 = scmp.ne.s32.totalorder %s99, %s113
      %p115 = scmp.eq.s32.totalorder %s26, 0
      %p116 = por %p114, %p115
      %s118 = sadd.s32 %s117, 1
      %p121 = scmp.eq.s32.totalorder %s20, 3
      %p122 = scmp.ne.s32.totalorder %s117, %s119
      %p123 = scmp.eq.s32.totalorder %s20, 0
      %p124 = por %p122, %p123
      %p125 = scmp.ne.s32.totalorder %s117, %s119
      %p126 = scmp.eq.s32.totalorder %s25, 3
      %p127 = por %p125, %p126
      %p128 = scmp.ne.s32.totalorder %s119, %s120
      %p129 = scmp.eq.s32.totalorder %s25, 0
      %p130 = por %p128, %p129
      %p131 = scmp.ne.s32.totalorder %s119, %s120
      %p132 = scmp.eq.s32.totalorder %s26, 3
      %p133 = por %p131, %p132
      %p135 = scmp.ne.s32.totalorder %s120, %s134
      %p136 = scmp.eq.s32.totalorder %s26, 0
      %p137 = por %p135, %p136
      %s139 = sadd.s32 %s138, 1
      %p142 = scmp.eq.s32.totalorder %s20, 3
      %p143 = scmp.ne.s32.totalorder %s138, %s140
      %p144 = scmp.eq.s32.totalorder %s20, 0
      %p145 = por %p143, %p144
      %p146 = scmp.ne.s32.totalorder %s138, %s140
      %p147 = scmp.eq.s32.totalorder %s25, 3
      %p148 = por %p146, %p147
      %p149 = scmp.ne.s32.totalorder %s140, %s141
      %p150 = scmp.eq.s32.totalorder %s25, 0
      %p151 = por %p149, %p150
      %p152 = scmp.ne.s32.totalorder %s140, %s141
      %p153 = scmp.eq.s32.totalorder %s26, 3
      %p154 = por %p152, %p153
      %p156 = scmp.ne.s32.totalorder %s141, %s155
      %p157 = scmp.eq.s32.totalorder %s26, 0
      %p158 = por %p156, %p157
      %s160 = sadd.s32 %s159, 1
      %p163 = scmp.eq.s32.totalorder %s20, 3
      %p164 = scmp.ne.s32.totalorder %s159, %s161
      %p165 = scmp.eq.s32.totalorder %s20, 0
      %p166 = por %p164, %p165
      %p167 = scmp.ne.s32.totalorder %s159, %s161
      %p168 = scmp.eq.s32.totalorder %s25, 3
      %p169 = por %p167, %p168
      %p170 = scmp.ne.s32.totalorder %s161, %s162
      %p171 = scmp.eq.s32.totalorder %s25, 0
      %p172 = por %p170, %p171
      %p173 = scmp.ne.s32.totalorder %s161, %s162
      %p174 = scmp.eq.s32.totalorder %s26, 3
      %p175 = por %p173, %p174
      %p177 = scmp.ne.s32.totalorder %s162, %s176
      %p178 = scmp.eq.s32.totalorder %s26, 0
      %p179 = por %p177, %p178
      %s181 = sadd.s32 %s180, 1
      %p184 = scmp.eq.s32.totalorder %s20, 3
      %p185 = scmp.ne.s32.totalorder %s180, %s182
      %p186 = scmp.eq.s32.totalorder %s20, 0
      %p187 = por %p185, %p186
      %p188 = scmp.ne.s32.totalorder %s180, %s182
      %p189 = scmp.eq.s32.totalorder %s25, 3
      %p190 = por %p188, %p189
      %p191 = scmp.ne.s32.totalorder %s182, %s183
      %p192 = scmp.eq.s32.totalorder %s25, 0
      %p193 = por %p191, %p192
      %p194 = scmp.ne.s32.totalorder %s182, %s183
      %p195 = scmp.eq.s32.totalorder %s26, 3
      %p196 = por %p194, %p195
      %p198 = scmp.ne.s32.totalorder %s183, %s197
      %p199 = scmp.eq.s32.totalorder %s26, 0
      %p200 = por %p198, %p199
      %s202 = sadd.s32 %s201, 1
      %p205 = scmp.eq.s32.totalorder %s20, 3
      %p206 = scmp.ne.s32.totalorder %s201, %s203
      %p207 = scmp.eq.s32.totalorder %s20, 0
      %p208 = por %p206, %p207
      %p209 = scmp.ne.s32.totalorder %s201, %s203
      %p210 = scmp.eq.s32.totalorder %s25, 3
      %p211 = por %p209, %p210
      %p212 = scmp.ne.s32.totalorder %s203, %s204
      %p213 = scmp.eq.s32.totalorder %s25, 0
      %p214 = por %p212, %p213
      %p215 = scmp.ne.s32.totalorder %s203, %s204
      %p216 = scmp.eq.s32.totalorder %s26, 3
      %p217 = por %p215, %p216
      %p219 = scmp.ne.s32.totalorder %s204, %s218
      %p220 = scmp.eq.s32.totalorder %s26, 0
      %p221 = por %p219, %p220
      %s223 = sadd.s32 %s222, 1
      %p226 = scmp.eq.s32.totalorder %s20, 3
      %p227 = scmp.ne.s32.totalorder %s222, %s224
      %p228 = scmp.eq.s32.totalorder %s20, 0
      %p229 = por %p227, %p228
      %p230 = scmp.ne.s32.totalorder %s222, %s224
      %p231 = scmp.eq.s32.totalorder %s25, 3
      %p232 = por %p230, %p231
      %p233 = scmp.ne.s32.totalorder %s224, %s225
      %p234 = scmp.eq.s32.totalorder %s25, 0
      %p235 = por %p233, %p234
      %p236 = scmp.ne.s32.totalorder %s224, %s225
      %p237 = scmp.eq.s32.totalorder %s26, 3
      %p238 = por %p236, %p237
      %p240 = scmp.ne.s32.totalorder %s225, %s239
      %p241 = scmp.eq.s32.totalorder %s26, 0
      %p242 = por %p240, %p241
      %s244 = sadd.s32 %s243, 1
      %p247 = scmp.eq.s32.totalorder %s20, 3
      %p248 = scmp.ne.s32.totalorder %s243, %s245
      %p249 = scmp.eq.s32.totalorder %s20, 0
      %p250 = por %p248, %p249
      %p251 = scmp.ne.s32.totalorder %s243, %s245
      %p252 = scmp.eq.s32.totalorder %s25, 3
      %p253 = por %p251, %p252
      %p254 = scmp.ne.s32.totalorder %s245, %s246
      %p255 = scmp.eq.s32.totalorder %s25, 0
      %p256 = por %p254, %p255
      %p257 = scmp.ne.s32.totalorder %s245, %s246
      %p258 = scmp.eq.s32.totalorder %s26, 3
      %p259 = por %p257, %p258
      %p261 = scmp.ne.s32.totalorder %s246, %s260
      %p262 = scmp.eq.s32.totalorder %s26, 0
      %p263 = por %p261, %p262
      %s264 = ssub.s32 %s20, %s27
      %p265 = scmp.eq.s32.totalorder %s264, 0
      %s267 = sadd.s32 %s266, 1
      %s268 = scalar_select %p265, %s266, %s267
      %p271 = pneg %p265
      %p272 = scmp.eq.s32.totalorder %s20, 3
      %p273 = por %p271, %p272
      %p274 = scmp.ne.s32.totalorder %s266, %s269
      %p275 = scmp.eq.s32.totalorder %s20, 0
      %p276 = por %p274, %p275
      %p277 = scmp.ne.s32.totalorder %s266, %s269
      %p278 = scmp.eq.s32.totalorder %s25, 3
      %p279 = por %p277, %p278
      %p280 = scmp.ne.s32.totalorder %s269, %s270
      %p281 = scmp.eq.s32.totalorder %s25, 0
      %p282 = por %p280, %p281
      %p283 = scmp.ne.s32.totalorder %s269, %s270
      %p284 = scmp.eq.s32.totalorder %s26, 3
      %p285 = por %p283, %p284
      %p287 = scmp.ne.s32.totalorder %s270, %s286
      %p288 = scmp.eq.s32.totalorder %s26, 0
      %p289 = por %p287, %p288
      %p290 = scmp.le.s32.totalorder 1, %s20
      %p291 = scmp.lt.s32.totalorder %s20, 5
      %p292 = pnand %p290, %p291
      %p293 = pneg %p292
      // Predicated region
      $region9: #{simple_resmlp_inr.1} parent=5 // pred_check
        _
      $region10: #{simple_resmlp_inr.1} parent=5 // pred_check_branch
        %295 = sbr.rel (%p292) target = $region12
      $region11: #{simple_resmlp_inr.1} parent=5 // pred_region
        %s296 = ssub.s32 %s20, 1
        // Predicated region
        $region13: #{simple_resmlp_inr.1} parent=11 // pred_check
          %p297 = pneg %p67
        $region14: #{simple_resmlp_inr.1} parent=11 // pred_check_branch
          %299 = sbr.rel (%p297) target = $region16
        $region15: #{simple_resmlp_inr.1} parent=11 // pred_region
          _
        $region16: #{simple_resmlp_inr.1} parent=11 // pred_fallthru
          _
        // Predicated region
        $region17: #{simple_resmlp_inr.1} parent=11 // pred_check
          %p300 = pneg %p88
        $region18: #{simple_resmlp_inr.1} parent=11 // pred_check_branch
          %302 = sbr.rel (%p300) target = $region20
        $region19: #{simple_resmlp_inr.1} parent=11 // pred_region
          _
        $region20: #{simple_resmlp_inr.1} parent=11 // pred_fallthru
          _
        // Predicated region
        $region21: #{simple_resmlp_inr.1} parent=11 // pred_check
          %p303 = pneg %p109
        $region22: #{simple_resmlp_inr.1} parent=11 // pred_check_branch
          %305 = sbr.rel (%p303) target = $region24
        $region23: #{simple_resmlp_inr.1} parent=11 // pred_region
          _
        $region24: #{simple_resmlp_inr.1} parent=11 // pred_fallthru
          _
        // Predicated region
        $region25: #{simple_resmlp_inr.1} parent=11 // pred_check
          %p306 = pneg %p130
        $region26: #{simple_resmlp_inr.1} parent=11 // pred_check_branch
          %308 = sbr.rel (%p306) target = $region28
        $region27: #{simple_resmlp_inr.1} parent=11 // pred_region
          _
        $region28: #{simple_resmlp_inr.1} parent=11 // pred_fallthru
          _
        // Predicated region
        $region29: #{simple_resmlp_inr.1} parent=11 // pred_check
          %p309 = pneg %p151
        $region30: #{simple_resmlp_inr.1} parent=11 // pred_check_branch
          %311 = sbr.rel (%p309) target = $region32
        $region31: #{simple_resmlp_inr.1} parent=11 // pred_region
          _
        $region32: #{simple_resmlp_inr.1} parent=11 // pred_fallthru
          _
        // Predicated region
        $region33: #{simple_resmlp_inr.1} parent=11 // pred_check
          %p312 = pneg %p172
        $region34: #{simple_resmlp_inr.1} parent=11 // pred_check_branch
          %314 = sbr.rel (%p312) target = $region36
        $region35: #{simple_resmlp_inr.1} parent=11 // pred_region
          _
        $region36: #{simple_resmlp_inr.1} parent=11 // pred_fallthru
          _
        // Predicated region
        $region37: #{simple_resmlp_inr.1} parent=11 // pred_check
          %p315 = pneg %p193
        $region38: #{simple_resmlp_inr.1} parent=11 // pred_check_branch
          %317 = sbr.rel (%p315) target = $region40
        $region39: #{simple_resmlp_inr.1} parent=11 // pred_region
          _
        $region40: #{simple_resmlp_inr.1} parent=11 // pred_fallthru
          _
        // Predicated region
        $region41: #{simple_resmlp_inr.1} parent=11 // pred_check
          %p318 = pneg %p214
        $region42: #{simple_resmlp_inr.1} parent=11 // pred_check_branch
          %320 = sbr.rel (%p318) target = $region44
        $region43: #{simple_resmlp_inr.1} parent=11 // pred_region
          _
        $region44: #{simple_resmlp_inr.1} parent=11 // pred_fallthru
          _
        // Predicated region
        $region45: #{simple_resmlp_inr.1} parent=11 // pred_check
          %p321 = pneg %p235
        $region46: #{simple_resmlp_inr.1} parent=11 // pred_check_branch
          %323 = sbr.rel (%p321) target = $region48
        $region47: #{simple_resmlp_inr.1} parent=11 // pred_region
          _
        $region48: #{simple_resmlp_inr.1} parent=11 // pred_fallthru
          _
        // Predicated region
        $region49: #{simple_resmlp_inr.1} parent=11 // pred_check
          %p324 = pneg %p256
        $region50: #{simple_resmlp_inr.1} parent=11 // pred_check_branch
          %326 = sbr.rel (%p324) target = $region52
        $region51: #{simple_resmlp_inr.1} parent=11 // pred_region
          _
        $region52: #{simple_resmlp_inr.1} parent=11 // pred_fallthru
          _
      $region12: #{simple_resmlp_inr.1} parent=5 // pred_fallthru
        _
      %p327 = scmp.lt.s32.totalorder %s20, 4
      // Predicated region
      $region53: #{simple_resmlp_inr.1} parent=5 // pred_check
        %p328 = pneg %p327
      $region54: #{simple_resmlp_inr.1} parent=5 // pred_check_branch
        %330 = sbr.rel (%p328) target = $region56
      $region55: #{simple_resmlp_inr.1} parent=5 // pred_region
        // Predicated region
        $region57: #{simple_resmlp_inr.1} parent=55 // pred_check
          %p331 = pneg %p40
        $region58: #{simple_resmlp_inr.1} parent=55 // pred_check_branch
          %333 = sbr.rel (%p331) target = $region60
        $region59: #{simple_resmlp_inr.1} parent=55 // pred_region
          %s334 = sand.u32 %s30, 1
          %s335 = sand.u32 %s30, 1
          %s336 = smul.addr %s335, 128
          %s337 = scalar_lea.vmem [#allocation2], %s336
          %s338 = smul.u32 16, %s20
          %s339 = smul.addr %s338, 4
          %s340 = scalar_lea.vmem %s0, %s339
          // Predicated region
          $region61: #{simple_resmlp_inr.1} parent=59 // pred_check
            _
          $region62: #{simple_resmlp_inr.1} parent=59 // pred_check_branch
            %342 = sbr.rel (0) target = $region64
          $region63: #{simple_resmlp_inr.1} parent=59 // pred_region
            // Predicated region
            $region65: #{simple_resmlp_inr.1} parent=63 // pred_check
              _
            $region66: #{simple_resmlp_inr.1} parent=63 // pred_check_branch
              %344 = sbr.rel (0) target = $region68
            $region67: #{simple_resmlp_inr.1} parent=63 // pred_region
              loop: start=0, step=1, limit=1
              $region69: #{simple_resmlp_inr.1} parent=67 // loop_pre_header
                _
              $region70: #{simple_resmlp_inr.1} parent=67 // loop_header
                %s346 = sphi 0, %s350
                %p347 = scmp.ge.s32.totalorder %s346, 1
                %s351 = sphi %s340, %s340
                %s352 = sphi %s337, %s337
              $region71: #{simple_resmlp_inr.1} parent=67 // loop_header_branch
                %349 = sbr.rel (%p347) target = $region75
              $region72: #{simple_resmlp_inr.1} parent=67 // loop_body
                %v353 = vld [vmem:[%s351] sm:$0xff]
                %354 = vst [vmem:[%s352] sm:$0xff] %v353
                %v355 = vld [vmem:[%s351 + $0x8] sm:$0xff]
                %356 = vst [vmem:[%s352 + $0x8] sm:$0xff] %v355
                %v357 = vld [vmem:[%s351 + $0x10] sm:$0xff]
                %358 = vst [vmem:[%s352 + $0x10] sm:$0xff] %v357
                %v359 = vld [vmem:[%s351 + $0x18] sm:$0xff]
                %360 = vst [vmem:[%s352 + $0x18] sm:$0xff] %v359
                %v361 = vld [vmem:[%s351 + $0x20] sm:$0xff]
                %362 = vst [vmem:[%s352 + $0x20] sm:$0xff] %v361
                %v363 = vld [vmem:[%s351 + $0x28] sm:$0xff]
                %364 = vst [vmem:[%s352 + $0x28] sm:$0xff] %v363
                %v365 = vld [vmem:[%s351 + $0x30] sm:$0xff]
                %366 = vst [vmem:[%s352 + $0x30] sm:$0xff] %v365
                %v367 = vld [vmem:[%s351 + $0x38] sm:$0xff]
                %368 = vst [vmem:[%s352 + $0x38] sm:$0xff] %v367
                %v369 = vld [vmem:[%s351 + $0x100] sm:$0xff]
                %370 = vst [vmem:[%s352 + $0x40] sm:$0xff] %v369
                %v371 = vld [vmem:[%s351 + $0x108] sm:$0xff]
                %372 = vst [vmem:[%s352 + $0x48] sm:$0xff] %v371
                %v373 = vld [vmem:[%s351 + $0x110] sm:$0xff]
                %374 = vst [vmem:[%s352 + $0x50] sm:$0xff] %v373
                %v375 = vld [vmem:[%s351 + $0x118] sm:$0xff]
                %376 = vst [vmem:[%s352 + $0x58] sm:$0xff] %v375
                %v377 = vld [vmem:[%s351 + $0x120] sm:$0xff]
                %378 = vst [vmem:[%s352 + $0x60] sm:$0xff] %v377
                %v379 = vld [vmem:[%s351 + $0x128] sm:$0xff]
                %380 = vst [vmem:[%s352 + $0x68] sm:$0xff] %v379
                %v381 = vld [vmem:[%s351 + $0x130] sm:$0xff]
                %382 = vst [vmem:[%s352 + $0x70] sm:$0xff] %v381
                %v383 = vld [vmem:[%s351 + $0x138] sm:$0xff]
                %384 = vst [vmem:[%s352 + $0x78] sm:$0xff] %v383
              $region73: #{simple_resmlp_inr.1} parent=67 // loop_footer
                %s350 = sadd.s32 1, %s346
              $region74: #{simple_resmlp_inr.1} parent=67 // loop_footer_branch
                %345 = sbr.rel target = $region70
              $region75: #{simple_resmlp_inr.1} parent=67 // loop_exit
                _
            $region68: #{simple_resmlp_inr.1} parent=63 // pred_fallthru
              _
            // Predicated region
            $region76: #{simple_resmlp_inr.1} parent=63 // pred_check
              _
            $region77: #{simple_resmlp_inr.1} parent=63 // pred_check_branch
              %386 = sbr.rel target = $region79
            $region78: #{simple_resmlp_inr.1} parent=63 // pred_region
              _
            $region79: #{simple_resmlp_inr.1} parent=63 // pred_fallthru
              _
          $region64: #{simple_resmlp_inr.1} parent=59 // pred_fallthru
            _
          %387 = vnop
        $region60: #{simple_resmlp_inr.1} parent=55 // pred_fallthru
          _
      $region56: #{simple_resmlp_inr.1} parent=5 // pred_fallthru
        _
      %p388 = scmp.le.s32.totalorder 1, %s20
      %p389 = scmp.lt.s32.totalorder %s20, 5
      %p390 = pnand %p388, %p389
      %p391 = pneg %p390
      // Predicated region
      $region80: #{simple_resmlp_inr.1} parent=5 // pred_check
        _
      $region81: #{simple_resmlp_inr.1} parent=5 // pred_check_branch
        %393 = sbr.rel (%p390) target = $region83
      $region82: #{simple_resmlp_inr.1} parent=5 // pred_region
        %s394 = ssub.s32 %s20, 1
        %s395 = sand.u32 %s33, 1
        %s396 = sand.u32 %s33, 1
        %s397 = smul.addr %s396, 128
        %s398 = scalar_lea.vmem [#allocation2], %s397
        // Predicated region
        $region84: #{simple_resmlp_inr.1} parent=82 // pred_check
          %p399 = pneg %p46
        $region85: #{simple_resmlp_inr.1} parent=82 // pred_check_branch
          %401 = sbr.rel (%p399) target = $region87
        $region86: #{simple_resmlp_inr.1} parent=82 // pred_region
          _
        $region87: #{simple_resmlp_inr.1} parent=82 // pred_fallthru
          _
        %s402 = sand.u32 %s33, 1
        %s403 = sand.u32 %s33, 1
        %s404 = smul.addr %s403, 128
        %s405 = scalar_lea.vmem [#allocation2], %s404
        %p406 = pneg %p46
        %p407 = pneg %p43
        %p408 = pneg %p67
        %p409 = pneg %p64
        %p410 = pneg %p88
        %p411 = pneg %p85
        %p412 = pneg %p109
        %p413 = pneg %p106
        %p414 = pneg %p130
        %p415 = pneg %p127
        %p416 = pneg %p151
        %p417 = pneg %p148
        %p418 = pneg %p172
        %p419 = pneg %p169
        %p420 = pneg %p193
        %p421 = pneg %p190
        %p422 = pneg %p214
        %p423 = pneg %p211
        %p424 = pneg %p235
        %p425 = pneg %p232
        %p426 = pneg %p256
        %p427 = pneg %p253
        %p428 = pneg %p282
        %p429 = pneg %p279
        %s430 = sand.u32 %s269, 1
        %s431 = scalar_lea.sflag [#allocation4], %s430
        %s432 = sand.u32 %s269, 1
        %s433 = smul.addr %s432, 128
        %s434 = scalar_lea.vmem [#allocation3], %s433
        %s435 = smul.u32 16, %s25
        %s436 = smul.u32 16, %s25
        %v438 = vld [vmem:[%s1] sm:$0xf]
        %v439 = vld [vmem:[%s1 + $0x4] sm:$0xf]
        %v440 = vld [vmem:[%s1 + $0x8] sm:$0xf]
        %v441 = vld [vmem:[%s1 + $0xc] sm:$0xf]
        %v442 = vld [vmem:[%s398] sm:$0xff]
        %v443 = vld [vmem:[%s398 + $0x8] sm:$0xff]
        %v444 = vld [vmem:[%s398 + $0x10] sm:$0xff]
        %v445 = vld [vmem:[%s398 + $0x18] sm:$0xff]
        %v446 = vld [vmem:[%s398 + $0x20] sm:$0xff]
        %v447 = vld [vmem:[%s398 + $0x28] sm:$0xff]
        %v448 = vld [vmem:[%s398 + $0x30] sm:$0xff]
        %v449 = vld [vmem:[%s398 + $0x38] sm:$0xff]
        %v450 = vld [vmem:[%s398 + $0x40] sm:$0xff]
        %v451 = vld [vmem:[%s398 + $0x48] sm:$0xff]
        %v452 = vld [vmem:[%s398 + $0x50] sm:$0xff]
        %v453 = vld [vmem:[%s398 + $0x58] sm:$0xff]
        %v454 = vld [vmem:[%s398 + $0x60] sm:$0xff]
        %v455 = vld [vmem:[%s398 + $0x68] sm:$0xff]
        %v456 = vld [vmem:[%s398 + $0x70] sm:$0xff]
        %v457 = vld [vmem:[%s398 + $0x78] sm:$0xff]
        %v458 = vld [vmem:[%s2] sm:$0xff]
        %v459 = vld [vmem:[%s2 + $0x8] sm:$0xff]
        %v460 = vld [vmem:[%s2 + $0x10] sm:$0xff]
        %v461 = vld [vmem:[%s2 + $0x18] sm:$0xff]
        %463 = vset.pattern.permute.xlu0 0
        %464 = vperm.xlu0 %463, %v458
        %v465 = vpop.permute.xlu0 %464
        %468 = vset.pattern.permute.xlu0 0
        %469 = vperm.xlu0 %468, %v459
        %v470 = vpop.permute.xlu0 %469
        %473 = vset.pattern.permute.xlu0 0
        %474 = vperm.xlu0 %473, %v460
        %v475 = vpop.permute.xlu0 %474
        %478 = vset.pattern.permute.xlu0 0
        %479 = vperm.xlu0 %478, %v461
        %v480 = vpop.permute.xlu0 %479
        %v486 = vunpack.c.l.b16 %v438
        %v487 = vunpack.c.l.b16 %v439
        %v488 = vunpack.c.l.b16 %v440
        %v489 = vunpack.c.l.b16 %v441
        %v490 = vpack.c.b16 %v487, %v486
        %v491 = vpack.c.b16 %v489, %v488
        %v508 = vunpack.c.l.b16 %v442
        %v509 = vunpack.c.h.b16 %v442
        %v510 = vunpack.c.l.b16 %v443
        %v511 = vunpack.c.h.b16 %v443
        %v512 = vunpack.c.l.b16 %v444
        %v513 = vunpack.c.h.b16 %v444
        %v514 = vunpack.c.l.b16 %v445
        %v515 = vunpack.c.h.b16 %v445
        %v516 = vunpack.c.l.b16 %v446
        %v517 = vunpack.c.h.b16 %v446
        %v518 = vunpack.c.l.b16 %v447
        %v519 = vunpack.c.h.b16 %v447
        %v520 = vunpack.c.l.b16 %v448
        %v521 = vunpack.c.h.b16 %v448
        %v522 = vunpack.c.l.b16 %v449
        %v523 = vunpack.c.h.b16 %v449
        %v524 = vunpack.c.l.b16 %v450
        %v525 = vunpack.c.h.b16 %v450
        %v526 = vunpack.c.l.b16 %v451
        %v527 = vunpack.c.h.b16 %v451
        %v528 = vunpack.c.l.b16 %v452
        %v529 = vunpack.c.h.b16 %v452
        %v530 = vunpack.c.l.b16 %v453
        %v531 = vunpack.c.h.b16 %v453
        %v532 = vunpack.c.l.b16 %v454
        %v533 = vunpack.c.h.b16 %v454
        %v534 = vunpack.c.l.b16 %v455
        %v535 = vunpack.c.h.b16 %v455
        %v536 = vunpack.c.l.b16 %v456
        %v537 = vunpack.c.h.b16 %v456
        %v538 = vunpack.c.l.b16 %v457
        %v539 = vunpack.c.h.b16 %v457
        %v540 = vpack.c.b16 %v524, %v508
        %v541 = vpack.c.b16 %v525, %v509
        %v542 = vpack.c.b16 %v526, %v510
        %v543 = vpack.c.b16 %v527, %v511
        %v544 = vpack.c.b16 %v528, %v512
        %v545 = vpack.c.b16 %v529, %v513
        %v546 = vpack.c.b16 %v530, %v514
        %v547 = vpack.c.b16 %v531, %v515
        %v548 = vpack.c.b16 %v532, %v516
        %v549 = vpack.c.b16 %v533, %v517
        %v550 = vpack.c.b16 %v534, %v518
        %v551 = vpack.c.b16 %v535, %v519
        %v552 = vpack.c.b16 %v536, %v520
        %v553 = vpack.c.b16 %v537, %v521
        %v554 = vpack.c.b16 %v538, %v522
        %v555 = vpack.c.b16 %v539, %v523
        %vm572 = vcmask 130048
        %v574 = vsel %vm572, %v490, 0
        %v577 = vsel %vm572, %v491, 0
        %579 = vmatprep.subr.bf16.mxu0 %v541
        %580 = vmatpush1.bf16.msra.mxu0 %v540
        %581 = vmatprep.subr.bf16.mxu0 0
        %582 = vmatpush1.bf16.msra.mxu0 0
        %583 = vmatprep.subr.bf16.mxu0 0
        %584 = vmatpush1.bf16.msra.mxu0 0
        %585 = vmatprep.subr.bf16.mxu0 0
        %586 = vmatpush1.bf16.msra.mxu0 0
        %587 = vmatprep.subr.bf16.mxu0 0
        %588 = vmatpush1.bf16.msra.mxu0 0
        %589 = vmatprep.subr.bf16.mxu0 0
        %590 = vmatpush1.bf16.msra.mxu0 0
        %591 = vmatprep.subr.bf16.mxu0 0
        %592 = vmatpush1.bf16.msra.mxu0 0
        %593 = vmatprep.subr.bf16.mxu0 0
        %594 = vmatpush1.bf16.msra.mxu0 0
        %595 = vmatprep.subr.bf16.mxu0 0
        %596 = vmatpush1.bf16.msra.mxu0 0
        %597 = vmatprep.subr.bf16.mxu0 0
        %598 = vmatpush1.bf16.msra.mxu0 0
        %599 = vmatprep.subr.bf16.mxu0 0
        %600 = vmatpush1.bf16.msra.mxu0 0
        %601 = vmatprep.subr.bf16.mxu0 0
        %602 = vmatpush1.bf16.msra.mxu0 0
        %603 = vmatprep.subr.bf16.mxu0 0
        %604 = vmatpush1.bf16.msra.mxu0 0
        %605 = vmatprep.subr.bf16.mxu0 0
        %606 = vmatpush1.bf16.msra.mxu0 0
        %607 = vmatprep.subr.bf16.mxu0 0
        %608 = vmatpush1.bf16.msra.mxu0 0
        %609 = vmatprep.subr.bf16.mxu0 0
        %610 = vmatpush1.bf16.msra.mxu0 0
        %611 = vmatprep.mubr.bf16.mxu0 0
        %612 = vmatmul.mubr.bf16.gmra.mrb[0].mxu0 %v574
        %v613 = vpop.f32.mrb[0].mxu0
        %v614 = vadd.f32 %v465, %v613
        %v615 = vpop.f32.mrb[0].mxu0
        %v616 = vadd.f32 %v465, %v615
        %v617 = vpop.f32.mrb[0].mxu0
        %v618 = vadd.f32 %v470, %v617
        %v619 = vpop.f32.mrb[0].mxu0
        %v620 = vadd.f32 %v470, %v619
        %621 = vmatprep.mubr.bf16.mxu0 0
        %622 = vmatmul.mubr.bf16.gmra.mrb[0].mxu0 %v577
        %v623 = vpop.f32.mrb[0].mxu0
        %v624 = vadd.f32 %v475, %v623
        %v625 = vpop.f32.mrb[0].mxu0
        %v626 = vadd.f32 %v475, %v625
        %v627 = vpop.f32.mrb[0].mxu0
        %v628 = vadd.f32 %v480, %v627
        %v629 = vpop.f32.mrb[0].mxu0
        %v630 = vadd.f32 %v480, %v629
        %631 = vdwg.mxu0
        %632 = vmatprep.subr.bf16.mxu0 %v543
        %633 = vmatpush1.bf16.msra.mxu0 %v542
        %634 = vmatprep.subr.bf16.mxu0 0
        %635 = vmatpush1.bf16.msra.mxu0 0
        %636 = vmatprep.subr.bf16.mxu0 0
        %637 = vmatpush1.bf16.msra.mxu0 0
        %638 = vmatprep.subr.bf16.mxu0 0
        %639 = vmatpush1.bf16.msra.mxu0 0
        %640 = vmatprep.subr.bf16.mxu0 0
        %641 = vmatpush1.bf16.msra.mxu0 0
        %642 = vmatprep.subr.bf16.mxu0 0
        %643 = vmatpush1.bf16.msra.mxu0 0
        %644 = vmatprep.subr.bf16.mxu0 0
        %645 = vmatpush1.bf16.msra.mxu0 0
        %646 = vmatprep.subr.bf16.mxu0 0
        %647 = vmatpush1.bf16.msra.mxu0 0
        %648 = vmatprep.subr.bf16.mxu0 0
        %649 = vmatpush1.bf16.msra.mxu0 0
        %650 = vmatprep.subr.bf16.mxu0 0
        %651 = vmatpush1.bf16.msra.mxu0 0
        %652 = vmatprep.subr.bf16.mxu0 0
        %653 = vmatpush1.bf16.msra.mxu0 0
        %654 = vmatprep.subr.bf16.mxu0 0
        %655 = vmatpush1.bf16.msra.mxu0 0
        %656 = vmatprep.subr.bf16.mxu0 0
        %657 = vmatpush1.bf16.msra.mxu0 0
        %658 = vmatprep.subr.bf16.mxu0 0
        %659 = vmatpush1.bf16.msra.mxu0 0
        %660 = vmatprep.subr.bf16.mxu0 0
        %661 = vmatpush1.bf16.msra.mxu0 0
        %662 = vmatprep.subr.bf16.mxu0 0
        %663 = vmatpush1.bf16.msra.mxu0 0
        %664 = vmatprep.mubr.bf16.mxu0 0
        %665 = vmatmul.mubr.bf16.gmra.mrb[0].mxu0 %v574
        %v666 = vpop.f32.mrb[0].mxu0
        %v667 = vadd.f32 %v465, %v666
        %v668 = vpop.f32.mrb[0].mxu0
        %v669 = vadd.f32 %v465, %v668
        %v670 = vpop.f32.mrb[0].mxu0
        %v671 = vadd.f32 %v470, %v670
        %v672 = vpop.f32.mrb[0].mxu0
        %v673 = vadd.f32 %v470, %v672
        %674 = vmatprep.mubr.bf16.mxu0 0
        %675 = vmatmul.mubr.bf16.gmra.mrb[0].mxu0 %v577
        %v676 = vpop.f32.mrb[0].mxu0
        %v677 = vadd.f32 %v475, %v676
        %v678 = vpop.f32.mrb[0].mxu0
        %v679 = vadd.f32 %v475, %v678
        %v680 = vpop.f32.mrb[0].mxu0
        %v681 = vadd.f32 %v480, %v680
        %v682 = vpop.f32.mrb[0].mxu0
        %v683 = vadd.f32 %v480, %v682
        %684 = vdwg.mxu0
        %685 = vmatprep.subr.bf16.mxu0 %v545
        %686 = vmatpush1.bf16.msra.mxu0 %v544
        %687 = vmatprep.subr.bf16.mxu0 0
        %688 = vmatpush1.bf16.msra.mxu0 0
        %689 = vmatprep.subr.bf16.mxu0 0
        %690 = vmatpush1.bf16.msra.mxu0 0
        %691 = vmatprep.subr.bf16.mxu0 0
        %692 = vmatpush1.bf16.msra.mxu0 0
        %693 = vmatprep.subr.bf16.mxu0 0
        %694 = vmatpush1.bf16.msra.mxu0 0
        %695 = vmatprep.subr.bf16.mxu0 0
        %696 = vmatpush1.bf16.msra.mxu0 0
        %697 = vmatprep.subr.bf16.mxu0 0
        %698 = vmatpush1.bf16.msra.mxu0 0
        %699 = vmatprep.subr.bf16.mxu0 0
        %700 = vmatpush1.bf16.msra.mxu0 0
        %701 = vmatprep.subr.bf16.mxu0 0
        %702 = vmatpush1.bf16.msra.mxu0 0
        %703 = vmatprep.subr.bf16.mxu0 0
        %704 = vmatpush1.bf16.msra.mxu0 0
        %705 = vmatprep.subr.bf16.mxu0 0
        %706 = vmatpush1.bf16.msra.mxu0 0
        %707 = vmatprep.subr.bf16.mxu0 0
        %708 = vmatpush1.bf16.msra.mxu0 0
        %709 = vmatprep.subr.bf16.mxu0 0
        %710 = vmatpush1.bf16.msra.mxu0 0
        %711 = vmatprep.subr.bf16.mxu0 0
        %712 = vmatpush1.bf16.msra.mxu0 0
        %713 = vmatprep.subr.bf16.mxu0 0
        %714 = vmatpush1.bf16.msra.mxu0 0
        %715 = vmatprep.subr.bf16.mxu0 0
        %716 = vmatpush1.bf16.msra.mxu0 0
        %717 = vmatprep.mubr.bf16.mxu0 0
        %718 = vmatmul.mubr.bf16.gmra.mrb[0].mxu0 %v574
        %v719 = vpop.f32.mrb[0].mxu0
        %v720 = vadd.f32 %v465, %v719
        %v721 = vpop.f32.mrb[0].mxu0
        %v722 = vadd.f32 %v465, %v721
        %v723 = vpop.f32.mrb[0].mxu0
        %v724 = vadd.f32 %v470, %v723
        %v725 = vpop.f32.mrb[0].mxu0
        %v726 = vadd.f32 %v470, %v725
        %727 = vmatprep.mubr.bf16.mxu0 0
        %728 = vmatmul.mubr.bf16.gmra.mrb[0].mxu0 %v577
        %v729 = vpop.f32.mrb[0].mxu0
        %v730 = vadd.f32 %v475, %v729
        %v731 = vpop.f32.mrb[0].mxu0
        %v732 = vadd.f32 %v475, %v731
        %v733 = vpop.f32.mrb[0].mxu0
        %v734 = vadd.f32 %v480, %v733
        %v735 = vpop.f32.mrb[0].mxu0
        %v736 = vadd.f32 %v480, %v735
        %737 = vdwg.mxu0
        %738 = vmatprep.subr.bf16.mxu0 %v547
        %739 = vmatpush1.bf16.msra.mxu0 %v546
        %740 = vmatprep.subr.bf16.mxu0 0
        %741 = vmatpush1.bf16.msra.mxu0 0
        %742 = vmatprep.subr.bf16.mxu0 0
        %743 = vmatpush1.bf16.msra.mxu0 0
        %744 = vmatprep.subr.bf16.mxu0 0
        %745 = vmatpush1.bf16.msra.mxu0 0
        %746 = vmatprep.subr.bf16.mxu0 0
        %747 = vmatpush1.bf16.msra.mxu0 0
        %748 = vmatprep.subr.bf16.mxu0 0
        %749 = vmatpush1.bf16.msra.mxu0 0
        %750 = vmatprep.subr.bf16.mxu0 0
        %751 = vmatpush1.bf16.msra.mxu0 0
        %752 = vmatprep.subr.bf16.mxu0 0
        %753 = vmatpush1.bf16.msra.mxu0 0
        %754 = vmatprep.subr.bf16.mxu0 0
        %755 = vmatpush1.bf16.msra.mxu0 0
        %756 = vmatprep.subr.bf16.mxu0 0
        %757 = vmatpush1.bf16.msra.mxu0 0
        %758 = vmatprep.subr.bf16.mxu0 0
        %759 = vmatpush1.bf16.msra.mxu0 0
        %760 = vmatprep.subr.bf16.mxu0 0
        %761 = vmatpush1.bf16.msra.mxu0 0
        %762 = vmatprep.subr.bf16.mxu0 0
        %763 = vmatpush1.bf16.msra.mxu0 0
        %764 = vmatprep.subr.bf16.mxu0 0
        %765 = vmatpush1.bf16.msra.mxu0 0
        %766 = vmatprep.subr.bf16.mxu0 0
        %767 = vmatpush1.bf16.msra.mxu0 0
        %768 = vmatprep.subr.bf16.mxu0 0
        %769 = vmatpush1.bf16.msra.mxu0 0
        %770 = vmatprep.mubr.bf16.mxu0 0
        %771 = vmatmul.mubr.bf16.gmra.mrb[0].mxu0 %v574
        %v772 = vpop.f32.mrb[0].mxu0
        %v773 = vadd.f32 %v465, %v772
        %v774 = vpop.f32.mrb[0].mxu0
        %v775 = vadd.f32 %v465, %v774
        %v776 = vpop.f32.mrb[0].mxu0
        %v777 = vadd.f32 %v470, %v776
        %v778 = vpop.f32.mrb[0].mxu0
        %v779 = vadd.f32 %v470, %v778
        %780 = vmatprep.mubr.bf16.mxu0 0
        %781 = vmatmul.mubr.bf16.gmra.mrb[0].mxu0 %v577
        %v782 = vpop.f32.mrb[0].mxu0
        %v783 = vadd.f32 %v475, %v782
        %v784 = vpop.f32.mrb[0].mxu0
        %v785 = vadd.f32 %v475, %v784
        %v786 = vpop.f32.mrb[0].mxu0
        %v787 = vadd.f32 %v480, %v786
        %v788 = vpop.f32.mrb[0].mxu0
        %v789 = vadd.f32 %v480, %v788
        %790 = vdwg.mxu0
        %791 = vmatprep.subr.bf16.mxu0 %v549
        %792 = vmatpush1.bf16.msra.mxu0 %v548
        %793 = vmatprep.subr.bf16.mxu0 0
        %794 = vmatpush1.bf16.msra.mxu0 0
        %795 = vmatprep.subr.bf16.mxu0 0
        %796 = vmatpush1.bf16.msra.mxu0 0
        %797 = vmatprep.subr.bf16.mxu0 0
        %798 = vmatpush1.bf16.msra.mxu0 0
        %799 = vmatprep.subr.bf16.mxu0 0
        %800 = vmatpush1.bf16.msra.mxu0 0
        %801 = vmatprep.subr.bf16.mxu0 0
        %802 = vmatpush1.bf16.msra.mxu0 0
        %803 = vmatprep.subr.bf16.mxu0 0
        %804 = vmatpush1.bf16.msra.mxu0 0
        %805 = vmatprep.subr.bf16.mxu0 0
        %806 = vmatpush1.bf16.msra.mxu0 0
        %807 = vmatprep.subr.bf16.mxu0 0
        %808 = vmatpush1.bf16.msra.mxu0 0
        %809 = vmatprep.subr.bf16.mxu0 0
        %810 = vmatpush1.bf16.msra.mxu0 0
        %811 = vmatprep.subr.bf16.mxu0 0
        %812 = vmatpush1.bf16.msra.mxu0 0
        %813 = vmatprep.subr.bf16.mxu0 0
        %814 = vmatpush1.bf16.msra.mxu0 0
        %815 = vmatprep.subr.bf16.mxu0 0
        %816 = vmatpush1.bf16.msra.mxu0 0
        %817 = vmatprep.subr.bf16.mxu0 0
        %818 = vmatpush1.bf16.msra.mxu0 0
        %819 = vmatprep.subr.bf16.mxu0 0
        %820 = vmatpush1.bf16.msra.mxu0 0
        %821 = vmatprep.subr.bf16.mxu0 0
        %822 = vmatpush1.bf16.msra.mxu0 0
        %823 = vmatprep.mubr.bf16.mxu0 0
        %824 = vmatmul.mubr.bf16.gmra.mrb[0].mxu0 %v574
        %v825 = vpop.f32.mrb[0].mxu0
        %v826 = vadd.f32 %v465, %v825
        %v827 = vpop.f32.mrb[0].mxu0
        %v828 = vadd.f32 %v465, %v827
        %v829 = vpop.f32.mrb[0].mxu0
        %v830 = vadd.f32 %v470, %v829
        %v831 = vpop.f32.mrb[0].mxu0
        %v832 = vadd.f32 %v470, %v831
        %833 = vmatprep.mubr.bf16.mxu0 0
        %834 = vmatmul.mubr.bf16.gmra.mrb[0].mxu0 %v577
        %v835 = vpop.f32.mrb[0].mxu0
        %v836 = vadd.f32 %v475, %v835
        %v837 = vpop.f32.mrb[0].mxu0
        %v838 = vadd.f32 %v475, %v837
        %v839 = vpop.f32.mrb[0].mxu0
        %v840 = vadd.f32 %v480, %v839
        %v841 = vpop.f32.mrb[0].mxu0
        %v842 = vadd.f32 %v480, %v841
        %843 = vdwg.mxu0
        %844 = vmatprep.subr.bf16.mxu0 %v551
        %845 = vmatpush1.bf16.msra.mxu0 %v550
        %846 = vmatprep.subr.bf16.mxu0 0
        %847 = vmatpush1.bf16.msra.mxu0 0
        %848 = vmatprep.subr.bf16.mxu0 0
        %849 = vmatpush1.bf16.msra.mxu0 0
        %850 = vmatprep.subr.bf16.mxu0 0
        %851 = vmatpush1.bf16.msra.mxu0 0
        %852 = vmatprep.subr.bf16.mxu0 0
        %853 = vmatpush1.bf16.msra.mxu0 0
        %854 = vmatprep.subr.bf16.mxu0 0
        %855 = vmatpush1.bf16.msra.mxu0 0
        %856 = vmatprep.subr.bf16.mxu0 0
        %857 = vmatpush1.bf16.msra.mxu0 0
        %858 = vmatprep.subr.bf16.mxu0 0
        %859 = vmatpush1.bf16.msra.mxu0 0
        %860 = vmatprep.subr.bf16.mxu0 0
        %861 = vmatpush1.bf16.msra.mxu0 0
        %862 = vmatprep.subr.bf16.mxu0 0
        %863 = vmatpush1.bf16.msra.mxu0 0
        %864 = vmatprep.subr.bf16.mxu0 0
        %865 = vmatpush1.bf16.msra.mxu0 0
        %866 = vmatprep.subr.bf16.mxu0 0
        %867 = vmatpush1.bf16.msra.mxu0 0
        %868 = vmatprep.subr.bf16.mxu0 0
        %869 = vmatpush1.bf16.msra.mxu0 0
        %870 = vmatprep.subr.bf16.mxu0 0
        %871 = vmatpush1.bf16.msra.mxu0 0
        %872 = vmatprep.subr.bf16.mxu0 0
        %873 = vmatpush1.bf16.msra.mxu0 0
        %874 = vmatprep.subr.bf16.mxu0 0
        %875 = vmatpush1.bf16.msra.mxu0 0
        %876 = vmatprep.mubr.bf16.mxu0 0
        %877 = vmatmul.mubr.bf16.gmra.mrb[0].mxu0 %v574
        %v878 = vpop.f32.mrb[0].mxu0
        %v879 = vadd.f32 %v465, %v878
        %v880 = vpop.f32.mrb[0].mxu0
        %v881 = vadd.f32 %v465, %v880
        %v882 = vpop.f32.mrb[0].mxu0
        %v883 = vadd.f32 %v470, %v882
        %v884 = vpop.f32.mrb[0].mxu0
        %v885 = vadd.f32 %v470, %v884
        %886 = vmatprep.mubr.bf16.mxu0 0
        %887 = vmatmul.mubr.bf16.gmra.mrb[0].mxu0 %v577
        %v888 = vpop.f32.mrb[0].mxu0
        %v889 = vadd.f32 %v475, %v888
        %v890 = vpop.f32.mrb[0].mxu0
        %v891 = vadd.f32 %v475, %v890
        %v892 = vpop.f32.mrb[0].mxu0
        %v893 = vadd.f32 %v480, %v892
        %v894 = vpop.f32.mrb[0].mxu0
        %v895 = vadd.f32 %v480, %v894
        %896 = vdwg.mxu0
        %897 = vmatprep.subr.bf16.mxu0 %v553
        %898 = vmatpush1.bf16.msra.mxu0 %v552
        %899 = vmatprep.subr.bf16.mxu0 0
        %900 = vmatpush1.bf16.msra.mxu0 0
        %901 = vmatprep.subr.bf16.mxu0 0
        %902 = vmatpush1.bf16.msra.mxu0 0
        %903 = vmatprep.subr.bf16.mxu0 0
        %904 = vmatpush1.bf16.msra.mxu0 0
        %905 = vmatprep.subr.bf16.mxu0 0
        %906 = vmatpush1.bf16.msra.mxu0 0
        %907 = vmatprep.subr.bf16.mxu0 0
        %908 = vmatpush1.bf16.msra.mxu0 0
        %909 = vmatprep.subr.bf16.mxu0 0
        %910 = vmatpush1.bf16.msra.mxu0 0
        %911 = vmatprep.subr.bf16.mxu0 0
        %912 = vmatpush1.bf16.msra.mxu0 0
        %913 = vmatprep.subr.bf16.mxu0 0
        %914 = vmatpush1.bf16.msra.mxu0 0
        %915 = vmatprep.subr.bf16.mxu0 0
        %916 = vmatpush1.bf16.msra.mxu0 0
        %917 = vmatprep.subr.bf16.mxu0 0
        %918 = vmatpush1.bf16.msra.mxu0 0
        %919 = vmatprep.subr.bf16.mxu0 0
        %920 = vmatpush1.bf16.msra.mxu0 0
        %921 = vmatprep.subr.bf16.mxu0 0
        %922 = vmatpush1.bf16.msra.mxu0 0
        %923 = vmatprep.subr.bf16.mxu0 0
        %924 = vmatpush1.bf16.msra.mxu0 0
        %925 = vmatprep.subr.bf16.mxu0 0
        %926 = vmatpush1.bf16.msra.mxu0 0
        %927 = vmatprep.subr.bf16.mxu0 0
        %928 = vmatpush1.bf16.msra.mxu0 0
        %929 = vmatprep.mubr.bf16.mxu0 0
        %930 = vmatmul.mubr.bf16.gmra.mrb[0].mxu0 %v574
        %v931 = vpop.f32.mrb[0].mxu0
        %v932 = vadd.f32 %v465, %v931
        %v933 = vpop.f32.mrb[0].mxu0
        %v934 = vadd.f32 %v465, %v933
        %v935 = vpop.f32.mrb[0].mxu0
        %v936 = vadd.f32 %v470, %v935
        %v937 = vpop.f32.mrb[0].mxu0
        %v938 = vadd.f32 %v470, %v937
        %939 = vmatprep.mubr.bf16.mxu0 0
        %940 = vmatmul.mubr.bf16.gmra.mrb[0].mxu0 %v577
        %v941 = vpop.f32.mrb[0].mxu0
        %v942 = vadd.f32 %v475, %v941
        %v943 = vpop.f32.mrb[0].mxu0
        %v944 = vadd.f32 %v475, %v943
        %v945 = vpop.f32.mrb[0].mxu0
        %v946 = vadd.f32 %v480, %v945
        %v947 = vpop.f32.mrb[0].mxu0
        %v948 = vadd.f32 %v480, %v947
        %949 = vdwg.mxu0
        %950 = vmatprep.subr.bf16.mxu0 %v555
        %951 = vmatpush1.bf16.msra.mxu0 %v554
        %952 = vmatprep.subr.bf16.mxu0 0
        %953 = vmatpush1.bf16.msra.mxu0 0
        %954 = vmatprep.subr.bf16.mxu0 0
        %955 = vmatpush1.bf16.msra.mxu0 0
        %956 = vmatprep.subr.bf16.mxu0 0
        %957 = vmatpush1.bf16.msra.mxu0 0
        %958 = vmatprep.subr.bf16.mxu0 0
        %959 = vmatpush1.bf16.msra.mxu0 0
        %960 = vmatprep.subr.bf16.mxu0 0
        %961 = vmatpush1.bf16.msra.mxu0 0
        %962 = vmatprep.subr.bf16.mxu0 0
        %963 = vmatpush1.bf16.msra.mxu0 0
        %964 = vmatprep.subr.bf16.mxu0 0
        %965 = vmatpush1.bf16.msra.mxu0 0
        %966 = vmatprep.subr.bf16.mxu0 0
        %967 = vmatpush1.bf16.msra.mxu0 0
        %968 = vmatprep.subr.bf16.mxu0 0
        %969 = vmatpush1.bf16.msra.mxu0 0
        %970 = vmatprep.subr.bf16.mxu0 0
        %971 = vmatpush1.bf16.msra.mxu0 0
        %972 = vmatprep.subr.bf16.mxu0 0
        %973 = vmatpush1.bf16.msra.mxu0 0
        %974 = vmatprep.subr.bf16.mxu0 0
        %975 = vmatpush1.bf16.msra.mxu0 0
        %976 = vmatprep.subr.bf16.mxu0 0
        %977 = vmatpush1.bf16.msra.mxu0 0
        %978 = vmatprep.subr.bf16.mxu0 0
        %979 = vmatpush1.bf16.msra.mxu0 0
        %980 = vmatprep.subr.bf16.mxu0 0
        %981 = vmatpush1.bf16.msra.mxu0 0
        %982 = vmatprep.mubr.bf16.mxu0 0
        %983 = vmatmul.mubr.bf16.gmra.mrb[0].mxu0 %v574
        %v984 = vpop.f32.mrb[0].mxu0
        %v985 = vadd.f32 %v465, %v984
        %v986 = vpop.f32.mrb[0].mxu0
        %v987 = vadd.f32 %v465, %v986
        %v988 = vpop.f32.mrb[0].mxu0
        %v989 = vadd.f32 %v470, %v988
        %v990 = vpop.f32.mrb[0].mxu0
        %v991 = vadd.f32 %v470, %v990
        %992 = vmatprep.mubr.bf16.mxu0 0
        %993 = vmatmul.mubr.bf16.gmra.mrb[0].mxu0 %v577
        %v994 = vpop.f32.mrb[0].mxu0
        %v995 = vadd.f32 %v475, %v994
        %v996 = vpop.f32.mrb[0].mxu0
        %v997 = vadd.f32 %v475, %v996
        %v998 = vpop.f32.mrb[0].mxu0
        %v999 = vadd.f32 %v480, %v998
        %v1000 = vpop.f32.mrb[0].mxu0
        %v1001 = vadd.f32 %v480, %v1000
        %1002 = vdwg.mxu0
        %v1003 = vmax.f32 %v614, 0.0
        %v1004 = vmax.f32 %v616, 0.0
        %v1005 = vmax.f32 %v667, 0.0
        %v1006 = vmax.f32 %v669, 0.0
        %v1007 = vmax.f32 %v720, 0.0
        %v1008 = vmax.f32 %v722, 0.0
        %v1009 = vmax.f32 %v773, 0.0
        %v1010 = vmax.f32 %v775, 0.0
        %v1011 = vmax.f32 %v826, 0.0
        %v1012 = vmax.f32 %v828, 0.0
        %v1013 = vmax.f32 %v879, 0.0
        %v1014 = vmax.f32 %v881, 0.0
        %v1015 = vmax.f32 %v932, 0.0
        %v1016 = vmax.f32 %v934, 0.0
        %v1017 = vmax.f32 %v985, 0.0
        %v1018 = vmax.f32 %v987, 0.0
        %v1019 = vmax.f32 %v618, 0.0
        %v1020 = vmax.f32 %v620, 0.0
        %v1021 = vmax.f32 %v671, 0.0
        %v1022 = vmax.f32 %v673, 0.0
        %v1023 = vmax.f32 %v724, 0.0
        %v1024 = vmax.f32 %v726, 0.0
        %v1025 = vmax.f32 %v777, 0.0
        %v1026 = vmax.f32 %v779, 0.0
        %v1027 = vmax.f32 %v830, 0.0
        %v1028 = vmax.f32 %v832, 0.0
        %v1029 = vmax.f32 %v883, 0.0
        %v1030 = vmax.f32 %v885, 0.0
        %v1031 = vmax.f32 %v936, 0.0
        %v1032 = vmax.f32 %v938, 0.0
        %v1033 = vmax.f32 %v989, 0.0
        %v1034 = vmax.f32 %v991, 0.0
        %v1035 = vmax.f32 %v624, 0.0
        %v1036 = vmax.f32 %v626, 0.0
        %v1037 = vmax.f32 %v677, 0.0
        %v1038 = vmax.f32 %v679, 0.0
        %v1039 = vmax.f32 %v730, 0.0
        %v1040 = vmax.f32 %v732, 0.0
        %v1041 = vmax.f32 %v783, 0.0
        %v1042 = vmax.f32 %v785, 0.0
        %v1043 = vmax.f32 %v836, 0.0
        %v1044 = vmax.f32 %v838, 0.0
        %v1045 = vmax.f32 %v889, 0.0
        %v1046 = vmax.f32 %v891, 0.0
        %v1047 = vmax.f32 %v942, 0.0
        %v1048 = vmax.f32 %v944, 0.0
        %v1049 = vmax.f32 %v995, 0.0
        %v1050 = vmax.f32 %v997, 0.0
        %v1051 = vmax.f32 %v628, 0.0
        %v1052 = vmax.f32 %v630, 0.0
        %v1053 = vmax.f32 %v681, 0.0
        %v1054 = vmax.f32 %v683, 0.0
        %v1055 = vmax.f32 %v734, 0.0
        %v1056 = vmax.f32 %v736, 0.0
        %v1057 = vmax.f32 %v787, 0.0
        %v1058 = vmax.f32 %v789, 0.0
        %v1059 = vmax.f32 %v840, 0.0
        %v1060 = vmax.f32 %v842, 0.0
        %v1061 = vmax.f32 %v893, 0.0
        %v1062 = vmax.f32 %v895, 0.0
        %v1063 = vmax.f32 %v946, 0.0
        %v1064 = vmax.f32 %v948, 0.0
        %v1065 = vmax.f32 %v999, 0.0
        %v1066 = vmax.f32 %v1001, 0.0
        %v1067 = vld [vmem:[%s3] sm:$0xf]
        %v1068 = vld [vmem:[%s3 + $0x4] sm:$0xf]
        %v1069 = vld [vmem:[%s3 + $0x8] sm:$0xf]
        %v1070 = vld [vmem:[%s3 + $0xc] sm:$0xf]
        %v1071 = vpack.c.bf16 %v1019, %v1003
        %v1072 = vpack.c.bf16 %v1020, %v1004
        %v1073 = vpack.c.bf16 %v1021, %v1005
        %v1074 = vpack.c.bf16 %v1022, %v1006
        %v1075 = vpack.c.bf16 %v1023, %v1007
        %v1076 = vpack.c.bf16 %v1024, %v1008
        %v1077 = vpack.c.bf16 %v1025, %v1009
        %v1078 = vpack.c.bf16 %v1026, %v1010
        %v1079 = vpack.c.bf16 %v1027, %v1011
        %v1080 = vpack.c.bf16 %v1028, %v1012
        %v1081 = vpack.c.bf16 %v1029, %v1013
        %v1082 = vpack.c.bf16 %v1030, %v1014
        %v1083 = vpack.c.bf16 %v1031, %v1015
        %v1084 = vpack.c.bf16 %v1032, %v1016
        %v1085 = vpack.c.bf16 %v1033, %v1017
        %v1086 = vpack.c.bf16 %v1034, %v1018
        %v1087 = vpack.c.bf16 %v1051, %v1035
        %v1088 = vpack.c.bf16 %v1052, %v1036
        %v1089 = vpack.c.bf16 %v1053, %v1037
        %v1090 = vpack.c.bf16 %v1054, %v1038
        %v1091 = vpack.c.bf16 %v1055, %v1039
        %v1092 = vpack.c.bf16 %v1056, %v1040
        %v1093 = vpack.c.bf16 %v1057, %v1041
        %v1094 = vpack.c.bf16 %v1058, %v1042
        %v1095 = vpack.c.bf16 %v1059, %v1043
        %v1096 = vpack.c.bf16 %v1060, %v1044
        %v1097 = vpack.c.bf16 %v1061, %v1045
        %v1098 = vpack.c.bf16 %v1062, %v1046
        %v1099 = vpack.c.bf16 %v1063, %v1047
        %v1100 = vpack.c.bf16 %v1064, %v1048
        %v1101 = vpack.c.bf16 %v1065, %v1049
        %v1102 = vpack.c.bf16 %v1066, %v1050
        %v1103 = vld [vmem:[%s4] sm:$0xff]
        %v1104 = vld [vmem:[%s4 + $0x8] sm:$0xff]
        %v1105 = vld [vmem:[%s4 + $0x10] sm:$0xff]
        %v1106 = vld [vmem:[%s4 + $0x18] sm:$0xff]
        %1108 = vset.pattern.permute.xlu0 0
        %1109 = vperm.xlu0 %1108, %v1103
        %v1110 = vpop.permute.xlu0 %1109
        %1113 = vset.pattern.permute.xlu0 0
        %1114 = vperm.xlu0 %1113, %v1104
        %v1115 = vpop.permute.xlu0 %1114
        %1118 = vset.pattern.permute.xlu0 0
        %1119 = vperm.xlu0 %1118, %v1105
        %v1120 = vpop.permute.xlu0 %1119
        %1123 = vset.pattern.permute.xlu0 0
        %1124 = vperm.xlu0 %1123, %v1106
        %v1125 = vpop.permute.xlu0 %1124
        %v1131 = vunpack.c.l.b16 %v1067
        %v1132 = vunpack.c.l.b16 %v1068
        %v1133 = vunpack.c.l.b16 %v1069
        %v1134 = vunpack.c.l.b16 %v1070
        %v1135 = vpack.c.b16 %v1132, %v1131
        %v1136 = vpack.c.b16 %v1134, %v1133
        %vm1137 = vcmask 261120
        %v1139 = vsel %vm1137, %v1135, 0
        %v1142 = vsel %vm1137, %v1136, 0
        %1144 = vmatprep.subr.bf16.mxu0 %v1072
        %1145 = vmatpush1.bf16.msra.mxu0 %v1071
        %1146 = vmatprep.subr.bf16.mxu0 %v1088
        %1147 = vmatpush1.bf16.msra.mxu0 %v1087
        %1148 = vmatprep.subr.bf16.mxu0 0
        %1149 = vmatpush1.bf16.msra.mxu0 0
        %1150 = vmatprep.subr.bf16.mxu0 0
        %1151 = vmatpush1.bf16.msra.mxu0 0
        %1152 = vmatprep.subr.bf16.mxu0 0
        %1153 = vmatpush1.bf16.msra.mxu0 0
        %1154 = vmatprep.subr.bf16.mxu0 0
        %1155 = vmatpush1.bf16.msra.mxu0 0
        %1156 = vmatprep.subr.bf16.mxu0 0
        %1157 = vmatpush1.bf16.msra.mxu0 0
        %1158 = vmatprep.subr.bf16.mxu0 0
        %1159 = vmatpush1.bf16.msra.mxu0 0
        %1160 = vmatprep.subr.bf16.mxu0 0
        %1161 = vmatpush1.bf16.msra.mxu0 0
        %1162 = vmatprep.subr.bf16.mxu0 0
        %1163 = vmatpush1.bf16.msra.mxu0 0
        %1164 = vmatprep.subr.bf16.mxu0 0
        %1165 = vmatpush1.bf16.msra.mxu0 0
        %1166 = vmatprep.subr.bf16.mxu0 0
        %1167 = vmatpush1.bf16.msra.mxu0 0
        %1168 = vmatprep.subr.bf16.mxu0 0
        %1169 = vmatpush1.bf16.msra.mxu0 0
        %1170 = vmatprep.subr.bf16.mxu0 0
        %1171 = vmatpush1.bf16.msra.mxu0 0
        %1172 = vmatprep.subr.bf16.mxu0 0
        %1173 = vmatpush1.bf16.msra.mxu0 0
        %1174 = vmatprep.subr.bf16.mxu0 0
        %1175 = vmatpush1.bf16.msra.mxu0 0
        %1176 = vmatprep.mubr.bf16.mxu0 0
        %1177 = vmatmul.mubr.bf16.gmra.mrb[0].mxu0 %v1139
        %v1178 = vpop.f32.mrb[0].mxu0
        %v1179 = vadd.f32 %v1110, %v1178
        %v1180 = vpop.f32.mrb[0].mxu0
        %v1181 = vadd.f32 %v1110, %v1180
        %v1182 = vpop.f32.mrb[0].mxu0
        %v1183 = vadd.f32 %v1115, %v1182
        %v1184 = vpop.f32.mrb[0].mxu0
        %v1185 = vadd.f32 %v1115, %v1184
        %1186 = vmatprep.mubr.bf16.mxu0 0
        %1187 = vmatmul.mubr.bf16.gmra.mrb[0].mxu0 %v1142
        %v1188 = vpop.f32.mrb[0].mxu0
        %v1189 = vadd.f32 %v1120, %v1188
        %v1190 = vpop.f32.mrb[0].mxu0
        %v1191 = vadd.f32 %v1120, %v1190
        %v1192 = vpop.f32.mrb[0].mxu0
        %v1193 = vadd.f32 %v1125, %v1192
        %v1194 = vpop.f32.mrb[0].mxu0
        %v1195 = vadd.f32 %v1125, %v1194
        %1196 = vdwg.mxu0
        %1197 = vmatprep.subr.bf16.mxu0 %v1074
        %1198 = vmatpush1.bf16.msra.mxu0 %v1073
        %1199 = vmatprep.subr.bf16.mxu0 %v1090
        %1200 = vmatpush1.bf16.msra.mxu0 %v1089
        %1201 = vmatprep.subr.bf16.mxu0 0
        %1202 = vmatpush1.bf16.msra.mxu0 0
        %1203 = vmatprep.subr.bf16.mxu0 0
        %1204 = vmatpush1.bf16.msra.mxu0 0
        %1205 = vmatprep.subr.bf16.mxu0 0
        %1206 = vmatpush1.bf16.msra.mxu0 0
        %1207 = vmatprep.subr.bf16.mxu0 0
        %1208 = vmatpush1.bf16.msra.mxu0 0
        %1209 = vmatprep.subr.bf16.mxu0 0
        %1210 = vmatpush1.bf16.msra.mxu0 0
        %1211 = vmatprep.subr.bf16.mxu0 0
        %1212 = vmatpush1.bf16.msra.mxu0 0
        %1213 = vmatprep.subr.bf16.mxu0 0
        %1214 = vmatpush1.bf16.msra.mxu0 0
        %1215 = vmatprep.subr.bf16.mxu0 0
        %1216 = vmatpush1.bf16.msra.mxu0 0
        %1217 = vmatprep.subr.bf16.mxu0 0
        %1218 = vmatpush1.bf16.msra.mxu0 0
        %1219 = vmatprep.subr.bf16.mxu0 0
        %1220 = vmatpush1.bf16.msra.mxu0 0
        %1221 = vmatprep.subr.bf16.mxu0 0
        %1222 = vmatpush1.bf16.msra.mxu0 0
        %1223 = vmatprep.subr.bf16.mxu0 0
        %1224 = vmatpush1.bf16.msra.mxu0 0
        %1225 = vmatprep.subr.bf16.mxu0 0
        %1226 = vmatpush1.bf16.msra.mxu0 0
        %1227 = vmatprep.subr.bf16.mxu0 0
        %1228 = vmatpush1.bf16.msra.mxu0 0
        %1229 = vmatprep.mubr.bf16.mxu0 0
        %1230 = vmatmul.mubr.bf16.gmra.mrb[0].mxu0 %v1139
        %v1231 = vpop.f32.mrb[0].mxu0
        %v1232 = vadd.f32 %v1110, %v1231
        %v1233 = vpop.f32.mrb[0].mxu0
        %v1234 = vadd.f32 %v1110, %v1233
        %v1235 = vpop.f32.mrb[0].mxu0
        %v1236 = vadd.f32 %v1115, %v1235
        %v1237 = vpop.f32.mrb[0].mxu0
        %v1238 = vadd.f32 %v1115, %v1237
        %1239 = vmatprep.mubr.bf16.mxu0 0
        %1240 = vmatmul.mubr.bf16.gmra.mrb[0].mxu0 %v1142
        %v1241 = vpop.f32.mrb[0].mxu0
        %v1242 = vadd.f32 %v1120, %v1241
        %v1243 = vpop.f32.mrb[0].mxu0
        %v1244 = vadd.f32 %v1120, %v1243
        %v1245 = vpop.f32.mrb[0].mxu0
        %v1246 = vadd.f32 %v1125, %v1245
        %v1247 = vpop.f32.mrb[0].mxu0
        %v1248 = vadd.f32 %v1125, %v1247
        %1249 = vdwg.mxu0
        %1250 = vmatprep.subr.bf16.mxu0 %v1076
        %1251 = vmatpush1.bf16.msra.mxu0 %v1075
        %1252 = vmatprep.subr.bf16.mxu0 %v1092
        %1253 = vmatpush1.bf16.msra.mxu0 %v1091
        %1254 = vmatprep.subr.bf16.mxu0 0
        %1255 = vmatpush1.bf16.msra.mxu0 0
        %1256 = vmatprep.subr.bf16.mxu0 0
        %1257 = vmatpush1.bf16.msra.mxu0 0
        %1258 = vmatprep.subr.bf16.mxu0 0
        %1259 = vmatpush1.bf16.msra.mxu0 0
        %1260 = vmatprep.subr.bf16.mxu0 0
        %1261 = vmatpush1.bf16.msra.mxu0 0
        %1262 = vmatprep.subr.bf16.mxu0 0
        %1263 = vmatpush1.bf16.msra.mxu0 0
        %1264 = vmatprep.subr.bf16.mxu0 0
        %1265 = vmatpush1.bf16.msra.mxu0 0
        %1266 = vmatprep.subr.bf16.mxu0 0
        %1267 = vmatpush1.bf16.msra.mxu0 0
        %1268 = vmatprep.subr.bf16.mxu0 0
        %1269 = vmatpush1.bf16.msra.mxu0 0
        %1270 = vmatprep.subr.bf16.mxu0 0
        %1271 = vmatpush1.bf16.msra.mxu0 0
        %1272 = vmatprep.subr.bf16.mxu0 0
        %1273 = vmatpush1.bf16.msra.mxu0 0
        %1274 = vmatprep.subr.bf16.mxu0 0
        %1275 = vmatpush1.bf16.msra.mxu0 0
        %1276 = vmatprep.subr.bf16.mxu0 0
        %1277 = vmatpush1.bf16.msra.mxu0 0
        %1278 = vmatprep.subr.bf16.mxu0 0
        %1279 = vmatpush1.bf16.msra.mxu0 0
        %1280 = vmatprep.subr.bf16.mxu0 0
        %1281 = vmatpush1.bf16.msra.mxu0 0
        %1282 = vmatprep.mubr.bf16.mxu0 0
        %1283 = vmatmul.mubr.bf16.gmra.mrb[0].mxu0 %v1139
        %v1284 = vpop.f32.mrb[0].mxu0
        %v1285 = vadd.f32 %v1110, %v1284
        %v1286 = vpop.f32.mrb[0].mxu0
        %v1287 = vadd.f32 %v1110, %v1286
        %v1288 = vpop.f32.mrb[0].mxu0
        %v1289 = vadd.f32 %v1115, %v1288
        %v1290 = vpop.f32.mrb[0].mxu0
        %v1291 = vadd.f32 %v1115, %v1290
        %1292 = vmatprep.mubr.bf16.mxu0 0
        %1293 = vmatmul.mubr.bf16.gmra.mrb[0].mxu0 %v1142
        %v1294 = vpop.f32.mrb[0].mxu0
        %v1295 = vadd.f32 %v1120, %v1294
        %v1296 = vpop.f32.mrb[0].mxu0
        %v1297 = vadd.f32 %v1120, %v1296
        %v1298 = vpop.f32.mrb[0].mxu0
        %v1299 = vadd.f32 %v1125, %v1298
        %v1300 = vpop.f32.mrb[0].mxu0
        %v1301 = vadd.f32 %v1125, %v1300
        %1302 = vdwg.mxu0
        %1303 = vmatprep.subr.bf16.mxu0 %v1078
        %1304 = vmatpush1.bf16.msra.mxu0 %v1077
        %1305 = vmatprep.subr.bf16.mxu0 %v1094
        %1306 = vmatpush1.bf16.msra.mxu0 %v1093
        %1307 = vmatprep.subr.bf16.mxu0 0
        %1308 = vmatpush1.bf16.msra.mxu0 0
        %1309 = vmatprep.subr.bf16.mxu0 0
        %1310 = vmatpush1.bf16.msra.mxu0 0
        %1311 = vmatprep.subr.bf16.mxu0 0
        %1312 = vmatpush1.bf16.msra.mxu0 0
        %1313 = vmatprep.subr.bf16.mxu0 0
        %1314 = vmatpush1.bf16.msra.mxu0 0
        %1315 = vmatprep.subr.bf16.mxu0 0
        %1316 = vmatpush1.bf16.msra.mxu0 0
        %1317 = vmatprep.subr.bf16.mxu0 0
        %1318 = vmatpush1.bf16.msra.mxu0 0
        %1319 = vmatprep.subr.bf16.mxu0 0
        %1320 = vmatpush1.bf16.msra.mxu0 0
        %1321 = vmatprep.subr.bf16.mxu0 0
        %1322 = vmatpush1.bf16.msra.mxu0 0
        %1323 = vmatprep.subr.bf16.mxu0 0
        %1324 = vmatpush1.bf16.msra.mxu0 0
        %1325 = vmatprep.subr.bf16.mxu0 0
        %1326 = vmatpush1.bf16.msra.mxu0 0
        %1327 = vmatprep.subr.bf16.mxu0 0
        %1328 = vmatpush1.bf16.msra.mxu0 0
        %1329 = vmatprep.subr.bf16.mxu0 0
        %1330 = vmatpush1.bf16.msra.mxu0 0
        %1331 = vmatprep.subr.bf16.mxu0 0
        %1332 = vmatpush1.bf16.msra.mxu0 0
        %1333 = vmatprep.subr.bf16.mxu0 0
        %1334 = vmatpush1.bf16.msra.mxu0 0
        %1335 = vmatprep.mubr.bf16.mxu0 0
        %1336 = vmatmul.mubr.bf16.gmra.mrb[0].mxu0 %v1139
        %v1337 = vpop.f32.mrb[0].mxu0
        %v1338 = vadd.f32 %v1110, %v1337
        %v1339 = vpop.f32.mrb[0].mxu0
        %v1340 = vadd.f32 %v1110, %v1339
        %v1341 = vpop.f32.mrb[0].mxu0
        %v1342 = vadd.f32 %v1115, %v1341
        %v1343 = vpop.f32.mrb[0].mxu0
        %v1344 = vadd.f32 %v1115, %v1343
        %1345 = vmatprep.mubr.bf16.mxu0 0
        %1346 = vmatmul.mubr.bf16.gmra.mrb[0].mxu0 %v1142
        %v1347 = vpop.f32.mrb[0].mxu0
        %v1348 = vadd.f32 %v1120, %v1347
        %v1349 = vpop.f32.mrb[0].mxu0
        %v1350 = vadd.f32 %v1120, %v1349
        %v1351 = vpop.f32.mrb[0].mxu0
        %v1352 = vadd.f32 %v1125, %v1351
        %v1353 = vpop.f32.mrb[0].mxu0
        %v1354 = vadd.f32 %v1125, %v1353
        %1355 = vdwg.mxu0
        %1356 = vmatprep.subr.bf16.mxu0 %v1080
        %1357 = vmatpush1.bf16.msra.mxu0 %v1079
        %1358 = vmatprep.subr.bf16.mxu0 %v1096
        %1359 = vmatpush1.bf16.msra.mxu0 %v1095
        %1360 = vmatprep.subr.bf16.mxu0 0
        %1361 = vmatpush1.bf16.msra.mxu0 0
        %1362 = vmatprep.subr.bf16.mxu0 0
        %1363 = vmatpush1.bf16.msra.mxu0 0
        %1364 = vmatprep.subr.bf16.mxu0 0
        %1365 = vmatpush1.bf16.msra.mxu0 0
        %1366 = vmatprep.subr.bf16.mxu0 0
        %1367 = vmatpush1.bf16.msra.mxu0 0
        %1368 = vmatprep.subr.bf16.mxu0 0
        %1369 = vmatpush1.bf16.msra.mxu0 0
        %1370 = vmatprep.subr.bf16.mxu0 0
        %1371 = vmatpush1.bf16.msra.mxu0 0
        %1372 = vmatprep.subr.bf16.mxu0 0
        %1373 = vmatpush1.bf16.msra.mxu0 0
        %1374 = vmatprep.subr.bf16.mxu0 0
        %1375 = vmatpush1.bf16.msra.mxu0 0
        %1376 = vmatprep.subr.bf16.mxu0 0
        %1377 = vmatpush1.bf16.msra.mxu0 0
        %1378 = vmatprep.subr.bf16.mxu0 0
        %1379 = vmatpush1.bf16.msra.mxu0 0
        %1380 = vmatprep.subr.bf16.mxu0 0
        %1381 = vmatpush1.bf16.msra.mxu0 0
        %1382 = vmatprep.subr.bf16.mxu0 0
        %1383 = vmatpush1.bf16.msra.mxu0 0
        %1384 = vmatprep.subr.bf16.mxu0 0
        %1385 = vmatpush1.bf16.msra.mxu0 0
        %1386 = vmatprep.subr.bf16.mxu0 0
        %1387 = vmatpush1.bf16.msra.mxu0 0
        %1388 = vmatprep.mubr.bf16.mxu0 0
        %1389 = vmatmul.mubr.bf16.gmra.mrb[0].mxu0 %v1139
        %v1390 = vpop.f32.mrb[0].mxu0
        %v1391 = vadd.f32 %v1110, %v1390
        %v1392 = vpop.f32.mrb[0].mxu0
        %v1393 = vadd.f32 %v1110, %v1392
        %v1394 = vpop.f32.mrb[0].mxu0
        %v1395 = vadd.f32 %v1115, %v1394
        %v1396 = vpop.f32.mrb[0].mxu0
        %v1397 = vadd.f32 %v1115, %v1396
        %1398 = vmatprep.mubr.bf16.mxu0 0
        %1399 = vmatmul.mubr.bf16.gmra.mrb[0].mxu0 %v1142
        %v1400 = vpop.f32.mrb[0].mxu0
        %v1401 = vadd.f32 %v1120, %v1400
        %v1402 = vpop.f32.mrb[0].mxu0
        %v1403 = vadd.f32 %v1120, %v1402
        %v1404 = vpop.f32.mrb[0].mxu0
        %v1405 = vadd.f32 %v1125, %v1404
        %v1406 = vpop.f32.mrb[0].mxu0
        %v1407 = vadd.f32 %v1125, %v1406
        %1408 = vdwg.mxu0
        %1409 = vmatprep.subr.bf16.mxu0 %v1082
        %1410 = vmatpush1.bf16.msra.mxu0 %v1081
        %1411 = vmatprep.subr.bf16.mxu0 %v1098
        %1412 = vmatpush1.bf16.msra.mxu0 %v1097
        %1413 = vmatprep.subr.bf16.mxu0 0
        %1414 = vmatpush1.bf16.msra.mxu0 0
        %1415 = vmatprep.subr.bf16.mxu0 0
        %1416 = vmatpush1.bf16.msra.mxu0 0
        %1417 = vmatprep.subr.bf16.mxu0 0
        %1418 = vmatpush1.bf16.msra.mxu0 0
        %1419 = vmatprep.subr.bf16.mxu0 0
        %1420 = vmatpush1.bf16.msra.mxu0 0
        %1421 = vmatprep.subr.bf16.mxu0 0
        %1422 = vmatpush1.bf16.msra.mxu0 0
        %1423 = vmatprep.subr.bf16.mxu0 0
        %1424 = vmatpush1.bf16.msra.mxu0 0
        %1425 = vmatprep.subr.bf16.mxu0 0
        %1426 = vmatpush1.bf16.msra.mxu0 0
        %1427 = vmatprep.subr.bf16.mxu0 0
        %1428 = vmatpush1.bf16.msra.mxu0 0
        %1429 = vmatprep.subr.bf16.mxu0 0
        %1430 = vmatpush1.bf16.msra.mxu0 0
        %1431 = vmatprep.subr.bf16.mxu0 0
        %1432 = vmatpush1.bf16.msra.mxu0 0
        %1433 = vmatprep.subr.bf16.mxu0 0
        %1434 = vmatpush1.bf16.msra.mxu0 0
        %1435 = vmatprep.subr.bf16.mxu0 0
        %1436 = vmatpush1.bf16.msra.mxu0 0
        %1437 = vmatprep.subr.bf16.mxu0 0
        %1438 = vmatpush1.bf16.msra.mxu0 0
        %1439 = vmatprep.subr.bf16.mxu0 0
        %1440 = vmatpush1.bf16.msra.mxu0 0
        %1441 = vmatprep.mubr.bf16.mxu0 0
        %1442 = vmatmul.mubr.bf16.gmra.mrb[0].mxu0 %v1139
        %v1443 = vpop.f32.mrb[0].mxu0
        %v1444 = vadd.f32 %v1110, %v1443
        %v1445 = vpop.f32.mrb[0].mxu0
        %v1446 = vadd.f32 %v1110, %v1445
        %v1447 = vpop.f32.mrb[0].mxu0
        %v1448 = vadd.f32 %v1115, %v1447
        %v1449 = vpop.f32.mrb[0].mxu0
        %v1450 = vadd.f32 %v1115, %v1449
        %1451 = vmatprep.mubr.bf16.mxu0 0
        %1452 = vmatmul.mubr.bf16.gmra.mrb[0].mxu0 %v1142
        %v1453 = vpop.f32.mrb[0].mxu0
        %v1454 = vadd.f32 %v1120, %v1453
        %v1455 = vpop.f32.mrb[0].mxu0
        %v1456 = vadd.f32 %v1120, %v1455
        %v1457 = vpop.f32.mrb[0].mxu0
        %v1458 = vadd.f32 %v1125, %v1457
        %v1459 = vpop.f32.mrb[0].mxu0
        %v1460 = vadd.f32 %v1125, %v1459
        %1461 = vdwg.mxu0
        %1462 = vmatprep.subr.bf16.mxu0 %v1084
        %1463 = vmatpush1.bf16.msra.mxu0 %v1083
        %1464 = vmatprep.subr.bf16.mxu0 %v1100
        %1465 = vmatpush1.bf16.msra.mxu0 %v1099
        %1466 = vmatprep.subr.bf16.mxu0 0
        %1467 = vmatpush1.bf16.msra.mxu0 0
        %1468 = vmatprep.subr.bf16.mxu0 0
        %1469 = vmatpush1.bf16.msra.mxu0 0
        %1470 = vmatprep.subr.bf16.mxu0 0
        %1471 = vmatpush1.bf16.msra.mxu0 0
        %1472 = vmatprep.subr.bf16.mxu0 0
        %1473 = vmatpush1.bf16.msra.mxu0 0
        %1474 = vmatprep.subr.bf16.mxu0 0
        %1475 = vmatpush1.bf16.msra.mxu0 0
        %1476 = vmatprep.subr.bf16.mxu0 0
        %1477 = vmatpush1.bf16.msra.mxu0 0
        %1478 = vmatprep.subr.bf16.mxu0 0
        %1479 = vmatpush1.bf16.msra.mxu0 0
        %1480 = vmatprep.subr.bf16.mxu0 0
        %1481 = vmatpush1.bf16.msra.mxu0 0
        %1482 = vmatprep.subr.bf16.mxu0 0
        %1483 = vmatpush1.bf16.msra.mxu0 0
        %1484 = vmatprep.subr.bf16.mxu0 0
        %1485 = vmatpush1.bf16.msra.mxu0 0
        %1486 = vmatprep.subr.bf16.mxu0 0
        %1487 = vmatpush1.bf16.msra.mxu0 0
        %1488 = vmatprep.subr.bf16.mxu0 0
        %1489 = vmatpush1.bf16.msra.mxu0 0
        %1490 = vmatprep.subr.bf16.mxu0 0
        %1491 = vmatpush1.bf16.msra.mxu0 0
        %1492 = vmatprep.subr.bf16.mxu0 0
        %1493 = vmatpush1.bf16.msra.mxu0 0
        %1494 = vmatprep.mubr.bf16.mxu0 0
        %1495 = vmatmul.mubr.bf16.gmra.mrb[0].mxu0 %v1139
        %v1496 = vpop.f32.mrb[0].mxu0
        %v1497 = vadd.f32 %v1110, %v1496
        %v1498 = vpop.f32.mrb[0].mxu0
        %v1499 = vadd.f32 %v1110, %v1498
        %v1500 = vpop.f32.mrb[0].mxu0
        %v1501 = vadd.f32 %v1115, %v1500
        %v1502 = vpop.f32.mrb[0].mxu0
        %v1503 = vadd.f32 %v1115, %v1502
        %1504 = vmatprep.mubr.bf16.mxu0 0
        %1505 = vmatmul.mubr.bf16.gmra.mrb[0].mxu0 %v1142
        %v1506 = vpop.f32.mrb[0].mxu0
        %v1507 = vadd.f32 %v1120, %v1506
        %v1508 = vpop.f32.mrb[0].mxu0
        %v1509 = vadd.f32 %v1120, %v1508
        %v1510 = vpop.f32.mrb[0].mxu0
        %v1511 = vadd.f32 %v1125, %v1510
        %v1512 = vpop.f32.mrb[0].mxu0
        %v1513 = vadd.f32 %v1125, %v1512
        %1514 = vdwg.mxu0
        %1515 = vmatprep.subr.bf16.mxu0 %v1086
        %1516 = vmatpush1.bf16.msra.mxu0 %v1085
        %1517 = vmatprep.subr.bf16.mxu0 %v1102
        %1518 = vmatpush1.bf16.msra.mxu0 %v1101
        %1519 = vmatprep.subr.bf16.mxu0 0
        %1520 = vmatpush1.bf16.msra.mxu0 0
        %1521 = vmatprep.subr.bf16.mxu0 0
        %1522 = vmatpush1.bf16.msra.mxu0 0
        %1523 = vmatprep.subr.bf16.mxu0 0
        %1524 = vmatpush1.bf16.msra.mxu0 0
        %1525 = vmatprep.subr.bf16.mxu0 0
        %1526 = vmatpush1.bf16.msra.mxu0 0
        %1527 = vmatprep.subr.bf16.mxu0 0
        %1528 = vmatpush1.bf16.msra.mxu0 0
        %1529 = vmatprep.subr.bf16.mxu0 0
        %1530 = vmatpush1.bf16.msra.mxu0 0
        %1531 = vmatprep.subr.bf16.mxu0 0
        %1532 = vmatpush1.bf16.msra.mxu0 0
        %1533 = vmatprep.subr.bf16.mxu0 0
        %1534 = vmatpush1.bf16.msra.mxu0 0
        %1535 = vmatprep.subr.bf16.mxu0 0
        %1536 = vmatpush1.bf16.msra.mxu0 0
        %1537 = vmatprep.subr.bf16.mxu0 0
        %1538 = vmatpush1.bf16.msra.mxu0 0
        %1539 = vmatprep.subr.bf16.mxu0 0
        %1540 = vmatpush1.bf16.msra.mxu0 0
        %1541 = vmatprep.subr.bf16.mxu0 0
        %1542 = vmatpush1.bf16.msra.mxu0 0
        %1543 = vmatprep.subr.bf16.mxu0 0
        %1544 = vmatpush1.bf16.msra.mxu0 0
        %1545 = vmatprep.subr.bf16.mxu0 0
        %1546 = vmatpush1.bf16.msra.mxu0 0
        %1547 = vmatprep.mubr.bf16.mxu0 0
        %1548 = vmatmul.mubr.bf16.gmra.mrb[0].mxu0 %v1139
        %v1549 = vpop.f32.mrb[0].mxu0
        %v1550 = vadd.f32 %v1110, %v1549
        %v1551 = vpop.f32.mrb[0].mxu0
        %v1552 = vadd.f32 %v1110, %v1551
        %v1553 = vpop.f32.mrb[0].mxu0
        %v1554 = vadd.f32 %v1115, %v1553
        %v1555 = vpop.f32.mrb[0].mxu0
        %v1556 = vadd.f32 %v1115, %v1555
        %1557 = vmatprep.mubr.bf16.mxu0 0
        %1558 = vmatmul.mubr.bf16.gmra.mrb[0].mxu0 %v1142
        %v1559 = vpop.f32.mrb[0].mxu0
        %v1560 = vadd.f32 %v1120, %v1559
        %v1561 = vpop.f32.mrb[0].mxu0
        %v1562 = vadd.f32 %v1120, %v1561
        %v1563 = vpop.f32.mrb[0].mxu0
        %v1564 = vadd.f32 %v1125, %v1563
        %v1565 = vpop.f32.mrb[0].mxu0
        %v1566 = vadd.f32 %v1125, %v1565
        %1567 = vdwg.mxu0
        %v1568 = vmax.f32 %v1179, 0.0
        %v1569 = vmax.f32 %v1181, 0.0
        %v1570 = vmax.f32 %v1232, 0.0
        %v1571 = vmax.f32 %v1234, 0.0
        %v1572 = vmax.f32 %v1285, 0.0
        %v1573 = vmax.f32 %v1287, 0.0
        %v1574 = vmax.f32 %v1338, 0.0
        %v1575 = vmax.f32 %v1340, 0.0
        %v1576 = vmax.f32 %v1391, 0.0
        %v1577 = vmax.f32 %v1393, 0.0
        %v1578 = vmax.f32 %v1444, 0.0
        %v1579 = vmax.f32 %v1446, 0.0
        %v1580 = vmax.f32 %v1497, 0.0
        %v1581 = vmax.f32 %v1499, 0.0
        %v1582 = vmax.f32 %v1550, 0.0
        %v1583 = vmax.f32 %v1552, 0.0
        %v1584 = vmax.f32 %v1183, 0.0
        %v1585 = vmax.f32 %v1185, 0.0
        %v1586 = vmax.f32 %v1236, 0.0
        %v1587 = vmax.f32 %v1238, 0.0
        %v1588 = vmax.f32 %v1289, 0.0
        %v1589 = vmax.f32 %v1291, 0.0
        %v1590 = vmax.f32 %v1342, 0.0
        %v1591 = vmax.f32 %v1344, 0.0
        %v1592 = vmax.f32 %v1395, 0.0
        %v1593 = vmax.f32 %v1397, 0.0
        %v1594 = vmax.f32 %v1448, 0.0
        %v1595 = vmax.f32 %v1450, 0.0
        %v1596 = vmax.f32 %v1501, 0.0
        %v1597 = vmax.f32 %v1503, 0.0
        %v1598 = vmax.f32 %v1554, 0.0
        %v1599 = vmax.f32 %v1556, 0.0
        %v1600 = vmax.f32 %v1189, 0.0
        %v1601 = vmax.f32 %v1191, 0.0
        %v1602 = vmax.f32 %v1242, 0.0
        %v1603 = vmax.f32 %v1244, 0.0
        %v1604 = vmax.f32 %v1295, 0.0
        %v1605 = vmax.f32 %v1297, 0.0
        %v1606 = vmax.f32 %v1348, 0.0
        %v1607 = vmax.f32 %v1350, 0.0
        %v1608 = vmax.f32 %v1401, 0.0
        %v1609 = vmax.f32 %v1403, 0.0
        %v1610 = vmax.f32 %v1454, 0.0
        %v1611 = vmax.f32 %v1456, 0.0
        %v1612 = vmax.f32 %v1507, 0.0
        %v1613 = vmax.f32 %v1509, 0.0
        %v1614 = vmax.f32 %v1560, 0.0
        %v1615 = vmax.f32 %v1562, 0.0
        %v1616 = vmax.f32 %v1193, 0.0
        %v1617 = vmax.f32 %v1195, 0.0
        %v1618 = vmax.f32 %v1246, 0.0
        %v1619 = vmax.f32 %v1248, 0.0
        %v1620 = vmax.f32 %v1299, 0.0
        %v1621 = vmax.f32 %v1301, 0.0
        %v1622 = vmax.f32 %v1352, 0.0
        %v1623 = vmax.f32 %v1354, 0.0
        %v1624 = vmax.f32 %v1405, 0.0
        %v1625 = vmax.f32 %v1407, 0.0
        %v1626 = vmax.f32 %v1458, 0.0
        %v1627 = vmax.f32 %v1460, 0.0
        %v1628 = vmax.f32 %v1511, 0.0
        %v1629 = vmax.f32 %v1513, 0.0
        %v1630 = vmax.f32 %v1564, 0.0
        %v1631 = vmax.f32 %v1566, 0.0
        %v1632 = vld [vmem:[%s5] sm:$0xf]
        %v1633 = vld [vmem:[%s5 + $0x4] sm:$0xf]
        %v1634 = vld [vmem:[%s5 + $0x8] sm:$0xf]
        %v1635 = vld [vmem:[%s5 + $0xc] sm:$0xf]
        %v1636 = vpack.c.bf16 %v1584, %v1568
        %v1637 = vpack.c.bf16 %v1585, %v1569
        %v1638 = vpack.c.bf16 %v1586, %v1570
        %v1639 = vpack.c.bf16 %v1587, %v1571
        %v1640 = vpack.c.bf16 %v1588, %v1572
        %v1641 = vpack.c.bf16 %v1589, %v1573
        %v1642 = vpack.c.bf16 %v1590, %v1574
        %v1643 = vpack.c.bf16 %v1591, %v1575
        %v1644 = vpack.c.bf16 %v1592, %v1576
        %v1645 = vpack.c.bf16 %v1593, %v1577
        %v1646 = vpack.c.bf16 %v1594, %v1578
        %v1647 = vpack.c.bf16 %v1595, %v1579
        %v1648 = vpack.c.bf16 %v1596, %v1580
        %v1649 = vpack.c.bf16 %v1597, %v1581
        %v1650 = vpack.c.bf16 %v1598, %v1582
        %v1651 = vpack.c.bf16 %v1599, %v1583
        %v1652 = vpack.c.bf16 %v1616, %v1600
        %v1653 = vpack.c.bf16 %v1617, %v1601
        %v1654 = vpack.c.bf16 %v1618, %v1602
        %v1655 = vpack.c.bf16 %v1619, %v1603
        %v1656 = vpack.c.bf16 %v1620, %v1604
        %v1657 = vpack.c.bf16 %v1621, %v1605
        %v1658 = vpack.c.bf16 %v1622, %v1606
        %v1659 = vpack.c.bf16 %v1623, %v1607
        %v1660 = vpack.c.bf16 %v1624, %v1608
        %v1661 = vpack.c.bf16 %v1625, %v1609
        %v1662 = vpack.c.bf16 %v1626, %v1610
        %v1663 = vpack.c.bf16 %v1627, %v1611
        %v1664 = vpack.c.bf16 %v1628, %v1612
        %v1665 = vpack.c.bf16 %v1629, %v1613
        %v1666 = vpack.c.bf16 %v1630, %v1614
        %v1667 = vpack.c.bf16 %v1631, %v1615
        %v1668 = vld [vmem:[%s6] sm:$0xff]
        %v1669 = vld [vmem:[%s6 + $0x8] sm:$0xff]
        %v1670 = vld [vmem:[%s6 + $0x10] sm:$0xff]
        %v1671 = vld [vmem:[%s6 + $0x18] sm:$0xff]
        %1673 = vset.pattern.permute.xlu0 0
        %1674 = vperm.xlu0 %1673, %v1668
        %v1675 = vpop.permute.xlu0 %1674
        %1678 = vset.pattern.permute.xlu0 0
        %1679 = vperm.xlu0 %1678, %v1669
        %v1680 = vpop.permute.xlu0 %1679
        %1683 = vset.pattern.permute.xlu0 0
        %1684 = vperm.xlu0 %1683, %v1670
        %v1685 = vpop.permute.xlu0 %1684
        %1688 = vset.pattern.permute.xlu0 0
        %1689 = vperm.xlu0 %1688, %v1671
        %v1690 = vpop.permute.xlu0 %1689
        %v1696 = vunpack.c.l.b16 %v1632
        %v1697 = vunpack.c.l.b16 %v1633
        %v1698 = vunpack.c.l.b16 %v1634
        %v1699 = vunpack.c.l.b16 %v1635
        %v1700 = vpack.c.b16 %v1697, %v1696
        %v1701 = vpack.c.b16 %v1699, %v1698
        %v1703 = vsel %vm1137, %v1700, 0
        %v1706 = vsel %vm1137, %v1701, 0
        %1708 = vmatprep.subr.bf16.mxu0 %v1637
        %1709 = vmatpush1.bf16.msra.mxu0 %v1636
        %1710 = vmatprep.subr.bf16.mxu0 %v1653
        %1711 = vmatpush1.bf16.msra.mxu0 %v1652
        %1712 = vmatprep.subr.bf16.mxu0 0
        %1713 = vmatpush1.bf16.msra.mxu0 0
        %1714 = vmatprep.subr.bf16.mxu0 0
        %1715 = vmatpush1.bf16.msra.mxu0 0
        %1716 = vmatprep.subr.bf16.mxu0 0
        %1717 = vmatpush1.bf16.msra.mxu0 0
        %1718 = vmatprep.subr.bf16.mxu0 0
        %1719 = vmatpush1.bf16.msra.mxu0 0
        %1720 = vmatprep.subr.bf16.mxu0 0
        %1721 = vmatpush1.bf16.msra.mxu0 0
        %1722 = vmatprep.subr.bf16.mxu0 0
        %1723 = vmatpush1.bf16.msra.mxu0 0
        %1724 = vmatprep.subr.bf16.mxu0 0
        %1725 = vmatpush1.bf16.msra.mxu0 0
        %1726 = vmatprep.subr.bf16.mxu0 0
        %1727 = vmatpush1.bf16.msra.mxu0 0
        %1728 = vmatprep.subr.bf16.mxu0 0
        %1729 = vmatpush1.bf16.msra.mxu0 0
        %1730 = vmatprep.subr.bf16.mxu0 0
        %1731 = vmatpush1.bf16.msra.mxu0 0
        %1732 = vmatprep.subr.bf16.mxu0 0
        %1733 = vmatpush1.bf16.msra.mxu0 0
        %1734 = vmatprep.subr.bf16.mxu0 0
        %1735 = vmatpush1.bf16.msra.mxu0 0
        %1736 = vmatprep.subr.bf16.mxu0 0
        %1737 = vmatpush1.bf16.msra.mxu0 0
        %1738 = vmatprep.subr.bf16.mxu0 0
        %1739 = vmatpush1.bf16.msra.mxu0 0
        %1740 = vmatprep.mubr.bf16.mxu0 0
        %1741 = vmatmul.mubr.bf16.gmra.mrb[0].mxu0 %v1703
        %v1742 = vpop.f32.mrb[0].mxu0
        %v1743 = vadd.f32 %v1675, %v1742
        %v1744 = vpop.f32.mrb[0].mxu0
        %v1745 = vadd.f32 %v1675, %v1744
        %v1746 = vpop.f32.mrb[0].mxu0
        %v1747 = vadd.f32 %v1680, %v1746
        %v1748 = vpop.f32.mrb[0].mxu0
        %v1749 = vadd.f32 %v1680, %v1748
        %1750 = vmatprep.mubr.bf16.mxu0 0
        %1751 = vmatmul.mubr.bf16.gmra.mrb[0].mxu0 %v1706
        %v1752 = vpop.f32.mrb[0].mxu0
        %v1753 = vadd.f32 %v1685, %v1752
        %v1754 = vpop.f32.mrb[0].mxu0
        %v1755 = vadd.f32 %v1685, %v1754
        %v1756 = vpop.f32.mrb[0].mxu0
        %v1757 = vadd.f32 %v1690, %v1756
        %v1758 = vpop.f32.mrb[0].mxu0
        %v1759 = vadd.f32 %v1690, %v1758
        %1760 = vdwg.mxu0
        %1761 = vmatprep.subr.bf16.mxu0 %v1639
        %1762 = vmatpush1.bf16.msra.mxu0 %v1638
        %1763 = vmatprep.subr.bf16.mxu0 %v1655
        %1764 = vmatpush1.bf16.msra.mxu0 %v1654
        %1765 = vmatprep.subr.bf16.mxu0 0
        %1766 = vmatpush1.bf16.msra.mxu0 0
        %1767 = vmatprep.subr.bf16.mxu0 0
        %1768 = vmatpush1.bf16.msra.mxu0 0
        %1769 = vmatprep.subr.bf16.mxu0 0
        %1770 = vmatpush1.bf16.msra.mxu0 0
        %1771 = vmatprep.subr.bf16.mxu0 0
        %1772 = vmatpush1.bf16.msra.mxu0 0
        %1773 = vmatprep.subr.bf16.mxu0 0
        %1774 = vmatpush1.bf16.msra.mxu0 0
        %1775 = vmatprep.subr.bf16.mxu0 0
        %1776 = vmatpush1.bf16.msra.mxu0 0
        %1777 = vmatprep.subr.bf16.mxu0 0
        %1778 = vmatpush1.bf16.msra.mxu0 0
        %1779 = vmatprep.subr.bf16.mxu0 0
        %1780 = vmatpush1.bf16.msra.mxu0 0
        %1781 = vmatprep.subr.bf16.mxu0 0
        %1782 = vmatpush1.bf16.msra.mxu0 0
        %1783 = vmatprep.subr.bf16.mxu0 0
        %1784 = vmatpush1.bf16.msra.mxu0 0
        %1785 = vmatprep.subr.bf16.mxu0 0
        %1786 = vmatpush1.bf16.msra.mxu0 0
        %1787 = vmatprep.subr.bf16.mxu0 0
        %1788 = vmatpush1.bf16.msra.mxu0 0
        %1789 = vmatprep.subr.bf16.mxu0 0
        %1790 = vmatpush1.bf16.msra.mxu0 0
        %1791 = vmatprep.subr.bf16.mxu0 0
        %1792 = vmatpush1.bf16.msra.mxu0 0
        %1793 = vmatprep.mubr.bf16.mxu0 0
        %1794 = vmatmul.mubr.bf16.gmra.mrb[0].mxu0 %v1703
        %v1795 = vpop.f32.mrb[0].mxu0
        %v1796 = vadd.f32 %v1675, %v1795
        %v1797 = vpop.f32.mrb[0].mxu0
        %v1798 = vadd.f32 %v1675, %v1797
        %v1799 = vpop.f32.mrb[0].mxu0
        %v1800 = vadd.f32 %v1680, %v1799
        %v1801 = vpop.f32.mrb[0].mxu0
        %v1802 = vadd.f32 %v1680, %v1801
        %1803 = vmatprep.mubr.bf16.mxu0 0
        %1804 = vmatmul.mubr.bf16.gmra.mrb[0].mxu0 %v1706
        %v1805 = vpop.f32.mrb[0].mxu0
        %v1806 = vadd.f32 %v1685, %v1805
        %v1807 = vpop.f32.mrb[0].mxu0
        %v1808 = vadd.f32 %v1685, %v1807
        %v1809 = vpop.f32.mrb[0].mxu0
        %v1810 = vadd.f32 %v1690, %v1809
        %v1811 = vpop.f32.mrb[0].mxu0
        %v1812 = vadd.f32 %v1690, %v1811
        %1813 = vdwg.mxu0
        %1814 = vmatprep.subr.bf16.mxu0 %v1641
        %1815 = vmatpush1.bf16.msra.mxu0 %v1640
        %1816 = vmatprep.subr.bf16.mxu0 %v1657
        %1817 = vmatpush1.bf16.msra.mxu0 %v1656
        %1818 = vmatprep.subr.bf16.mxu0 0
        %1819 = vmatpush1.bf16.msra.mxu0 0
        %1820 = vmatprep.subr.bf16.mxu0 0
        %1821 = vmatpush1.bf16.msra.mxu0 0
        %1822 = vmatprep.subr.bf16.mxu0 0
        %1823 = vmatpush1.bf16.msra.mxu0 0
        %1824 = vmatprep.subr.bf16.mxu0 0
        %1825 = vmatpush1.bf16.msra.mxu0 0
        %1826 = vmatprep.subr.bf16.mxu0 0
        %1827 = vmatpush1.bf16.msra.mxu0 0
        %1828 = vmatprep.subr.bf16.mxu0 0
        %1829 = vmatpush1.bf16.msra.mxu0 0
        %1830 = vmatprep.subr.bf16.mxu0 0
        %1831 = vmatpush1.bf16.msra.mxu0 0
        %1832 = vmatprep.subr.bf16.mxu0 0
        %1833 = vmatpush1.bf16.msra.mxu0 0
        %1834 = vmatprep.subr.bf16.mxu0 0
        %1835 = vmatpush1.bf16.msra.mxu0 0
        %1836 = vmatprep.subr.bf16.mxu0 0
        %1837 = vmatpush1.bf16.msra.mxu0 0
        %1838 = vmatprep.subr.bf16.mxu0 0
        %1839 = vmatpush1.bf16.msra.mxu0 0
        %1840 = vmatprep.subr.bf16.mxu0 0
        %1841 = vmatpush1.bf16.msra.mxu0 0
        %1842 = vmatprep.subr.bf16.mxu0 0
        %1843 = vmatpush1.bf16.msra.mxu0 0
        %1844 = vmatprep.subr.bf16.mxu0 0
        %1845 = vmatpush1.bf16.msra.mxu0 0
        %1846 = vmatprep.mubr.bf16.mxu0 0
        %1847 = vmatmul.mubr.bf16.gmra.mrb[0].mxu0 %v1703
        %v1848 = vpop.f32.mrb[0].mxu0
        %v1849 = vadd.f32 %v1675, %v1848
        %v1850 = vpop.f32.mrb[0].mxu0
        %v1851 = vadd.f32 %v1675, %v1850
        %v1852 = vpop.f32.mrb[0].mxu0
        %v1853 = vadd.f32 %v1680, %v1852
        %v1854 = vpop.f32.mrb[0].mxu0
        %v1855 = vadd.f32 %v1680, %v1854
        %1856 = vmatprep.mubr.bf16.mxu0 0
        %1857 = vmatmul.mubr.bf16.gmra.mrb[0].mxu0 %v1706
        %v1858 = vpop.f32.mrb[0].mxu0
        %v1859 = vadd.f32 %v1685, %v1858
        %v1860 = vpop.f32.mrb[0].mxu0
        %v1861 = vadd.f32 %v1685, %v1860
        %v1862 = vpop.f32.mrb[0].mxu0
        %v1863 = vadd.f32 %v1690, %v1862
        %v1864 = vpop.f32.mrb[0].mxu0
        %v1865 = vadd.f32 %v1690, %v1864
        %1866 = vdwg.mxu0
        %1867 = vmatprep.subr.bf16.mxu0 %v1643
        %1868 = vmatpush1.bf16.msra.mxu0 %v1642
        %1869 = vmatprep.subr.bf16.mxu0 %v1659
        %1870 = vmatpush1.bf16.msra.mxu0 %v1658
        %1871 = vmatprep.subr.bf16.mxu0 0
        %1872 = vmatpush1.bf16.msra.mxu0 0
        %1873 = vmatprep.subr.bf16.mxu0 0
        %1874 = vmatpush1.bf16.msra.mxu0 0
        %1875 = vmatprep.subr.bf16.mxu0 0
        %1876 = vmatpush1.bf16.msra.mxu0 0
        %1877 = vmatprep.subr.bf16.mxu0 0
        %1878 = vmatpush1.bf16.msra.mxu0 0
        %1879 = vmatprep.subr.bf16.mxu0 0
        %1880 = vmatpush1.bf16.msra.mxu0 0
        %1881 = vmatprep.subr.bf16.mxu0 0
        %1882 = vmatpush1.bf16.msra.mxu0 0
        %1883 = vmatprep.subr.bf16.mxu0 0
        %1884 = vmatpush1.bf16.msra.mxu0 0
        %1885 = vmatprep.subr.bf16.mxu0 0
        %1886 = vmatpush1.bf16.msra.mxu0 0
        %1887 = vmatprep.subr.bf16.mxu0 0
        %1888 = vmatpush1.bf16.msra.mxu0 0
        %1889 = vmatprep.subr.bf16.mxu0 0
        %1890 = vmatpush1.bf16.msra.mxu0 0
        %1891 = vmatprep.subr.bf16.mxu0 0
        %1892 = vmatpush1.bf16.msra.mxu0 0
        %1893 = vmatprep.subr.bf16.mxu0 0
        %1894 = vmatpush1.bf16.msra.mxu0 0
        %1895 = vmatprep.subr.bf16.mxu0 0
        %1896 = vmatpush1.bf16.msra.mxu0 0
        %1897 = vmatprep.subr.bf16.mxu0 0
        %1898 = vmatpush1.bf16.msra.mxu0 0
        %1899 = vmatprep.mubr.bf16.mxu0 0
        %1900 = vmatmul.mubr.bf16.gmra.mrb[0].mxu0 %v1703
        %v1901 = vpop.f32.mrb[0].mxu0
        %v1902 = vadd.f32 %v1675, %v1901
        %v1903 = vpop.f32.mrb[0].mxu0
        %v1904 = vadd.f32 %v1675, %v1903
        %v1905 = vpop.f32.mrb[0].mxu0
        %v1906 = vadd.f32 %v1680, %v1905
        %v1907 = vpop.f32.mrb[0].mxu0
        %v1908 = vadd.f32 %v1680, %v1907
        %1909 = vmatprep.mubr.bf16.mxu0 0
        %1910 = vmatmul.mubr.bf16.gmra.mrb[0].mxu0 %v1706
        %v1911 = vpop.f32.mrb[0].mxu0
        %v1912 = vadd.f32 %v1685, %v1911
        %v1913 = vpop.f32.mrb[0].mxu0
        %v1914 = vadd.f32 %v1685, %v1913
        %v1915 = vpop.f32.mrb[0].mxu0
        %v1916 = vadd.f32 %v1690, %v1915
        %v1917 = vpop.f32.mrb[0].mxu0
        %v1918 = vadd.f32 %v1690, %v1917
        %1919 = vdwg.mxu0
        %1920 = vmatprep.subr.bf16.mxu0 %v1645
        %1921 = vmatpush1.bf16.msra.mxu0 %v1644
        %1922 = vmatprep.subr.bf16.mxu0 %v1661
        %1923 = vmatpush1.bf16.msra.mxu0 %v1660
        %1924 = vmatprep.subr.bf16.mxu0 0
        %1925 = vmatpush1.bf16.msra.mxu0 0
        %1926 = vmatprep.subr.bf16.mxu0 0
        %1927 = vmatpush1.bf16.msra.mxu0 0
        %1928 = vmatprep.subr.bf16.mxu0 0
        %1929 = vmatpush1.bf16.msra.mxu0 0
        %1930 = vmatprep.subr.bf16.mxu0 0
        %1931 = vmatpush1.bf16.msra.mxu0 0
        %1932 = vmatprep.subr.bf16.mxu0 0
        %1933 = vmatpush1.bf16.msra.mxu0 0
        %1934 = vmatprep.subr.bf16.mxu0 0
        %1935 = vmatpush1.bf16.msra.mxu0 0
        %1936 = vmatprep.subr.bf16.mxu0 0
        %1937 = vmatpush1.bf16.msra.mxu0 0
        %1938 = vmatprep.subr.bf16.mxu0 0
        %1939 = vmatpush1.bf16.msra.mxu0 0
        %1940 = vmatprep.subr.bf16.mxu0 0
        %1941 = vmatpush1.bf16.msra.mxu0 0
        %1942 = vmatprep.subr.bf16.mxu0 0
        %1943 = vmatpush1.bf16.msra.mxu0 0
        %1944 = vmatprep.subr.bf16.mxu0 0
        %1945 = vmatpush1.bf16.msra.mxu0 0
        %1946 = vmatprep.subr.bf16.mxu0 0
        %1947 = vmatpush1.bf16.msra.mxu0 0
        %1948 = vmatprep.subr.bf16.mxu0 0
        %1949 = vmatpush1.bf16.msra.mxu0 0
        %1950 = vmatprep.subr.bf16.mxu0 0
        %1951 = vmatpush1.bf16.msra.mxu0 0
        %1952 = vmatprep.mubr.bf16.mxu0 0
        %1953 = vmatmul.mubr.bf16.gmra.mrb[0].mxu0 %v1703
        %v1954 = vpop.f32.mrb[0].mxu0
        %v1955 = vadd.f32 %v1675, %v1954
        %v1956 = vpop.f32.mrb[0].mxu0
        %v1957 = vadd.f32 %v1675, %v1956
        %v1958 = vpop.f32.mrb[0].mxu0
        %v1959 = vadd.f32 %v1680, %v1958
        %v1960 = vpop.f32.mrb[0].mxu0
        %v1961 = vadd.f32 %v1680, %v1960
        %1962 = vmatprep.mubr.bf16.mxu0 0
        %1963 = vmatmul.mubr.bf16.gmra.mrb[0].mxu0 %v1706
        %v1964 = vpop.f32.mrb[0].mxu0
        %v1965 = vadd.f32 %v1685, %v1964
        %v1966 = vpop.f32.mrb[0].mxu0
        %v1967 = vadd.f32 %v1685, %v1966
        %v1968 = vpop.f32.mrb[0].mxu0
        %v1969 = vadd.f32 %v1690, %v1968
        %v1970 = vpop.f32.mrb[0].mxu0
        %v1971 = vadd.f32 %v1690, %v1970
        %1972 = vdwg.mxu0
        %1973 = vmatprep.subr.bf16.mxu0 %v1647
        %1974 = vmatpush1.bf16.msra.mxu0 %v1646
        %1975 = vmatprep.subr.bf16.mxu0 %v1663
        %1976 = vmatpush1.bf16.msra.mxu0 %v1662
        %1977 = vmatprep.subr.bf16.mxu0 0
        %1978 = vmatpush1.bf16.msra.mxu0 0
        %1979 = vmatprep.subr.bf16.mxu0 0
        %1980 = vmatpush1.bf16.msra.mxu0 0
        %1981 = vmatprep.subr.bf16.mxu0 0
        %1982 = vmatpush1.bf16.msra.mxu0 0
        %1983 = vmatprep.subr.bf16.mxu0 0
        %1984 = vmatpush1.bf16.msra.mxu0 0
        %1985 = vmatprep.subr.bf16.mxu0 0
        %1986 = vmatpush1.bf16.msra.mxu0 0
        %1987 = vmatprep.subr.bf16.mxu0 0
        %1988 = vmatpush1.bf16.msra.mxu0 0
        %1989 = vmatprep.subr.bf16.mxu0 0
        %1990 = vmatpush1.bf16.msra.mxu0 0
        %1991 = vmatprep.subr.bf16.mxu0 0
        %1992 = vmatpush1.bf16.msra.mxu0 0
        %1993 = vmatprep.subr.bf16.mxu0 0
        %1994 = vmatpush1.bf16.msra.mxu0 0
        %1995 = vmatprep.subr.bf16.mxu0 0
        %1996 = vmatpush1.bf16.msra.mxu0 0
        %1997 = vmatprep.subr.bf16.mxu0 0
        %1998 = vmatpush1.bf16.msra.mxu0 0
        %1999 = vmatprep.subr.bf16.mxu0 0
        %2000 = vmatpush1.bf16.msra.mxu0 0
        %2001 = vmatprep.subr.bf16.mxu0 0
        %2002 = vmatpush1.bf16.msra.mxu0 0
        %2003 = vmatprep.subr.bf16.mxu0 0
        %2004 = vmatpush1.bf16.msra.mxu0 0
        %2005 = vmatprep.mubr.bf16.mxu0 0
        %2006 = vmatmul.mubr.bf16.gmra.mrb[0].mxu0 %v1703
        %v2007 = vpop.f32.mrb[0].mxu0
        %v2008 = vadd.f32 %v1675, %v2007
        %v2009 = vpop.f32.mrb[0].mxu0
        %v2010 = vadd.f32 %v1675, %v2009
        %v2011 = vpop.f32.mrb[0].mxu0
        %v2012 = vadd.f32 %v1680, %v2011
        %v2013 = vpop.f32.mrb[0].mxu0
        %v2014 = vadd.f32 %v1680, %v2013
        %2015 = vmatprep.mubr.bf16.mxu0 0
        %2016 = vmatmul.mubr.bf16.gmra.mrb[0].mxu0 %v1706
        %v2017 = vpop.f32.mrb[0].mxu0
        %v2018 = vadd.f32 %v1685, %v2017
        %v2019 = vpop.f32.mrb[0].mxu0
        %v2020 = vadd.f32 %v1685, %v2019
        %v2021 = vpop.f32.mrb[0].mxu0
        %v2022 = vadd.f32 %v1690, %v2021
        %v2023 = vpop.f32.mrb[0].mxu0
        %v2024 = vadd.f32 %v1690, %v2023
        %2025 = vdwg.mxu0
        %2026 = vmatprep.subr.bf16.mxu0 %v1649
        %2027 = vmatpush1.bf16.msra.mxu0 %v1648
        %2028 = vmatprep.subr.bf16.mxu0 %v1665
        %2029 = vmatpush1.bf16.msra.mxu0 %v1664
        %2030 = vmatprep.subr.bf16.mxu0 0
        %2031 = vmatpush1.bf16.msra.mxu0 0
        %2032 = vmatprep.subr.bf16.mxu0 0
        %2033 = vmatpush1.bf16.msra.mxu0 0
        %2034 = vmatprep.subr.bf16.mxu0 0
        %2035 = vmatpush1.bf16.msra.mxu0 0
        %2036 = vmatprep.subr.bf16.mxu0 0
        %2037 = vmatpush1.bf16.msra.mxu0 0
        %2038 = vmatprep.subr.bf16.mxu0 0
        %2039 = vmatpush1.bf16.msra.mxu0 0
        %2040 = vmatprep.subr.bf16.mxu0 0
        %2041 = vmatpush1.bf16.msra.mxu0 0
        %2042 = vmatprep.subr.bf16.mxu0 0
        %2043 = vmatpush1.bf16.msra.mxu0 0
        %2044 = vmatprep.subr.bf16.mxu0 0
        %2045 = vmatpush1.bf16.msra.mxu0 0
        %2046 = vmatprep.subr.bf16.mxu0 0
        %2047 = vmatpush1.bf16.msra.mxu0 0
        %2048 = vmatprep.subr.bf16.mxu0 0
        %2049 = vmatpush1.bf16.msra.mxu0 0
        %2050 = vmatprep.subr.bf16.mxu0 0
        %2051 = vmatpush1.bf16.msra.mxu0 0
        %2052 = vmatprep.subr.bf16.mxu0 0
        %2053 = vmatpush1.bf16.msra.mxu0 0
        %2054 = vmatprep.subr.bf16.mxu0 0
        %2055 = vmatpush1.bf16.msra.mxu0 0
        %2056 = vmatprep.subr.bf16.mxu0 0
        %2057 = vmatpush1.bf16.msra.mxu0 0
        %2058 = vmatprep.mubr.bf16.mxu0 0
        %2059 = vmatmul.mubr.bf16.gmra.mrb[0].mxu0 %v1703
        %v2060 = vpop.f32.mrb[0].mxu0
        %v2061 = vadd.f32 %v1675, %v2060
        %v2062 = vpop.f32.mrb[0].mxu0
        %v2063 = vadd.f32 %v1675, %v2062
        %v2064 = vpop.f32.mrb[0].mxu0
        %v2065 = vadd.f32 %v1680, %v2064
        %v2066 = vpop.f32.mrb[0].mxu0
        %v2067 = vadd.f32 %v1680, %v2066
        %2068 = vmatprep.mubr.bf16.mxu0 0
        %2069 = vmatmul.mubr.bf16.gmra.mrb[0].mxu0 %v1706
        %v2070 = vpop.f32.mrb[0].mxu0
        %v2071 = vadd.f32 %v1685, %v2070
        %v2072 = vpop.f32.mrb[0].mxu0
        %v2073 = vadd.f32 %v1685, %v2072
        %v2074 = vpop.f32.mrb[0].mxu0
        %v2075 = vadd.f32 %v1690, %v2074
        %v2076 = vpop.f32.mrb[0].mxu0
        %v2077 = vadd.f32 %v1690, %v2076
        %2078 = vdwg.mxu0
        %2079 = vmatprep.subr.bf16.mxu0 %v1651
        %2080 = vmatpush1.bf16.msra.mxu0 %v1650
        %2081 = vmatprep.subr.bf16.mxu0 %v1667
        %2082 = vmatpush1.bf16.msra.mxu0 %v1666
        %2083 = vmatprep.subr.bf16.mxu0 0
        %2084 = vmatpush1.bf16.msra.mxu0 0
        %2085 = vmatprep.subr.bf16.mxu0 0
        %2086 = vmatpush1.bf16.msra.mxu0 0
        %2087 = vmatprep.subr.bf16.mxu0 0
        %2088 = vmatpush1.bf16.msra.mxu0 0
        %2089 = vmatprep.subr.bf16.mxu0 0
        %2090 = vmatpush1.bf16.msra.mxu0 0
        %2091 = vmatprep.subr.bf16.mxu0 0
        %2092 = vmatpush1.bf16.msra.mxu0 0
        %2093 = vmatprep.subr.bf16.mxu0 0
        %2094 = vmatpush1.bf16.msra.mxu0 0
        %2095 = vmatprep.subr.bf16.mxu0 0
        %2096 = vmatpush1.bf16.msra.mxu0 0
        %2097 = vmatprep.subr.bf16.mxu0 0
        %2098 = vmatpush1.bf16.msra.mxu0 0
        %2099 = vmatprep.subr.bf16.mxu0 0
        %2100 = vmatpush1.bf16.msra.mxu0 0
        %2101 = vmatprep.subr.bf16.mxu0 0
        %2102 = vmatpush1.bf16.msra.mxu0 0
        %2103 = vmatprep.subr.bf16.mxu0 0
        %2104 = vmatpush1.bf16.msra.mxu0 0
        %2105 = vmatprep.subr.bf16.mxu0 0
        %2106 = vmatpush1.bf16.msra.mxu0 0
        %2107 = vmatprep.subr.bf16.mxu0 0
        %2108 = vmatpush1.bf16.msra.mxu0 0
        %2109 = vmatprep.subr.bf16.mxu0 0
        %2110 = vmatpush1.bf16.msra.mxu0 0
        %2111 = vmatprep.mubr.bf16.mxu0 0
        %2112 = vmatmul.mubr.bf16.gmra.mrb[0].mxu0 %v1703
        %v2113 = vpop.f32.mrb[0].mxu0
        %v2114 = vadd.f32 %v1675, %v2113
        %v2115 = vpop.f32.mrb[0].mxu0
        %v2116 = vadd.f32 %v1675, %v2115
        %v2117 = vpop.f32.mrb[0].mxu0
        %v2118 = vadd.f32 %v1680, %v2117
        %v2119 = vpop.f32.mrb[0].mxu0
        %v2120 = vadd.f32 %v1680, %v2119
        %2121 = vmatprep.mubr.bf16.mxu0 0
        %2122 = vmatmul.mubr.bf16.gmra.mrb[0].mxu0 %v1706
        %v2123 = vpop.f32.mrb[0].mxu0
        %v2124 = vadd.f32 %v1685, %v2123
        %v2125 = vpop.f32.mrb[0].mxu0
        %v2126 = vadd.f32 %v1685, %v2125
        %v2127 = vpop.f32.mrb[0].mxu0
        %v2128 = vadd.f32 %v1690, %v2127
        %v2129 = vpop.f32.mrb[0].mxu0
        %v2130 = vadd.f32 %v1690, %v2129
        %2131 = vdwg.mxu0
        %v2132 = vmax.f32 %v1743, 0.0
        %v2133 = vmax.f32 %v1745, 0.0
        %v2134 = vmax.f32 %v1796, 0.0
        %v2135 = vmax.f32 %v1798, 0.0
        %v2136 = vmax.f32 %v1849, 0.0
        %v2137 = vmax.f32 %v1851, 0.0
        %v2138 = vmax.f32 %v1902, 0.0
        %v2139 = vmax.f32 %v1904, 0.0
        %v2140 = vmax.f32 %v1955, 0.0
        %v2141 = vmax.f32 %v1957, 0.0
        %v2142 = vmax.f32 %v2008, 0.0
        %v2143 = vmax.f32 %v2010, 0.0
        %v2144 = vmax.f32 %v2061, 0.0
        %v2145 = vmax.f32 %v2063, 0.0
        %v2146 = vmax.f32 %v2114, 0.0
        %v2147 = vmax.f32 %v2116, 0.0
        %v2148 = vmax.f32 %v1747, 0.0
        %v2149 = vmax.f32 %v1749, 0.0
        %v2150 = vmax.f32 %v1800, 0.0
        %v2151 = vmax.f32 %v1802, 0.0
        %v2152 = vmax.f32 %v1853, 0.0
        %v2153 = vmax.f32 %v1855, 0.0
        %v2154 = vmax.f32 %v1906, 0.0
        %v2155 = vmax.f32 %v1908, 0.0
        %v2156 = vmax.f32 %v1959, 0.0
        %v2157 = vmax.f32 %v1961, 0.0
        %v2158 = vmax.f32 %v2012, 0.0
        %v2159 = vmax.f32 %v2014, 0.0
        %v2160 = vmax.f32 %v2065, 0.0
        %v2161 = vmax.f32 %v2067, 0.0
        %v2162 = vmax.f32 %v2118, 0.0
        %v2163 = vmax.f32 %v2120, 0.0
        %v2164 = vmax.f32 %v1753, 0.0
        %v2165 = vmax.f32 %v1755, 0.0
        %v2166 = vmax.f32 %v1806, 0.0
        %v2167 = vmax.f32 %v1808, 0.0
        %v2168 = vmax.f32 %v1859, 0.0
        %v2169 = vmax.f32 %v1861, 0.0
        %v2170 = vmax.f32 %v1912, 0.0
        %v2171 = vmax.f32 %v1914, 0.0
        %v2172 = vmax.f32 %v1965, 0.0
        %v2173 = vmax.f32 %v1967, 0.0
        %v2174 = vmax.f32 %v2018, 0.0
        %v2175 = vmax.f32 %v2020, 0.0
        %v2176 = vmax.f32 %v2071, 0.0
        %v2177 = vmax.f32 %v2073, 0.0
        %v2178 = vmax.f32 %v2124, 0.0
        %v2179 = vmax.f32 %v2126, 0.0
        %v2180 = vmax.f32 %v1757, 0.0
        %v2181 = vmax.f32 %v1759, 0.0
        %v2182 = vmax.f32 %v1810, 0.0
        %v2183 = vmax.f32 %v1812, 0.0
        %v2184 = vmax.f32 %v1863, 0.0
        %v2185 = vmax.f32 %v1865, 0.0
        %v2186 = vmax.f32 %v1916, 0.0
        %v2187 = vmax.f32 %v1918, 0.0
        %v2188 = vmax.f32 %v1969, 0.0
        %v2189 = vmax.f32 %v1971, 0.0
        %v2190 = vmax.f32 %v2022, 0.0
        %v2191 = vmax.f32 %v2024, 0.0
        %v2192 = vmax.f32 %v2075, 0.0
        %v2193 = vmax.f32 %v2077, 0.0
        %v2194 = vmax.f32 %v2128, 0.0
        %v2195 = vmax.f32 %v2130, 0.0
        %v2196 = vadd.f32 %v1568, %v2132
        %v2197 = vadd.f32 %v1569, %v2133
        %v2198 = vadd.f32 %v1570, %v2134
        %v2199 = vadd.f32 %v1571, %v2135
        %v2200 = vadd.f32 %v1572, %v2136
        %v2201 = vadd.f32 %v1573, %v2137
        %v2202 = vadd.f32 %v1574, %v2138
        %v2203 = vadd.f32 %v1575, %v2139
        %v2204 = vadd.f32 %v1576, %v2140
        %v2205 = vadd.f32 %v1577, %v2141
        %v2206 = vadd.f32 %v1578, %v2142
        %v2207 = vadd.f32 %v1579, %v2143
        %v2208 = vadd.f32 %v1580, %v2144
        %v2209 = vadd.f32 %v1581, %v2145
        %v2210 = vadd.f32 %v1582, %v2146
        %v2211 = vadd.f32 %v1583, %v2147
        %v2212 = vadd.f32 %v1584, %v2148
        %v2213 = vadd.f32 %v1585, %v2149
        %v2214 = vadd.f32 %v1586, %v2150
        %v2215 = vadd.f32 %v1587, %v2151
        %v2216 = vadd.f32 %v1588, %v2152
        %v2217 = vadd.f32 %v1589, %v2153
        %v2218 = vadd.f32 %v1590, %v2154
        %v2219 = vadd.f32 %v1591, %v2155
        %v2220 = vadd.f32 %v1592, %v2156
        %v2221 = vadd.f32 %v1593, %v2157
        %v2222 = vadd.f32 %v1594, %v2158
        %v2223 = vadd.f32 %v1595, %v2159
        %v2224 = vadd.f32 %v1596, %v2160
        %v2225 = vadd.f32 %v1597, %v2161
        %v2226 = vadd.f32 %v1598, %v2162
        %v2227 = vadd.f32 %v1599, %v2163
        %v2228 = vadd.f32 %v1600, %v2164
        %v2229 = vadd.f32 %v1601, %v2165
        %v2230 = vadd.f32 %v1602, %v2166
        %v2231 = vadd.f32 %v1603, %v2167
        %v2232 = vadd.f32 %v1604, %v2168
        %v2233 = vadd.f32 %v1605, %v2169
        %v2234 = vadd.f32 %v1606, %v2170
        %v2235 = vadd.f32 %v1607, %v2171
        %v2236 = vadd.f32 %v1608, %v2172
        %v2237 = vadd.f32 %v1609, %v2173
        %v2238 = vadd.f32 %v1610, %v2174
        %v2239 = vadd.f32 %v1611, %v2175
        %v2240 = vadd.f32 %v1612, %v2176
        %v2241 = vadd.f32 %v1613, %v2177
        %v2242 = vadd.f32 %v1614, %v2178
        %v2243 = vadd.f32 %v1615, %v2179
        %v2244 = vadd.f32 %v1616, %v2180
        %v2245 = vadd.f32 %v1617, %v2181
        %v2246 = vadd.f32 %v1618, %v2182
        %v2247 = vadd.f32 %v1619, %v2183
        %v2248 = vadd.f32 %v1620, %v2184
        %v2249 = vadd.f32 %v1621, %v2185
        %v2250 = vadd.f32 %v1622, %v2186
        %v2251 = vadd.f32 %v1623, %v2187
        %v2252 = vadd.f32 %v1624, %v2188
        %v2253 = vadd.f32 %v1625, %v2189
        %v2254 = vadd.f32 %v1626, %v2190
        %v2255 = vadd.f32 %v1627, %v2191
        %v2256 = vadd.f32 %v1628, %v2192
        %v2257 = vadd.f32 %v1629, %v2193
        %v2258 = vadd.f32 %v1630, %v2194
        %v2259 = vadd.f32 %v1631, %v2195
        %v2260 = vld [vmem:[%s7] sm:$0xf]
        %v2261 = vld [vmem:[%s7 + $0x4] sm:$0xf]
        %v2262 = vld [vmem:[%s7 + $0x8] sm:$0xf]
        %v2263 = vld [vmem:[%s7 + $0xc] sm:$0xf]
        %v2264 = vpack.c.bf16 %v2212, %v2196
        %v2265 = vpack.c.bf16 %v2213, %v2197
        %v2266 = vpack.c.bf16 %v2214, %v2198
        %v2267 = vpack.c.bf16 %v2215, %v2199
        %v2268 = vpack.c.bf16 %v2216, %v2200
        %v2269 = vpack.c.bf16 %v2217, %v2201
        %v2270 = vpack.c.bf16 %v2218, %v2202
        %v2271 = vpack.c.bf16 %v2219, %v2203
        %v2272 = vpack.c.bf16 %v2220, %v2204
        %v2273 = vpack.c.bf16 %v2221, %v2205
        %v2274 = vpack.c.bf16 %v2222, %v2206
        %v2275 = vpack.c.bf16 %v2223, %v2207
        %v2276 = vpack.c.bf16 %v2224, %v2208
        %v2277 = vpack.c.bf16 %v2225, %v2209
        %v2278 = vpack.c.bf16 %v2226, %v2210
        %v2279 = vpack.c.bf16 %v2227, %v2211
        %v2280 = vpack.c.bf16 %v2244, %v2228
        %v2281 = vpack.c.bf16 %v2245, %v2229
        %v2282 = vpack.c.bf16 %v2246, %v2230
        %v2283 = vpack.c.bf16 %v2247, %v2231
        %v2284 = vpack.c.bf16 %v2248, %v2232
        %v2285 = vpack.c.bf16 %v2249, %v2233
        %v2286 = vpack.c.bf16 %v2250, %v2234
        %v2287 = vpack.c.bf16 %v2251, %v2235
        %v2288 = vpack.c.bf16 %v2252, %v2236
        %v2289 = vpack.c.bf16 %v2253, %v2237
        %v2290 = vpack.c.bf16 %v2254, %v2238
        %v2291 = vpack.c.bf16 %v2255, %v2239
        %v2292 = vpack.c.bf16 %v2256, %v2240
        %v2293 = vpack.c.bf16 %v2257, %v2241
        %v2294 = vpack.c.bf16 %v2258, %v2242
        %v2295 = vpack.c.bf16 %v2259, %v2243
        %v2296 = vld [vmem:[%s8] sm:$0xff]
        %v2297 = vld [vmem:[%s8 + $0x8] sm:$0xff]
        %v2298 = vld [vmem:[%s8 + $0x10] sm:$0xff]
        %v2299 = vld [vmem:[%s8 + $0x18] sm:$0xff]
        %2301 = vset.pattern.permute.xlu0 0
        %2302 = vperm.xlu0 %2301, %v2296
        %v2303 = vpop.permute.xlu0 %2302
        %2306 = vset.pattern.permute.xlu0 0
        %2307 = vperm.xlu0 %2306, %v2297
        %v2308 = vpop.permute.xlu0 %2307
        %2311 = vset.pattern.permute.xlu0 0
        %2312 = vperm.xlu0 %2311, %v2298
        %v2313 = vpop.permute.xlu0 %2312
        %2316 = vset.pattern.permute.xlu0 0
        %2317 = vperm.xlu0 %2316, %v2299
        %v2318 = vpop.permute.xlu0 %2317
        %v2324 = vunpack.c.l.b16 %v2260
        %v2325 = vunpack.c.l.b16 %v2261
        %v2326 = vunpack.c.l.b16 %v2262
        %v2327 = vunpack.c.l.b16 %v2263
        %v2328 = vpack.c.b16 %v2325, %v2324
        %v2329 = vpack.c.b16 %v2327, %v2326
        %v2331 = vsel %vm1137, %v2328, 0
        %v2334 = vsel %vm1137, %v2329, 0
        %2336 = vmatprep.subr.bf16.mxu0 %v2265
        %2337 = vmatpush1.bf16.msra.mxu0 %v2264
        %2338 = vmatprep.subr.bf16.mxu0 %v2281
        %2339 = vmatpush1.bf16.msra.mxu0 %v2280
        %2340 = vmatprep.subr.bf16.mxu0 0
        %2341 = vmatpush1.bf16.msra.mxu0 0
        %2342 = vmatprep.subr.bf16.mxu0 0
        %2343 = vmatpush1.bf16.msra.mxu0 0
        %2344 = vmatprep.subr.bf16.mxu0 0
        %2345 = vmatpush1.bf16.msra.mxu0 0
        %2346 = vmatprep.subr.bf16.mxu0 0
        %2347 = vmatpush1.bf16.msra.mxu0 0
        %2348 = vmatprep.subr.bf16.mxu0 0
        %2349 = vmatpush1.bf16.msra.mxu0 0
        %2350 = vmatprep.subr.bf16.mxu0 0
        %2351 = vmatpush1.bf16.msra.mxu0 0
        %2352 = vmatprep.subr.bf16.mxu0 0
        %2353 = vmatpush1.bf16.msra.mxu0 0
        %2354 = vmatprep.subr.bf16.mxu0 0
        %2355 = vmatpush1.bf16.msra.mxu0 0
        %2356 = vmatprep.subr.bf16.mxu0 0
        %2357 = vmatpush1.bf16.msra.mxu0 0
        %2358 = vmatprep.subr.bf16.mxu0 0
        %2359 = vmatpush1.bf16.msra.mxu0 0
        %2360 = vmatprep.subr.bf16.mxu0 0
        %2361 = vmatpush1.bf16.msra.mxu0 0
        %2362 = vmatprep.subr.bf16.mxu0 0
        %2363 = vmatpush1.bf16.msra.mxu0 0
        %2364 = vmatprep.subr.bf16.mxu0 0
        %2365 = vmatpush1.bf16.msra.mxu0 0
        %2366 = vmatprep.subr.bf16.mxu0 0
        %2367 = vmatpush1.bf16.msra.mxu0 0
        %2368 = vmatprep.mubr.bf16.mxu0 0
        %2369 = vmatmul.mubr.bf16.gmra.mrb[0].mxu0 %v2331
        %v2370 = vpop.f32.mrb[0].mxu0
        %v2371 = vadd.f32 %v2303, %v2370
        %v2372 = vpop.f32.mrb[0].mxu0
        %v2373 = vadd.f32 %v2303, %v2372
        %v2374 = vpop.f32.mrb[0].mxu0
        %v2375 = vadd.f32 %v2308, %v2374
        %v2376 = vpop.f32.mrb[0].mxu0
        %v2377 = vadd.f32 %v2308, %v2376
        %2378 = vmatprep.mubr.bf16.mxu0 0
        %2379 = vmatmul.mubr.bf16.gmra.mrb[0].mxu0 %v2334
        %v2380 = vpop.f32.mrb[0].mxu0
        %v2381 = vadd.f32 %v2313, %v2380
        %v2382 = vpop.f32.mrb[0].mxu0
        %v2383 = vadd.f32 %v2313, %v2382
        %v2384 = vpop.f32.mrb[0].mxu0
        %v2385 = vadd.f32 %v2318, %v2384
        %v2386 = vpop.f32.mrb[0].mxu0
        %v2387 = vadd.f32 %v2318, %v2386
        %2388 = vdwg.mxu0
        %2389 = vmatprep.subr.bf16.mxu0 %v2267
        %2390 = vmatpush1.bf16.msra.mxu0 %v2266
        %2391 = vmatprep.subr.bf16.mxu0 %v2283
        %2392 = vmatpush1.bf16.msra.mxu0 %v2282
        %2393 = vmatprep.subr.bf16.mxu0 0
        %2394 = vmatpush1.bf16.msra.mxu0 0
        %2395 = vmatprep.subr.bf16.mxu0 0
        %2396 = vmatpush1.bf16.msra.mxu0 0
        %2397 = vmatprep.subr.bf16.mxu0 0
        %2398 = vmatpush1.bf16.msra.mxu0 0
        %2399 = vmatprep.subr.bf16.mxu0 0
        %2400 = vmatpush1.bf16.msra.mxu0 0
        %2401 = vmatprep.subr.bf16.mxu0 0
        %2402 = vmatpush1.bf16.msra.mxu0 0
        %2403 = vmatprep.subr.bf16.mxu0 0
        %2404 = vmatpush1.bf16.msra.mxu0 0
        %2405 = vmatprep.subr.bf16.mxu0 0
        %2406 = vmatpush1.bf16.msra.mxu0 0
        %2407 = vmatprep.subr.bf16.mxu0 0
        %2408 = vmatpush1.bf16.msra.mxu0 0
        %2409 = vmatprep.subr.bf16.mxu0 0
        %2410 = vmatpush1.bf16.msra.mxu0 0
        %2411 = vmatprep.subr.bf16.mxu0 0
        %2412 = vmatpush1.bf16.msra.mxu0 0
        %2413 = vmatprep.subr.bf16.mxu0 0
        %2414 = vmatpush1.bf16.msra.mxu0 0
        %2415 = vmatprep.subr.bf16.mxu0 0
        %2416 = vmatpush1.bf16.msra.mxu0 0
        %2417 = vmatprep.subr.bf16.mxu0 0
        %2418 = vmatpush1.bf16.msra.mxu0 0
        %2419 = vmatprep.subr.bf16.mxu0 0
        %2420 = vmatpush1.bf16.msra.mxu0 0
        %2421 = vmatprep.mubr.bf16.mxu0 0
        %2422 = vmatmul.mubr.bf16.gmra.mrb[0].mxu0 %v2331
        %v2423 = vpop.f32.mrb[0].mxu0
        %v2424 = vadd.f32 %v2303, %v2423
        %v2425 = vpop.f32.mrb[0].mxu0
        %v2426 = vadd.f32 %v2303, %v2425
        %v2427 = vpop.f32.mrb[0].mxu0
        %v2428 = vadd.f32 %v2308, %v2427
        %v2429 = vpop.f32.mrb[0].mxu0
        %v2430 = vadd.f32 %v2308, %v2429
        %2431 = vmatprep.mubr.bf16.mxu0 0
        %2432 = vmatmul.mubr.bf16.gmra.mrb[0].mxu0 %v2334
        %v2433 = vpop.f32.mrb[0].mxu0
        %v2434 = vadd.f32 %v2313, %v2433
        %v2435 = vpop.f32.mrb[0].mxu0
        %v2436 = vadd.f32 %v2313, %v2435
        %v2437 = vpop.f32.mrb[0].mxu0
        %v2438 = vadd.f32 %v2318, %v2437
        %v2439 = vpop.f32.mrb[0].mxu0
        %v2440 = vadd.f32 %v2318, %v2439
        %2441 = vdwg.mxu0
        %2442 = vmatprep.subr.bf16.mxu0 %v2269
        %2443 = vmatpush1.bf16.msra.mxu0 %v2268
        %2444 = vmatprep.subr.bf16.mxu0 %v2285
        %2445 = vmatpush1.bf16.msra.mxu0 %v2284
        %2446 = vmatprep.subr.bf16.mxu0 0
        %2447 = vmatpush1.bf16.msra.mxu0 0
        %2448 = vmatprep.subr.bf16.mxu0 0
        %2449 = vmatpush1.bf16.msra.mxu0 0
        %2450 = vmatprep.subr.bf16.mxu0 0
        %2451 = vmatpush1.bf16.msra.mxu0 0
        %2452 = vmatprep.subr.bf16.mxu0 0
        %2453 = vmatpush1.bf16.msra.mxu0 0
        %2454 = vmatprep.subr.bf16.mxu0 0
        %2455 = vmatpush1.bf16.msra.mxu0 0
        %2456 = vmatprep.subr.bf16.mxu0 0
        %2457 = vmatpush1.bf16.msra.mxu0 0
        %2458 = vmatprep.subr.bf16.mxu0 0
        %2459 = vmatpush1.bf16.msra.mxu0 0
        %2460 = vmatprep.subr.bf16.mxu0 0
        %2461 = vmatpush1.bf16.msra.mxu0 0
        %2462 = vmatprep.subr.bf16.mxu0 0
        %2463 = vmatpush1.bf16.msra.mxu0 0
        %2464 = vmatprep.subr.bf16.mxu0 0
        %2465 = vmatpush1.bf16.msra.mxu0 0
        %2466 = vmatprep.subr.bf16.mxu0 0
        %2467 = vmatpush1.bf16.msra.mxu0 0
        %2468 = vmatprep.subr.bf16.mxu0 0
        %2469 = vmatpush1.bf16.msra.mxu0 0
        %2470 = vmatprep.subr.bf16.mxu0 0
        %2471 = vmatpush1.bf16.msra.mxu0 0
        %2472 = vmatprep.subr.bf16.mxu0 0
        %2473 = vmatpush1.bf16.msra.mxu0 0
        %2474 = vmatprep.mubr.bf16.mxu0 0
        %2475 = vmatmul.mubr.bf16.gmra.mrb[0].mxu0 %v2331
        %v2476 = vpop.f32.mrb[0].mxu0
        %v2477 = vadd.f32 %v2303, %v2476
        %v2478 = vpop.f32.mrb[0].mxu0
        %v2479 = vadd.f32 %v2303, %v2478
        %v2480 = vpop.f32.mrb[0].mxu0
        %v2481 = vadd.f32 %v2308, %v2480
        %v2482 = vpop.f32.mrb[0].mxu0
        %v2483 = vadd.f32 %v2308, %v2482
        %2484 = vmatprep.mubr.bf16.mxu0 0
        %2485 = vmatmul.mubr.bf16.gmra.mrb[0].mxu0 %v2334
        %v2486 = vpop.f32.mrb[0].mxu0
        %v2487 = vadd.f32 %v2313, %v2486
        %v2488 = vpop.f32.mrb[0].mxu0
        %v2489 = vadd.f32 %v2313, %v2488
        %v2490 = vpop.f32.mrb[0].mxu0
        %v2491 = vadd.f32 %v2318, %v2490
        %v2492 = vpop.f32.mrb[0].mxu0
        %v2493 = vadd.f32 %v2318, %v2492
        %2494 = vdwg.mxu0
        %2495 = vmatprep.subr.bf16.mxu0 %v2271
        %2496 = vmatpush1.bf16.msra.mxu0 %v2270
        %2497 = vmatprep.subr.bf16.mxu0 %v2287
        %2498 = vmatpush1.bf16.msra.mxu0 %v2286
        %2499 = vmatprep.subr.bf16.mxu0 0
        %2500 = vmatpush1.bf16.msra.mxu0 0
        %2501 = vmatprep.subr.bf16.mxu0 0
        %2502 = vmatpush1.bf16.msra.mxu0 0
        %2503 = vmatprep.subr.bf16.mxu0 0
        %2504 = vmatpush1.bf16.msra.mxu0 0
        %2505 = vmatprep.subr.bf16.mxu0 0
        %2506 = vmatpush1.bf16.msra.mxu0 0
        %2507 = vmatprep.subr.bf16.mxu0 0
        %2508 = vmatpush1.bf16.msra.mxu0 0
        %2509 = vmatprep.subr.bf16.mxu0 0
        %2510 = vmatpush1.bf16.msra.mxu0 0
        %2511 = vmatprep.subr.bf16.mxu0 0
        %2512 = vmatpush1.bf16.msra.mxu0 0
        %2513 = vmatprep.subr.bf16.mxu0 0
        %2514 = vmatpush1.bf16.msra.mxu0 0
        %2515 = vmatprep.subr.bf16.mxu0 0
        %2516 = vmatpush1.bf16.msra.mxu0 0
        %2517 = vmatprep.subr.bf16.mxu0 0
        %2518 = vmatpush1.bf16.msra.mxu0 0
        %2519 = vmatprep.subr.bf16.mxu0 0
        %2520 = vmatpush1.bf16.msra.mxu0 0
        %2521 = vmatprep.subr.bf16.mxu0 0
        %2522 = vmatpush1.bf16.msra.mxu0 0
        %2523 = vmatprep.subr.bf16.mxu0 0
        %2524 = vmatpush1.bf16.msra.mxu0 0
        %2525 = vmatprep.subr.bf16.mxu0 0
        %2526 = vmatpush1.bf16.msra.mxu0 0
        %2527 = vmatprep.mubr.bf16.mxu0 0
        %2528 = vmatmul.mubr.bf16.gmra.mrb[0].mxu0 %v2331
        %v2529 = vpop.f32.mrb[0].mxu0
        %v2530 = vadd.f32 %v2303, %v2529
        %v2531 = vpop.f32.mrb[0].mxu0
        %v2532 = vadd.f32 %v2303, %v2531
        %v2533 = vpop.f32.mrb[0].mxu0
        %v2534 = vadd.f32 %v2308, %v2533
        %v2535 = vpop.f32.mrb[0].mxu0
        %v2536 = vadd.f32 %v2308, %v2535
        %2537 = vmatprep.mubr.bf16.mxu0 0
        %2538 = vmatmul.mubr.bf16.gmra.mrb[0].mxu0 %v2334
        %v2539 = vpop.f32.mrb[0].mxu0
        %v2540 = vadd.f32 %v2313, %v2539
        %v2541 = vpop.f32.mrb[0].mxu0
        %v2542 = vadd.f32 %v2313, %v2541
        %v2543 = vpop.f32.mrb[0].mxu0
        %v2544 = vadd.f32 %v2318, %v2543
        %v2545 = vpop.f32.mrb[0].mxu0
        %v2546 = vadd.f32 %v2318, %v2545
        %2547 = vdwg.mxu0
        %2548 = vmatprep.subr.bf16.mxu0 %v2273
        %2549 = vmatpush1.bf16.msra.mxu0 %v2272
        %2550 = vmatprep.subr.bf16.mxu0 %v2289
        %2551 = vmatpush1.bf16.msra.mxu0 %v2288
        %2552 = vmatprep.subr.bf16.mxu0 0
        %2553 = vmatpush1.bf16.msra.mxu0 0
        %2554 = vmatprep.subr.bf16.mxu0 0
        %2555 = vmatpush1.bf16.msra.mxu0 0
        %2556 = vmatprep.subr.bf16.mxu0 0
        %2557 = vmatpush1.bf16.msra.mxu0 0
        %2558 = vmatprep.subr.bf16.mxu0 0
        %2559 = vmatpush1.bf16.msra.mxu0 0
        %2560 = vmatprep.subr.bf16.mxu0 0
        %2561 = vmatpush1.bf16.msra.mxu0 0
        %2562 = vmatprep.subr.bf16.mxu0 0
        %2563 = vmatpush1.bf16.msra.mxu0 0
        %2564 = vmatprep.subr.bf16.mxu0 0
        %2565 = vmatpush1.bf16.msra.mxu0 0
        %2566 = vmatprep.subr.bf16.mxu0 0
        %2567 = vmatpush1.bf16.msra.mxu0 0
        %2568 = vmatprep.subr.bf16.mxu0 0
        %2569 = vmatpush1.bf16.msra.mxu0 0
        %2570 = vmatprep.subr.bf16.mxu0 0
        %2571 = vmatpush1.bf16.msra.mxu0 0
        %2572 = vmatprep.subr.bf16.mxu0 0
        %2573 = vmatpush1.bf16.msra.mxu0 0
        %2574 = vmatprep.subr.bf16.mxu0 0
        %2575 = vmatpush1.bf16.msra.mxu0 0
        %2576 = vmatprep.subr.bf16.mxu0 0
        %2577 = vmatpush1.bf16.msra.mxu0 0
        %2578 = vmatprep.subr.bf16.mxu0 0
        %2579 = vmatpush1.bf16.msra.mxu0 0
        %2580 = vmatprep.mubr.bf16.mxu0 0
        %2581 = vmatmul.mubr.bf16.gmra.mrb[0].mxu0 %v2331
        %v2582 = vpop.f32.mrb[0].mxu0
        %v2583 = vadd.f32 %v2303, %v2582
        %v2584 = vpop.f32.mrb[0].mxu0
        %v2585 = vadd.f32 %v2303, %v2584
        %v2586 = vpop.f32.mrb[0].mxu0
        %v2587 = vadd.f32 %v2308, %v2586
        %v2588 = vpop.f32.mrb[0].mxu0
        %v2589 = vadd.f32 %v2308, %v2588
        %2590 = vmatprep.mubr.bf16.mxu0 0
        %2591 = vmatmul.mubr.bf16.gmra.mrb[0].mxu0 %v2334
        %v2592 = vpop.f32.mrb[0].mxu0
        %v2593 = vadd.f32 %v2313, %v2592
        %v2594 = vpop.f32.mrb[0].mxu0
        %v2595 = vadd.f32 %v2313, %v2594
        %v2596 = vpop.f32.mrb[0].mxu0
        %v2597 = vadd.f32 %v2318, %v2596
        %v2598 = vpop.f32.mrb[0].mxu0
        %v2599 = vadd.f32 %v2318, %v2598
        %2600 = vdwg.mxu0
        %2601 = vmatprep.subr.bf16.mxu0 %v2275
        %2602 = vmatpush1.bf16.msra.mxu0 %v2274
        %2603 = vmatprep.subr.bf16.mxu0 %v2291
        %2604 = vmatpush1.bf16.msra.mxu0 %v2290
        %2605 = vmatprep.subr.bf16.mxu0 0
        %2606 = vmatpush1.bf16.msra.mxu0 0
        %2607 = vmatprep.subr.bf16.mxu0 0
        %2608 = vmatpush1.bf16.msra.mxu0 0
        %2609 = vmatprep.subr.bf16.mxu0 0
        %2610 = vmatpush1.bf16.msra.mxu0 0
        %2611 = vmatprep.subr.bf16.mxu0 0
        %2612 = vmatpush1.bf16.msra.mxu0 0
        %2613 = vmatprep.subr.bf16.mxu0 0
        %2614 = vmatpush1.bf16.msra.mxu0 0
        %2615 = vmatprep.subr.bf16.mxu0 0
        %2616 = vmatpush1.bf16.msra.mxu0 0
        %2617 = vmatprep.subr.bf16.mxu0 0
        %2618 = vmatpush1.bf16.msra.mxu0 0
        %2619 = vmatprep.subr.bf16.mxu0 0
        %2620 = vmatpush1.bf16.msra.mxu0 0
        %2621 = vmatprep.subr.bf16.mxu0 0
        %2622 = vmatpush1.bf16.msra.mxu0 0
        %2623 = vmatprep.subr.bf16.mxu0 0
        %2624 = vmatpush1.bf16.msra.mxu0 0
        %2625 = vmatprep.subr.bf16.mxu0 0
        %2626 = vmatpush1.bf16.msra.mxu0 0
        %2627 = vmatprep.subr.bf16.mxu0 0
        %2628 = vmatpush1.bf16.msra.mxu0 0
        %2629 = vmatprep.subr.bf16.mxu0 0
        %2630 = vmatpush1.bf16.msra.mxu0 0
        %2631 = vmatprep.subr.bf16.mxu0 0
        %2632 = vmatpush1.bf16.msra.mxu0 0
        %2633 = vmatprep.mubr.bf16.mxu0 0
        %2634 = vmatmul.mubr.bf16.gmra.mrb[0].mxu0 %v2331
        %v2635 = vpop.f32.mrb[0].mxu0
        %v2636 = vadd.f32 %v2303, %v2635
        %v2637 = vpop.f32.mrb[0].mxu0
        %v2638 = vadd.f32 %v2303, %v2637
        %v2639 = vpop.f32.mrb[0].mxu0
        %v2640 = vadd.f32 %v2308, %v2639
        %v2641 = vpop.f32.mrb[0].mxu0
        %v2642 = vadd.f32 %v2308, %v2641
        %2643 = vmatprep.mubr.bf16.mxu0 0
        %2644 = vmatmul.mubr.bf16.gmra.mrb[0].mxu0 %v2334
        %v2645 = vpop.f32.mrb[0].mxu0
        %v2646 = vadd.f32 %v2313, %v2645
        %v2647 = vpop.f32.mrb[0].mxu0
        %v2648 = vadd.f32 %v2313, %v2647
        %v2649 = vpop.f32.mrb[0].mxu0
        %v2650 = vadd.f32 %v2318, %v2649
        %v2651 = vpop.f32.mrb[0].mxu0
        %v2652 = vadd.f32 %v2318, %v2651
        %2653 = vdwg.mxu0
        %2654 = vmatprep.subr.bf16.mxu0 %v2277
        %2655 = vmatpush1.bf16.msra.mxu0 %v2276
        %2656 = vmatprep.subr.bf16.mxu0 %v2293
        %2657 = vmatpush1.bf16.msra.mxu0 %v2292
        %2658 = vmatprep.subr.bf16.mxu0 0
        %2659 = vmatpush1.bf16.msra.mxu0 0
        %2660 = vmatprep.subr.bf16.mxu0 0
        %2661 = vmatpush1.bf16.msra.mxu0 0
        %2662 = vmatprep.subr.bf16.mxu0 0
        %2663 = vmatpush1.bf16.msra.mxu0 0
        %2664 = vmatprep.subr.bf16.mxu0 0
        %2665 = vmatpush1.bf16.msra.mxu0 0
        %2666 = vmatprep.subr.bf16.mxu0 0
        %2667 = vmatpush1.bf16.msra.mxu0 0
        %2668 = vmatprep.subr.bf16.mxu0 0
        %2669 = vmatpush1.bf16.msra.mxu0 0
        %2670 = vmatprep.subr.bf16.mxu0 0
        %2671 = vmatpush1.bf16.msra.mxu0 0
        %2672 = vmatprep.subr.bf16.mxu0 0
        %2673 = vmatpush1.bf16.msra.mxu0 0
        %2674 = vmatprep.subr.bf16.mxu0 0
        %2675 = vmatpush1.bf16.msra.mxu0 0
        %2676 = vmatprep.subr.bf16.mxu0 0
        %2677 = vmatpush1.bf16.msra.mxu0 0
        %2678 = vmatprep.subr.bf16.mxu0 0
        %2679 = vmatpush1.bf16.msra.mxu0 0
        %2680 = vmatprep.subr.bf16.mxu0 0
        %2681 = vmatpush1.bf16.msra.mxu0 0
        %2682 = vmatprep.subr.bf16.mxu0 0
        %2683 = vmatpush1.bf16.msra.mxu0 0
        %2684 = vmatprep.subr.bf16.mxu0 0
        %2685 = vmatpush1.bf16.msra.mxu0 0
        %2686 = vmatprep.mubr.bf16.mxu0 0
        %2687 = vmatmul.mubr.bf16.gmra.mrb[0].mxu0 %v2331
        %v2688 = vpop.f32.mrb[0].mxu0
        %v2689 = vadd.f32 %v2303, %v2688
        %v2690 = vpop.f32.mrb[0].mxu0
        %v2691 = vadd.f32 %v2303, %v2690
        %v2692 = vpop.f32.mrb[0].mxu0
        %v2693 = vadd.f32 %v2308, %v2692
        %v2694 = vpop.f32.mrb[0].mxu0
        %v2695 = vadd.f32 %v2308, %v2694
        %2696 = vmatprep.mubr.bf16.mxu0 0
        %2697 = vmatmul.mubr.bf16.gmra.mrb[0].mxu0 %v2334
        %v2698 = vpop.f32.mrb[0].mxu0
        %v2699 = vadd.f32 %v2313, %v2698
        %v2700 = vpop.f32.mrb[0].mxu0
        %v2701 = vadd.f32 %v2313, %v2700
        %v2702 = vpop.f32.mrb[0].mxu0
        %v2703 = vadd.f32 %v2318, %v2702
        %v2704 = vpop.f32.mrb[0].mxu0
        %v2705 = vadd.f32 %v2318, %v2704
        %2706 = vdwg.mxu0
        %2707 = vmatprep.subr.bf16.mxu0 %v2279
        %2708 = vmatpush1.bf16.msra.mxu0 %v2278
        %2709 = vmatprep.subr.bf16.mxu0 %v2295
        %2710 = vmatpush1.bf16.msra.mxu0 %v2294
        %2711 = vmatprep.subr.bf16.mxu0 0
        %2712 = vmatpush1.bf16.msra.mxu0 0
        %2713 = vmatprep.subr.bf16.mxu0 0
        %2714 = vmatpush1.bf16.msra.mxu0 0
        %2715 = vmatprep.subr.bf16.mxu0 0
        %2716 = vmatpush1.bf16.msra.mxu0 0
        %2717 = vmatprep.subr.bf16.mxu0 0
        %2718 = vmatpush1.bf16.msra.mxu0 0
        %2719 = vmatprep.subr.bf16.mxu0 0
        %2720 = vmatpush1.bf16.msra.mxu0 0
        %2721 = vmatprep.subr.bf16.mxu0 0
        %2722 = vmatpush1.bf16.msra.mxu0 0
        %2723 = vmatprep.subr.bf16.mxu0 0
        %2724 = vmatpush1.bf16.msra.mxu0 0
        %2725 = vmatprep.subr.bf16.mxu0 0
        %2726 = vmatpush1.bf16.msra.mxu0 0
        %2727 = vmatprep.subr.bf16.mxu0 0
        %2728 = vmatpush1.bf16.msra.mxu0 0
        %2729 = vmatprep.subr.bf16.mxu0 0
        %2730 = vmatpush1.bf16.msra.mxu0 0
        %2731 = vmatprep.subr.bf16.mxu0 0
        %2732 = vmatpush1.bf16.msra.mxu0 0
        %2733 = vmatprep.subr.bf16.mxu0 0
        %2734 = vmatpush1.bf16.msra.mxu0 0
        %2735 = vmatprep.subr.bf16.mxu0 0
        %2736 = vmatpush1.bf16.msra.mxu0 0
        %2737 = vmatprep.subr.bf16.mxu0 0
        %2738 = vmatpush1.bf16.msra.mxu0 0
        %2739 = vmatprep.mubr.bf16.mxu0 0
        %2740 = vmatmul.mubr.bf16.gmra.mrb[0].mxu0 %v2331
        %v2741 = vpop.f32.mrb[0].mxu0
        %v2742 = vadd.f32 %v2303, %v2741
        %v2743 = vpop.f32.mrb[0].mxu0
        %v2744 = vadd.f32 %v2303, %v2743
        %v2745 = vpop.f32.mrb[0].mxu0
        %v2746 = vadd.f32 %v2308, %v2745
        %v2747 = vpop.f32.mrb[0].mxu0
        %v2748 = vadd.f32 %v2308, %v2747
        %2749 = vmatprep.mubr.bf16.mxu0 0
        %2750 = vmatmul.mubr.bf16.gmra.mrb[0].mxu0 %v2334
        %v2751 = vpop.f32.mrb[0].mxu0
        %v2752 = vadd.f32 %v2313, %v2751
        %v2753 = vpop.f32.mrb[0].mxu0
        %v2754 = vadd.f32 %v2313, %v2753
        %v2755 = vpop.f32.mrb[0].mxu0
        %v2756 = vadd.f32 %v2318, %v2755
        %v2757 = vpop.f32.mrb[0].mxu0
        %v2758 = vadd.f32 %v2318, %v2757
        %2759 = vdwg.mxu0
        %v2760 = vmax.f32 %v2371, 0.0
        %v2761 = vmax.f32 %v2373, 0.0
        %v2762 = vmax.f32 %v2424, 0.0
        %v2763 = vmax.f32 %v2426, 0.0
        %v2764 = vmax.f32 %v2477, 0.0
        %v2765 = vmax.f32 %v2479, 0.0
        %v2766 = vmax.f32 %v2530, 0.0
        %v2767 = vmax.f32 %v2532, 0.0
        %v2768 = vmax.f32 %v2583, 0.0
        %v2769 = vmax.f32 %v2585, 0.0
        %v2770 = vmax.f32 %v2636, 0.0
        %v2771 = vmax.f32 %v2638, 0.0
        %v2772 = vmax.f32 %v2689, 0.0
        %v2773 = vmax.f32 %v2691, 0.0
        %v2774 = vmax.f32 %v2742, 0.0
        %v2775 = vmax.f32 %v2744, 0.0
        %v2776 = vmax.f32 %v2375, 0.0
        %v2777 = vmax.f32 %v2377, 0.0
        %v2778 = vmax.f32 %v2428, 0.0
        %v2779 = vmax.f32 %v2430, 0.0
        %v2780 = vmax.f32 %v2481, 0.0
        %v2781 = vmax.f32 %v2483, 0.0
        %v2782 = vmax.f32 %v2534, 0.0
        %v2783 = vmax.f32 %v2536, 0.0
        %v2784 = vmax.f32 %v2587, 0.0
        %v2785 = vmax.f32 %v2589, 0.0
        %v2786 = vmax.f32 %v2640, 0.0
        %v2787 = vmax.f32 %v2642, 0.0
        %v2788 = vmax.f32 %v2693, 0.0
        %v2789 = vmax.f32 %v2695, 0.0
        %v2790 = vmax.f32 %v2746, 0.0
        %v2791 = vmax.f32 %v2748, 0.0
        %v2792 = vmax.f32 %v2381, 0.0
        %v2793 = vmax.f32 %v2383, 0.0
        %v2794 = vmax.f32 %v2434, 0.0
        %v2795 = vmax.f32 %v2436, 0.0
        %v2796 = vmax.f32 %v2487, 0.0
        %v2797 = vmax.f32 %v2489, 0.0
        %v2798 = vmax.f32 %v2540, 0.0
        %v2799 = vmax.f32 %v2542, 0.0
        %v2800 = vmax.f32 %v2593, 0.0
        %v2801 = vmax.f32 %v2595, 0.0
        %v2802 = vmax.f32 %v2646, 0.0
        %v2803 = vmax.f32 %v2648, 0.0
        %v2804 = vmax.f32 %v2699, 0.0
        %v2805 = vmax.f32 %v2701, 0.0
        %v2806 = vmax.f32 %v2752, 0.0
        %v2807 = vmax.f32 %v2754, 0.0
        %v2808 = vmax.f32 %v2385, 0.0
        %v2809 = vmax.f32 %v2387, 0.0
        %v2810 = vmax.f32 %v2438, 0.0
        %v2811 = vmax.f32 %v2440, 0.0
        %v2812 = vmax.f32 %v2491, 0.0
        %v2813 = vmax.f32 %v2493, 0.0
        %v2814 = vmax.f32 %v2544, 0.0
        %v2815 = vmax.f32 %v2546, 0.0
        %v2816 = vmax.f32 %v2597, 0.0
        %v2817 = vmax.f32 %v2599, 0.0
        %v2818 = vmax.f32 %v2650, 0.0
        %v2819 = vmax.f32 %v2652, 0.0
        %v2820 = vmax.f32 %v2703, 0.0
        %v2821 = vmax.f32 %v2705, 0.0
        %v2822 = vmax.f32 %v2756, 0.0
        %v2823 = vmax.f32 %v2758, 0.0
        %v2824 = vld [vmem:[%s9] sm:$0xf]
        %v2825 = vpack.c.bf16 %v2776, %v2760
        %v2826 = vpack.c.bf16 %v2777, %v2761
        %v2827 = vpack.c.bf16 %v2778, %v2762
        %v2828 = vpack.c.bf16 %v2779, %v2763
        %v2829 = vpack.c.bf16 %v2780, %v2764
        %v2830 = vpack.c.bf16 %v2781, %v2765
        %v2831 = vpack.c.bf16 %v2782, %v2766
        %v2832 = vpack.c.bf16 %v2783, %v2767
        %v2833 = vpack.c.bf16 %v2784, %v2768
        %v2834 = vpack.c.bf16 %v2785, %v2769
        %v2835 = vpack.c.bf16 %v2786, %v2770
        %v2836 = vpack.c.bf16 %v2787, %v2771
        %v2837 = vpack.c.bf16 %v2788, %v2772
        %v2838 = vpack.c.bf16 %v2789, %v2773
        %v2839 = vpack.c.bf16 %v2790, %v2774
        %v2840 = vpack.c.bf16 %v2791, %v2775
        %v2841 = vpack.c.bf16 %v2808, %v2792
        %v2842 = vpack.c.bf16 %v2809, %v2793
        %v2843 = vpack.c.bf16 %v2810, %v2794
        %v2844 = vpack.c.bf16 %v2811, %v2795
        %v2845 = vpack.c.bf16 %v2812, %v2796
        %v2846 = vpack.c.bf16 %v2813, %v2797
        %v2847 = vpack.c.bf16 %v2814, %v2798
        %v2848 = vpack.c.bf16 %v2815, %v2799
        %v2849 = vpack.c.bf16 %v2816, %v2800
        %v2850 = vpack.c.bf16 %v2817, %v2801
        %v2851 = vpack.c.bf16 %v2818, %v2802
        %v2852 = vpack.c.bf16 %v2819, %v2803
        %v2853 = vpack.c.bf16 %v2820, %v2804
        %v2854 = vpack.c.bf16 %v2821, %v2805
        %v2855 = vpack.c.bf16 %v2822, %v2806
        %v2856 = vpack.c.bf16 %v2823, %v2807
        %v2857 = vld [vmem:[%s10] sm:$0xff]
        %2859 = vset.pattern.permute.xlu0 0
        %2860 = vperm.xlu0 %2859, %v2857
        %v2861 = vpop.permute.xlu0 %2860
        %v2864 = vsel %vm1137, %v2824, 0
        %2866 = vmatprep.subr.bf16.mxu0 %v2826
        %2867 = vmatpush1.bf16.msra.mxu0 %v2825
        %2868 = vmatprep.subr.bf16.mxu0 %v2842
        %2869 = vmatpush1.bf16.msra.mxu0 %v2841
        %2870 = vmatprep.subr.bf16.mxu0 0
        %2871 = vmatpush1.bf16.msra.mxu0 0
        %2872 = vmatprep.subr.bf16.mxu0 0
        %2873 = vmatpush1.bf16.msra.mxu0 0
        %2874 = vmatprep.subr.bf16.mxu0 0
        %2875 = vmatpush1.bf16.msra.mxu0 0
        %2876 = vmatprep.subr.bf16.mxu0 0
        %2877 = vmatpush1.bf16.msra.mxu0 0
        %2878 = vmatprep.subr.bf16.mxu0 0
        %2879 = vmatpush1.bf16.msra.mxu0 0
        %2880 = vmatprep.subr.bf16.mxu0 0
        %2881 = vmatpush1.bf16.msra.mxu0 0
        %2882 = vmatprep.subr.bf16.mxu0 0
        %2883 = vmatpush1.bf16.msra.mxu0 0
        %2884 = vmatprep.subr.bf16.mxu0 0
        %2885 = vmatpush1.bf16.msra.mxu0 0
        %2886 = vmatprep.subr.bf16.mxu0 0
        %2887 = vmatpush1.bf16.msra.mxu0 0
        %2888 = vmatprep.subr.bf16.mxu0 0
        %2889 = vmatpush1.bf16.msra.mxu0 0
        %2890 = vmatprep.subr.bf16.mxu0 0
        %2891 = vmatpush1.bf16.msra.mxu0 0
        %2892 = vmatprep.subr.bf16.mxu0 0
        %2893 = vmatpush1.bf16.msra.mxu0 0
        %2894 = vmatprep.subr.bf16.mxu0 0
        %2895 = vmatpush1.bf16.msra.mxu0 0
        %2896 = vmatprep.subr.bf16.mxu0 0
        %2897 = vmatpush1.bf16.msra.mxu0 0
        %2898 = vmatprep.mubr.bf16.mxu0 0
        %2899 = vmatmul.mubr.bf16.gmra.mrb[0].mxu0 %v2864
        %v2900 = vpop.f32.mrb[0].mxu0
        %v2901 = vadd.f32 %v2861, %v2900
        %v2902 = vpop.f32.mrb[0].mxu0
        %v2903 = vadd.f32 %v2861, %v2902
        %v2904 = vpop.f32.mrb[0].mxu0
        %v2905 = vpop.f32.mrb[0].mxu0
        %2906 = vdwg.mxu0
        %2907 = vmatprep.subr.bf16.mxu0 %v2828
        %2908 = vmatpush1.bf16.msra.mxu0 %v2827
        %2909 = vmatprep.subr.bf16.mxu0 %v2844
        %2910 = vmatpush1.bf16.msra.mxu0 %v2843
        %2911 = vmatprep.subr.bf16.mxu0 0
        %2912 = vmatpush1.bf16.msra.mxu0 0
        %2913 = vmatprep.subr.bf16.mxu0 0
        %2914 = vmatpush1.bf16.msra.mxu0 0
        %2915 = vmatprep.subr.bf16.mxu0 0
        %2916 = vmatpush1.bf16.msra.mxu0 0
        %2917 = vmatprep.subr.bf16.mxu0 0
        %2918 = vmatpush1.bf16.msra.mxu0 0
        %2919 = vmatprep.subr.bf16.mxu0 0
        %2920 = vmatpush1.bf16.msra.mxu0 0
        %2921 = vmatprep.subr.bf16.mxu0 0
        %2922 = vmatpush1.bf16.msra.mxu0 0
        %2923 = vmatprep.subr.bf16.mxu0 0
        %2924 = vmatpush1.bf16.msra.mxu0 0
        %2925 = vmatprep.subr.bf16.mxu0 0
        %2926 = vmatpush1.bf16.msra.mxu0 0
        %2927 = vmatprep.subr.bf16.mxu0 0
        %2928 = vmatpush1.bf16.msra.mxu0 0
        %2929 = vmatprep.subr.bf16.mxu0 0
        %2930 = vmatpush1.bf16.msra.mxu0 0
        %2931 = vmatprep.subr.bf16.mxu0 0
        %2932 = vmatpush1.bf16.msra.mxu0 0
        %2933 = vmatprep.subr.bf16.mxu0 0
        %2934 = vmatpush1.bf16.msra.mxu0 0
        %2935 = vmatprep.subr.bf16.mxu0 0
        %2936 = vmatpush1.bf16.msra.mxu0 0
        %2937 = vmatprep.subr.bf16.mxu0 0
        %2938 = vmatpush1.bf16.msra.mxu0 0
        %2939 = vmatprep.mubr.bf16.mxu0 0
        %2940 = vmatmul.mubr.bf16.gmra.mrb[0].mxu0 %v2864
        %v2941 = vpop.f32.mrb[0].mxu0
        %v2942 = vadd.f32 %v2861, %v2941
        %v2943 = vpop.f32.mrb[0].mxu0
        %v2944 = vadd.f32 %v2861, %v2943
        %v2945 = vpop.f32.mrb[0].mxu0
        %v2946 = vpop.f32.mrb[0].mxu0
        %2947 = vdwg.mxu0
        %2948 = vmatprep.subr.bf16.mxu0 %v2830
        %2949 = vmatpush1.bf16.msra.mxu0 %v2829
        %2950 = vmatprep.subr.bf16.mxu0 %v2846
        %2951 = vmatpush1.bf16.msra.mxu0 %v2845
        %2952 = vmatprep.subr.bf16.mxu0 0
        %2953 = vmatpush1.bf16.msra.mxu0 0
        %2954 = vmatprep.subr.bf16.mxu0 0
        %2955 = vmatpush1.bf16.msra.mxu0 0
        %2956 = vmatprep.subr.bf16.mxu0 0
        %2957 = vmatpush1.bf16.msra.mxu0 0
        %2958 = vmatprep.subr.bf16.mxu0 0
        %2959 = vmatpush1.bf16.msra.mxu0 0
        %2960 = vmatprep.subr.bf16.mxu0 0
        %2961 = vmatpush1.bf16.msra.mxu0 0
        %2962 = vmatprep.subr.bf16.mxu0 0
        %2963 = vmatpush1.bf16.msra.mxu0 0
        %2964 = vmatprep.subr.bf16.mxu0 0
        %2965 = vmatpush1.bf16.msra.mxu0 0
        %2966 = vmatprep.subr.bf16.mxu0 0
        %2967 = vmatpush1.bf16.msra.mxu0 0
        %2968 = vmatprep.subr.bf16.mxu0 0
        %2969 = vmatpush1.bf16.msra.mxu0 0
        %2970 = vmatprep.subr.bf16.mxu0 0
        %2971 = vmatpush1.bf16.msra.mxu0 0
        %2972 = vmatprep.subr.bf16.mxu0 0
        %2973 = vmatpush1.bf16.msra.mxu0 0
        %2974 = vmatprep.subr.bf16.mxu0 0
        %2975 = vmatpush1.bf16.msra.mxu0 0
        %2976 = vmatprep.subr.bf16.mxu0 0
        %2977 = vmatpush1.bf16.msra.mxu0 0
        %2978 = vmatprep.subr.bf16.mxu0 0
        %2979 = vmatpush1.bf16.msra.mxu0 0
        %2980 = vmatprep.mubr.bf16.mxu0 0
        %2981 = vmatmul.mubr.bf16.gmra.mrb[0].mxu0 %v2864
        %v2982 = vpop.f32.mrb[0].mxu0
        %v2983 = vadd.f32 %v2861, %v2982
        %v2984 = vpop.f32.mrb[0].mxu0
        %v2985 = vadd.f32 %v2861, %v2984
        %v2986 = vpop.f32.mrb[0].mxu0
        %v2987 = vpop.f32.mrb[0].mxu0
        %2988 = vdwg.mxu0
        %2989 = vmatprep.subr.bf16.mxu0 %v2832
        %2990 = vmatpush1.bf16.msra.mxu0 %v2831
        %2991 = vmatprep.subr.bf16.mxu0 %v2848
        %2992 = vmatpush1.bf16.msra.mxu0 %v2847
        %2993 = vmatprep.subr.bf16.mxu0 0
        %2994 = vmatpush1.bf16.msra.mxu0 0
        %2995 = vmatprep.subr.bf16.mxu0 0
        %2996 = vmatpush1.bf16.msra.mxu0 0
        %2997 = vmatprep.subr.bf16.mxu0 0
        %2998 = vmatpush1.bf16.msra.mxu0 0
        %2999 = vmatprep.subr.bf16.mxu0 0
        %3000 = vmatpush1.bf16.msra.mxu0 0
        %3001 = vmatprep.subr.bf16.mxu0 0
        %3002 = vmatpush1.bf16.msra.mxu0 0
        %3003 = vmatprep.subr.bf16.mxu0 0
        %3004 = vmatpush1.bf16.msra.mxu0 0
        %3005 = vmatprep.subr.bf16.mxu0 0
        %3006 = vmatpush1.bf16.msra.mxu0 0
        %3007 = vmatprep.subr.bf16.mxu0 0
        %3008 = vmatpush1.bf16.msra.mxu0 0
        %3009 = vmatprep.subr.bf16.mxu0 0
        %3010 = vmatpush1.bf16.msra.mxu0 0
        %3011 = vmatprep.subr.bf16.mxu0 0
        %3012 = vmatpush1.bf16.msra.mxu0 0
        %3013 = vmatprep.subr.bf16.mxu0 0
        %3014 = vmatpush1.bf16.msra.mxu0 0
        %3015 = vmatprep.subr.bf16.mxu0 0
        %3016 = vmatpush1.bf16.msra.mxu0 0
        %3017 = vmatprep.subr.bf16.mxu0 0
        %3018 = vmatpush1.bf16.msra.mxu0 0
        %3019 = vmatprep.subr.bf16.mxu0 0
        %3020 = vmatpush1.bf16.msra.mxu0 0
        %3021 = vmatprep.mubr.bf16.mxu0 0
        %3022 = vmatmul.mubr.bf16.gmra.mrb[0].mxu0 %v2864
        %v3023 = vpop.f32.mrb[0].mxu0
        %v3024 = vadd.f32 %v2861, %v3023
        %v3025 = vpop.f32.mrb[0].mxu0
        %v3026 = vadd.f32 %v2861, %v3025
        %v3027 = vpop.f32.mrb[0].mxu0
        %v3028 = vpop.f32.mrb[0].mxu0
        %3029 = vdwg.mxu0
        %3030 = vmatprep.subr.bf16.mxu0 %v2834
        %3031 = vmatpush1.bf16.msra.mxu0 %v2833
        %3032 = vmatprep.subr.bf16.mxu0 %v2850
        %3033 = vmatpush1.bf16.msra.mxu0 %v2849
        %3034 = vmatprep.subr.bf16.mxu0 0
        %3035 = vmatpush1.bf16.msra.mxu0 0
        %3036 = vmatprep.subr.bf16.mxu0 0
        %3037 = vmatpush1.bf16.msra.mxu0 0
        %3038 = vmatprep.subr.bf16.mxu0 0
        %3039 = vmatpush1.bf16.msra.mxu0 0
        %3040 = vmatprep.subr.bf16.mxu0 0
        %3041 = vmatpush1.bf16.msra.mxu0 0
        %3042 = vmatprep.subr.bf16.mxu0 0
        %3043 = vmatpush1.bf16.msra.mxu0 0
        %3044 = vmatprep.subr.bf16.mxu0 0
        %3045 = vmatpush1.bf16.msra.mxu0 0
        %3046 = vmatprep.subr.bf16.mxu0 0
        %3047 = vmatpush1.bf16.msra.mxu0 0
        %3048 = vmatprep.subr.bf16.mxu0 0
        %3049 = vmatpush1.bf16.msra.mxu0 0
        %3050 = vmatprep.subr.bf16.mxu0 0
        %3051 = vmatpush1.bf16.msra.mxu0 0
        %3052 = vmatprep.subr.bf16.mxu0 0
        %3053 = vmatpush1.bf16.msra.mxu0 0
        %3054 = vmatprep.subr.bf16.mxu0 0
        %3055 = vmatpush1.bf16.msra.mxu0 0
        %3056 = vmatprep.subr.bf16.mxu0 0
        %3057 = vmatpush1.bf16.msra.mxu0 0
        %3058 = vmatprep.subr.bf16.mxu0 0
        %3059 = vmatpush1.bf16.msra.mxu0 0
        %3060 = vmatprep.subr.bf16.mxu0 0
        %3061 = vmatpush1.bf16.msra.mxu0 0
        %3062 = vmatprep.mubr.bf16.mxu0 0
        %3063 = vmatmul.mubr.bf16.gmra.mrb[0].mxu0 %v2864
        %v3064 = vpop.f32.mrb[0].mxu0
        %v3065 = vadd.f32 %v2861, %v3064
        %v3066 = vpop.f32.mrb[0].mxu0
        %v3067 = vadd.f32 %v2861, %v3066
        %v3068 = vpop.f32.mrb[0].mxu0
        %v3069 = vpop.f32.mrb[0].mxu0
        %3070 = vdwg.mxu0
        %3071 = vmatprep.subr.bf16.mxu0 %v2836
        %3072 = vmatpush1.bf16.msra.mxu0 %v2835
        %3073 = vmatprep.subr.bf16.mxu0 %v2852
        %3074 = vmatpush1.bf16.msra.mxu0 %v2851
        %3075 = vmatprep.subr.bf16.mxu0 0
        %3076 = vmatpush1.bf16.msra.mxu0 0
        %3077 = vmatprep.subr.bf16.mxu0 0
        %3078 = vmatpush1.bf16.msra.mxu0 0
        %3079 = vmatprep.subr.bf16.mxu0 0
        %3080 = vmatpush1.bf16.msra.mxu0 0
        %3081 = vmatprep.subr.bf16.mxu0 0
        %3082 = vmatpush1.bf16.msra.mxu0 0
        %3083 = vmatprep.subr.bf16.mxu0 0
        %3084 = vmatpush1.bf16.msra.mxu0 0
        %3085 = vmatprep.subr.bf16.mxu0 0
        %3086 = vmatpush1.bf16.msra.mxu0 0
        %3087 = vmatprep.subr.bf16.mxu0 0
        %3088 = vmatpush1.bf16.msra.mxu0 0
        %3089 = vmatprep.subr.bf16.mxu0 0
        %3090 = vmatpush1.bf16.msra.mxu0 0
        %3091 = vmatprep.subr.bf16.mxu0 0
        %3092 = vmatpush1.bf16.msra.mxu0 0
        %3093 = vmatprep.subr.bf16.mxu0 0
        %3094 = vmatpush1.bf16.msra.mxu0 0
        %3095 = vmatprep.subr.bf16.mxu0 0
        %3096 = vmatpush1.bf16.msra.mxu0 0
        %3097 = vmatprep.subr.bf16.mxu0 0
        %3098 = vmatpush1.bf16.msra.mxu0 0
        %3099 = vmatprep.subr.bf16.mxu0 0
        %3100 = vmatpush1.bf16.msra.mxu0 0
        %3101 = vmatprep.subr.bf16.mxu0 0
        %3102 = vmatpush1.bf16.msra.mxu0 0
        %3103 = vmatprep.mubr.bf16.mxu0 0
        %3104 = vmatmul.mubr.bf16.gmra.mrb[0].mxu0 %v2864
        %v3105 = vpop.f32.mrb[0].mxu0
        %v3106 = vadd.f32 %v2861, %v3105
        %v3107 = vpop.f32.mrb[0].mxu0
        %v3108 = vadd.f32 %v2861, %v3107
        %v3109 = vpop.f32.mrb[0].mxu0
        %v3110 = vpop.f32.mrb[0].mxu0
        %3111 = vdwg.mxu0
        %3112 = vmatprep.subr.bf16.mxu0 %v2838
        %3113 = vmatpush1.bf16.msra.mxu0 %v2837
        %3114 = vmatprep.subr.bf16.mxu0 %v2854
        %3115 = vmatpush1.bf16.msra.mxu0 %v2853
        %3116 = vmatprep.subr.bf16.mxu0 0
        %3117 = vmatpush1.bf16.msra.mxu0 0
        %3118 = vmatprep.subr.bf16.mxu0 0
        %3119 = vmatpush1.bf16.msra.mxu0 0
        %3120 = vmatprep.subr.bf16.mxu0 0
        %3121 = vmatpush1.bf16.msra.mxu0 0
        %3122 = vmatprep.subr.bf16.mxu0 0
        %3123 = vmatpush1.bf16.msra.mxu0 0
        %3124 = vmatprep.subr.bf16.mxu0 0
        %3125 = vmatpush1.bf16.msra.mxu0 0
        %3126 = vmatprep.subr.bf16.mxu0 0
        %3127 = vmatpush1.bf16.msra.mxu0 0
        %3128 = vmatprep.subr.bf16.mxu0 0
        %3129 = vmatpush1.bf16.msra.mxu0 0
        %3130 = vmatprep.subr.bf16.mxu0 0
        %3131 = vmatpush1.bf16.msra.mxu0 0
        %3132 = vmatprep.subr.bf16.mxu0 0
        %3133 = vmatpush1.bf16.msra.mxu0 0
        %3134 = vmatprep.subr.bf16.mxu0 0
        %3135 = vmatpush1.bf16.msra.mxu0 0
        %3136 = vmatprep.subr.bf16.mxu0 0
        %3137 = vmatpush1.bf16.msra.mxu0 0
        %3138 = vmatprep.subr.bf16.mxu0 0
        %3139 = vmatpush1.bf16.msra.mxu0 0
        %3140 = vmatprep.subr.bf16.mxu0 0
        %3141 = vmatpush1.bf16.msra.mxu0 0
        %3142 = vmatprep.subr.bf16.mxu0 0
        %3143 = vmatpush1.bf16.msra.mxu0 0
        %3144 = vmatprep.mubr.bf16.mxu0 0
        %3145 = vmatmul.mubr.bf16.gmra.mrb[0].mxu0 %v2864
        %v3146 = vpop.f32.mrb[0].mxu0
        %v3147 = vadd.f32 %v2861, %v3146
        %v3148 = vpop.f32.mrb[0].mxu0
        %v3149 = vadd.f32 %v2861, %v3148
        %v3150 = vpop.f32.mrb[0].mxu0
        %v3151 = vpop.f32.mrb[0].mxu0
        %3152 = vdwg.mxu0
        %3153 = vmatprep.subr.bf16.mxu0 %v2840
        %3154 = vmatpush1.bf16.msra.mxu0 %v2839
        %3155 = vmatprep.subr.bf16.mxu0 %v2856
        %3156 = vmatpush1.bf16.msra.mxu0 %v2855
        %3157 = vmatprep.subr.bf16.mxu0 0
        %3158 = vmatpush1.bf16.msra.mxu0 0
        %3159 = vmatprep.subr.bf16.mxu0 0
        %3160 = vmatpush1.bf16.msra.mxu0 0
        %3161 = vmatprep.subr.bf16.mxu0 0
        %3162 = vmatpush1.bf16.msra.mxu0 0
        %3163 = vmatprep.subr.bf16.mxu0 0
        %3164 = vmatpush1.bf16.msra.mxu0 0
        %3165 = vmatprep.subr.bf16.mxu0 0
        %3166 = vmatpush1.bf16.msra.mxu0 0
        %3167 = vmatprep.subr.bf16.mxu0 0
        %3168 = vmatpush1.bf16.msra.mxu0 0
        %3169 = vmatprep.subr.bf16.mxu0 0
        %3170 = vmatpush1.bf16.msra.mxu0 0
        %3171 = vmatprep.subr.bf16.mxu0 0
        %3172 = vmatpush1.bf16.msra.mxu0 0
        %3173 = vmatprep.subr.bf16.mxu0 0
        %3174 = vmatpush1.bf16.msra.mxu0 0
        %3175 = vmatprep.subr.bf16.mxu0 0
        %3176 = vmatpush1.bf16.msra.mxu0 0
        %3177 = vmatprep.subr.bf16.mxu0 0
        %3178 = vmatpush1.bf16.msra.mxu0 0
        %3179 = vmatprep.subr.bf16.mxu0 0
        %3180 = vmatpush1.bf16.msra.mxu0 0
        %3181 = vmatprep.subr.bf16.mxu0 0
        %3182 = vmatpush1.bf16.msra.mxu0 0
        %3183 = vmatprep.subr.bf16.mxu0 0
        %3184 = vmatpush1.bf16.msra.mxu0 0
        %3185 = vmatprep.mubr.bf16.mxu0 0
        %3186 = vmatmul.mubr.bf16.gmra.mrb[0].mxu0 %v2864
        %v3187 = vpop.f32.mrb[0].mxu0
        %v3188 = vadd.f32 %v2861, %v3187
        %v3189 = vpop.f32.mrb[0].mxu0
        %v3190 = vadd.f32 %v2861, %v3189
        %v3191 = vpop.f32.mrb[0].mxu0
        %v3192 = vpop.f32.mrb[0].mxu0
        %3193 = vdwg.mxu0
        %3194 = vst [vmem:[%s434] sm:$0xff] %v2901
        %3195 = vst [vmem:[%s434 + $0x8] sm:$0xff] %v2903
        %3196 = vst [vmem:[%s434 + $0x10] sm:$0xff] %v2942
        %3197 = vst [vmem:[%s434 + $0x18] sm:$0xff] %v2944
        %3198 = vst [vmem:[%s434 + $0x20] sm:$0xff] %v2983
        %3199 = vst [vmem:[%s434 + $0x28] sm:$0xff] %v2985
        %3200 = vst [vmem:[%s434 + $0x30] sm:$0xff] %v3024
        %3201 = vst [vmem:[%s434 + $0x38] sm:$0xff] %v3026
        %3202 = vst [vmem:[%s434 + $0x40] sm:$0xff] %v3065
        %3203 = vst [vmem:[%s434 + $0x48] sm:$0xff] %v3067
        %3204 = vst [vmem:[%s434 + $0x50] sm:$0xff] %v3106
        %3205 = vst [vmem:[%s434 + $0x58] sm:$0xff] %v3108
        %3206 = vst [vmem:[%s434 + $0x60] sm:$0xff] %v3147
        %3207 = vst [vmem:[%s434 + $0x68] sm:$0xff] %v3149
        %3208 = vst [vmem:[%s434 + $0x70] sm:$0xff] %v3188
        %3209 = vst [vmem:[%s434 + $0x78] sm:$0xff] %v3190
        %s3210 = sand.u32 %s269, 1
        %s3211 = scalar_lea.sflag [#allocation4], %s3210
        %s3212 = sand.u32 %s269, 1
        %s3213 = smul.addr %s3212, 128
        %s3214 = scalar_lea.vmem [#allocation3], %s3213
        // Predicated region
        $region88: #{simple_resmlp_inr.1} parent=82 // pred_check
          %p3215 = pneg %p279
        $region89: #{simple_resmlp_inr.1} parent=82 // pred_check_branch
          %3217 = sbr.rel (%p3215) target = $region91
        $region90: #{simple_resmlp_inr.1} parent=82 // pred_region
          %s3218 = smul.u32 16, %s25
          %s3220 = ssub.s32 2048, 2048
          %3221 = vsyncadd %s3211, %s3220
          %s3222 = smul.addr %s3218, 128
          %s3223 = scalar_lea.hbm %s11, %s3222
          %s3225 = sshll.u32 %s3214, 4
          %s3226 = int_to_ptr.vmem [resolvable:$true] %s3225
          %3228 = dma.vmem_to_hbm [thread:$0]  %s3226, 2048, %s3223, %s3211
        $region91: #{simple_resmlp_inr.1} parent=82 // pred_fallthru
          _
      $region83: #{simple_resmlp_inr.1} parent=5 // pred_fallthru
        _
      %p3229 = scmp.le.s32.totalorder 2, %s20
      // Predicated region
      $region92: #{simple_resmlp_inr.1} parent=5 // pred_check
        %p3230 = pneg %p3229
      $region93: #{simple_resmlp_inr.1} parent=5 // pred_check_branch
        %3232 = sbr.rel (%p3230) target = $region95
      $region94: #{simple_resmlp_inr.1} parent=5 // pred_region
        %s3233 = ssub.s32 %s20, 2
        // Predicated region
        $region96: #{simple_resmlp_inr.1} parent=94 // pred_check
          %p3234 = pneg %p285
        $region97: #{simple_resmlp_inr.1} parent=94 // pred_check_branch
          %3236 = sbr.rel (%p3234) target = $region99
        $region98: #{simple_resmlp_inr.1} parent=94 // pred_region
          %s3237 = sand.u32 %s270, 1
          %s3238 = scalar_lea.sflag [#allocation4], %s3237
          %s3239 = sand.u32 %s270, 1
          %s3240 = smul.addr %s3239, 128
          %s3241 = scalar_lea.vmem [#allocation3], %s3240
          %3242 = dma.done %s3238, 2048
        $region99: #{simple_resmlp_inr.1} parent=94 // pred_fallthru
          _
      $region95: #{simple_resmlp_inr.1} parent=5 // pred_fallthru
        _
    $region6: #{simple_resmlp_inr.1} parent=1 // loop_footer
      %s24 = sadd.s32 1, %s20
    $region7: #{simple_resmlp_inr.1} parent=1 // loop_footer_branch
      %19 = sbr.rel target = $region3
    $region8: #{simple_resmlp_inr.1} parent=1 // loop_exit
      _
    %3243 = vsyncpa [#allocation4], 1
    %s3244 = scalar_lea.sflag [#allocation4], 1
    %3245 = vsyncpa %s3244, 1

</llo_original>
